<compile_context>
chip_gen: v7x
topology: tpu7x:2x2x1
jax: 0.10.0
libtpu: 0.0.40
codegen_flags: <defaults>
</compile_context>

<pallas_src>
import jax
import jax.numpy as jnp
from jax.experimental import pallas as pl
from jax.experimental.pallas import tpu as pltpu

# ----------------------------- model config -----------------------------
VOCAB = 30          # ProtBERT vocab size
VPAD = 128          # lane-dense padded vocab for the decoder output
HIDDEN = 32
N_HEADS = 2
HEAD_DIM = HIDDEN // N_HEADS
N_LAYERS = 2
FFN = 64
MAX_POS = 64
LN_EPS = 1e-12

CLS_ID, SEP_ID, MASK_ID, PAD_ID = 2, 3, 4, 0


def _gelu(x):
    # tanh-approximation GELU
    return 0.5 * x * (1.0 + jnp.tanh(0.7978845608028654 * (x + 0.044715 * x * x * x)))


# ----------------------------- fused Pallas kernel -----------------------------

def _fused_bert_kernel(emb_ref, mask_ref,
                       wqkv_ref, bqkv_ref, wo_ref, bo_ref,
                       ln1g_ref, ln1b_ref,
                       w1_ref, b1_ref, w2_ref, b2_ref,
                       ln2g_ref, ln2b_ref,
                       embg_ref, embb_ref,
                       headw_ref, headb_ref, headlng_ref, headlnb_ref,
                       decw_ref, decb_ref,
                       o_ref):
    """One grid step = one batch element.  Everything stays in VMEM/vregs."""
    scale = 1.0 / (HEAD_DIM ** 0.5)

    def ln(x, g, b):
        mean = jnp.mean(x, axis=-1, keepdims=True)
        var = jnp.mean((x - mean) ** 2, axis=-1, keepdims=True)
        return (x - mean) * jax.lax.rsqrt(var + LN_EPS) * g + b

    # --- embedding layernorm (no-residual path) ---
    h = ln(emb_ref[0], embg_ref[...], embb_ref[...])          # [S, H]

    # additive attention mask, broadcast over query rows: [1, S]
    add_mask = (1.0 - mask_ref[0]) * -1e9

    def layer_body(l, h):
        # fused QKV projection: [S, H] @ [H, 3H]
        qkv = jnp.dot(h, wqkv_ref[l], preferred_element_type=jnp.float32) + bqkv_ref[l]

        # per-head attention, all in-register (no transposes)
        ctx_heads = []
        for hh in range(N_HEADS):
            lo = hh * HEAD_DIM
            q = qkv[:, lo:lo + HEAD_DIM]                              # [S, Dh]
            k = qkv[:, HIDDEN + lo:HIDDEN + lo + HEAD_DIM]            # [S, Dh]
            v = qkv[:, 2 * HIDDEN + lo:2 * HIDDEN + lo + HEAD_DIM]    # [S, Dh]
            # contract last dims directly (no k.T / XLU transpose)
            s = jax.lax.dot_general(q, k, (((1,), (1,)), ((), ())),
                                    preferred_element_type=jnp.float32)
            s = s * scale + add_mask
            s = s - jnp.max(s, axis=-1, keepdims=True)
            p = jnp.exp(s)
            p = p * pl.reciprocal(jnp.sum(p, axis=-1, keepdims=True), approx=True)
            ctx_heads.append(jnp.dot(p, v, preferred_element_type=jnp.float32))
        ctx = jnp.concatenate(ctx_heads, axis=-1)                     # [S, H]

        attn_out = jnp.dot(ctx, wo_ref[l], preferred_element_type=jnp.float32) + bo_ref[l]
        h = ln(attn_out + h, ln1g_ref[l], ln1b_ref[l])

        ff = _gelu(jnp.dot(h, w1_ref[l], preferred_element_type=jnp.float32) + b1_ref[l])
        ff = jnp.dot(ff, w2_ref[l], preferred_element_type=jnp.float32) + b2_ref[l]
        return ln(ff + h, ln2g_ref[l], ln2b_ref[l])

    h = jax.lax.fori_loop(0, N_LAYERS, layer_body, h, unroll=True)

    # --- MLM head: dense + gelu + layernorm + decoder (lane-dense VPAD output) ---
    t = _gelu(jnp.dot(h, headw_ref[...], preferred_element_type=jnp.float32) + headb_ref[...])
    t = ln(t, headlng_ref[...], headlnb_ref[...])
    logits = jnp.dot(t, decw_ref[...], preferred_element_type=jnp.float32) + decb_ref[...]
    o_ref[0] = logits


# Names of packed weights, in the exact order the kernel expects them.
_WEIGHT_NAMES = ("wqkv", "bqkv", "wo", "bo", "ln1_g", "ln1_b",
                 "w1", "b1", "w2", "b2", "ln2_g", "ln2_b",
                 "emb_ln_g", "emb_ln_b", "head_w", "head_b",
                 "head_ln_g", "head_ln_b", "dec_w_pad", "dec_b_pad")


def bert_mlm_forward(packed, input_ids, attention_mask):
    B, S = input_ids.shape

    # --- embeddings (gather is plain-JAX glue) ---
    word = jnp.take(packed["word_emb"], input_ids, axis=0)            # [B, S, H]
    pos = packed["pos_emb"][:S][None, :, :]                           # [1, S, H]
    typ = packed["type_emb"][0][None, None, :]                        # [1, 1, H]
    emb = (word + pos + typ).astype(jnp.float32)                      # [B, S, H]
    mask = attention_mask.astype(jnp.float32).reshape(B, 1, S)        # [B, 1, S]

    weights = [packed[n] for n in _WEIGHT_NAMES]

    def full_spec(a):
        nd = a.ndim
        return pl.BlockSpec(a.shape, lambda b, _nd=nd: (0,) * _nd)

    in_specs = [
        pl.BlockSpec((1, S, HIDDEN), lambda b: (b, 0, 0)),
        pl.BlockSpec((1, 1, S), lambda b: (b, 0, 0)),
    ] + [full_spec(w) for w in weights]

    # rough advisory cost estimate
    flops_per_tok = (N_LAYERS * (2 * HIDDEN * 3 * HIDDEN + 4 * S * HIDDEN
                                 + 2 * HIDDEN * HIDDEN + 4 * HIDDEN * FFN)
                     + 2 * HIDDEN * HIDDEN + 2 * HIDDEN * VPAD)
    transc_per_tok = N_LAYERS * (N_HEADS * S + FFN) + HIDDEN
    bytes_accessed = 4 * (emb.size + mask.size + sum(int(w.size) for w in weights)
                          + B * S * VPAD)

    out = pl.pallas_call(
        _fused_bert_kernel,
        out_shape=jax.ShapeDtypeStruct((B, S, VPAD), jnp.float32),
        grid=(B,),
        in_specs=in_specs,
        out_specs=pl.BlockSpec((1, S, VPAD), lambda b: (b, 0, 0)),
        compiler_params=pltpu.CompilerParams(dimension_semantics=("parallel",)),
        cost_estimate=pl.CostEstimate(flops=B * S * flops_per_tok,
                                      transcendentals=B * S * transc_per_tok,
                                      bytes_accessed=bytes_accessed),
    )(emb, mask, *weights)

    return out[:, :, :VOCAB]


# ----------------------------- parameters -----------------------------

def init_params(key):
    def dense(k, shape):
        return jax.random.normal(k, shape, jnp.float32) * 0.02

    keys = jax.random.split(key, 8 + N_LAYERS)
    params = {
        "word_emb": dense(keys[0], (VOCAB, HIDDEN)),
        "pos_emb": dense(keys[1], (MAX_POS, HIDDEN)),
        "type_emb": dense(keys[2], (2, HIDDEN)),
        "emb_ln_g": jnp.ones((HIDDEN,), jnp.float32),
        "emb_ln_b": jnp.zeros((HIDDEN,), jnp.float32),
        "head_w": dense(keys[3], (HIDDEN, HIDDEN)),
        "head_b": jnp.zeros((HIDDEN,), jnp.float32),
        "head_ln_g": jnp.ones((HIDDEN,), jnp.float32),
        "head_ln_b": jnp.zeros((HIDDEN,), jnp.float32),
        "dec_w": dense(keys[4], (HIDDEN, VOCAB)),
        "dec_b": jnp.zeros((VOCAB,), jnp.float32),
        "layers": [],
    }
    for li in range(N_LAYERS):
        lk = jax.random.split(keys[8 + li], 6)
        params["layers"].append({
            "wq": dense(lk[0], (HIDDEN, HIDDEN)), "bq": jnp.zeros((HIDDEN,), jnp.float32),
            "wk": dense(lk[1], (HIDDEN, HIDDEN)), "bk": jnp.zeros((HIDDEN,), jnp.float32),
            "wv": dense(lk[2], (HIDDEN, HIDDEN)), "bv": jnp.zeros((HIDDEN,), jnp.float32),
            "wo": dense(lk[3], (HIDDEN, HIDDEN)), "bo": jnp.zeros((HIDDEN,), jnp.float32),
            "ln1_g": jnp.ones((HIDDEN,), jnp.float32), "ln1_b": jnp.zeros((HIDDEN,), jnp.float32),
            "w1": dense(lk[4], (HIDDEN, FFN)), "b1": jnp.zeros((FFN,), jnp.float32),
            "w2": dense(lk[5], (FFN, HIDDEN)), "b2": jnp.zeros((HIDDEN,), jnp.float32),
            "ln2_g": jnp.ones((HIDDEN,), jnp.float32), "ln2_b": jnp.zeros((HIDDEN,), jnp.float32),
        })
    return params


def pack_params(params):
    """Stack per-layer weights, fuse QKV, pad decoder to lane-dense VPAD."""
    layers = params["layers"]

    def stack2d(name):                       # [L, A, B]
        return jnp.stack([l[name] for l in layers], axis=0)

    def stack_row(name, width):              # [L, 1, width]
        return jnp.stack([l[name].reshape(1, width) for l in layers], axis=0)

    packed = {
        "word_emb": params["word_emb"],
        "pos_emb": params["pos_emb"],
        "type_emb": params["type_emb"],
        "emb_ln_g": params["emb_ln_g"].reshape(1, HIDDEN),
        "emb_ln_b": params["emb_ln_b"].reshape(1, HIDDEN),
        "head_w": params["head_w"],
        "head_b": params["head_b"].reshape(1, HIDDEN),
        "head_ln_g": params["head_ln_g"].reshape(1, HIDDEN),
        "head_ln_b": params["head_ln_b"].reshape(1, HIDDEN),
        "dec_w_pad": jnp.zeros((HIDDEN, VPAD), jnp.float32).at[:, :VOCAB].set(params["dec_w"]),
        "dec_b_pad": jnp.zeros((1, VPAD), jnp.float32).at[:, :VOCAB].set(
            params["dec_b"].reshape(1, VOCAB)),
        "wqkv": jnp.stack(
            [jnp.concatenate([l["wq"], l["wk"], l["wv"]], axis=1) for l in layers], axis=0),
        "bqkv": jnp.stack(
            [jnp.concatenate([l["bq"], l["bk"], l["bv"]]).reshape(1, 3 * HIDDEN)
             for l in layers], axis=0),
        "wo": stack2d("wo"), "bo": stack_row("bo", HIDDEN),
        "ln1_g": stack_row("ln1_g", HIDDEN), "ln1_b": stack_row("ln1_b", HIDDEN),
        "w1": stack2d("w1"), "b1": stack_row("b1", FFN),
        "w2": stack2d("w2"), "b2": stack_row("b2", HIDDEN),
        "ln2_g": stack_row("ln2_g", HIDDEN), "ln2_b": stack_row("ln2_b", HIDDEN),
    }
    return packed


# ----------------------------- pure-JAX reference -----------------------------

def bert_mlm_reference(params, input_ids, attention_mask):
    B, S = input_ids.shape
    word = jnp.take(params["word_emb"], input_ids, axis=0)
    pos = params["pos_emb"][:S][None]
    typ = params["type_emb"][0][None, None]
    h = (word + pos + typ).astype(jnp.float32)

    def ln(x, g, b):
        m = jnp.mean(x, -1, keepdims=True)
        v = jnp.mean((x - m) ** 2, -1, keepdims=True)
        return (x - m) * jax.lax.rsqrt(v + LN_EPS) * g + b

    h = ln(h, params["emb_ln_g"], params["emb_ln_b"])
    add_mask = ((1.0 - attention_mask.astype(jnp.float32)) * -1e9)[:, None, None, :]
    for layer in params["layers"]:
        q = h @ layer["wq"] + layer["bq"]
        k = h @ layer["wk"] + layer["bk"]
        v = h @ layer["wv"] + layer["bv"]

        def heads(x):
            return x.reshape(B, S, N_HEADS, HEAD_DIM).transpose(0, 2, 1, 3)

        qh, kh, vh = heads(q), heads(k), heads(v)
        s = jnp.einsum("bhqd,bhkd->bhqk", qh, kh) / (HEAD_DIM ** 0.5) + add_mask
        p = jax.nn.softmax(s, axis=-1)
        ctx = jnp.einsum("bhqk,bhkd->bhqd", p, vh).transpose(0, 2, 1, 3).reshape(B, S, HIDDEN)
        attn_out = ctx @ layer["wo"] + layer["bo"]
        h = ln(attn_out + h, layer["ln1_g"], layer["ln1_b"])
        ff = _gelu(h @ layer["w1"] + layer["b1"])
        ff = ff @ layer["w2"] + layer["b2"]
        h = ln(ff + h, layer["ln2_g"], layer["ln2_b"])
    t = _gelu(h @ params["head_w"] + params["head_b"])
    t = ln(t, params["head_ln_g"], params["head_ln_b"])
    return t @ params["dec_w"] + params["dec_b"]


# ----------------------------- Generator wrapper -----------------------------

class Generator:
    """JAX/Pallas port of the PyTorch Generator: forward returns MLM logits."""

    def __init__(self, protbert_params, cls_token_id=CLS_ID, sep_token_id=SEP_ID,
                 mask_token_id=MASK_ID, pad_token_id=PAD_ID):
        self.params = protbert_params
        self.packed = pack_params(protbert_params)
        self.cls_token_id = cls_token_id
        self.sep_token_id = sep_token_id
        self.mask_token_id = mask_token_id
        self.pad_token_id = pad_token_id
        self._fwd = jax.jit(bert_mlm_forward)

    def forward(self, input_ids, attention_mask=None):
        if attention_mask is None:
            attention_mask = jnp.ones_like(input_ids)
        return self._fwd(self.packed, input_ids, attention_mask)

    __call__ = forward


# ----------------------------- main -----------------------------

if __name__ == "__main__":
    key = jax.random.PRNGKey(0)
    pkey, ikey = jax.random.split(key)

    params = init_params(pkey)

    B, S = 2, 8
    input_ids = jax.random.randint(ikey, (B, S), 5, VOCAB, dtype=jnp.int32)
    # make sequences BERT-like: [CLS] ... [MASK] ... [SEP]
    input_ids = input_ids.at[:, 0].set(CLS_ID)
    input_ids = input_ids.at[:, -1].set(SEP_ID)
    input_ids = input_ids.at[:, 3].set(MASK_ID)
    attention_mask = jnp.ones((B, S), dtype=jnp.int32)

    gen = Generator(params)
    logits = jax.block_until_ready(gen.forward(input_ids, attention_mask))

    assert logits.shape == (B, S, VOCAB), logits.shape
    assert bool(jnp.all(jnp.isfinite(logits)))

    ref = bert_mlm_reference(params, input_ids, attention_mask)
    max_err = float(jnp.max(jnp.abs(logits - ref)))
    assert bool(jnp.allclose(logits, ref, atol=5e-2, rtol=5e-2)), max_err

    print("KERNEL_OK")
</pallas_src>

<mosaic_0001>
module attributes {stable_mosaic.version = 11 : i64} {
  func.func @_fused_bert_kernel(%arg0: i32, %arg1: memref<1x8x32xf32, #tpu.memory_space<vmem>>, %arg2: memref<1x1x8xf32, #tpu.memory_space<vmem>>, %arg3: memref<2x32x96xf32, #tpu.memory_space<vmem>>, %arg4: memref<2x1x96xf32, #tpu.memory_space<vmem>>, %arg5: memref<2x32x32xf32, #tpu.memory_space<vmem>>, %arg6: memref<2x1x32xf32, #tpu.memory_space<vmem>>, %arg7: memref<2x1x32xf32, #tpu.memory_space<vmem>>, %arg8: memref<2x1x32xf32, #tpu.memory_space<vmem>>, %arg9: memref<2x32x64xf32, #tpu.memory_space<vmem>>, %arg10: memref<2x1x64xf32, #tpu.memory_space<vmem>>, %arg11: memref<2x64x32xf32, #tpu.memory_space<vmem>>, %arg12: memref<2x1x32xf32, #tpu.memory_space<vmem>>, %arg13: memref<2x1x32xf32, #tpu.memory_space<vmem>>, %arg14: memref<2x1x32xf32, #tpu.memory_space<vmem>>, %arg15: memref<1x32xf32, #tpu.memory_space<vmem>>, %arg16: memref<1x32xf32, #tpu.memory_space<vmem>>, %arg17: memref<32x32xf32, #tpu.memory_space<vmem>>, %arg18: memref<1x32xf32, #tpu.memory_space<vmem>>, %arg19: memref<1x32xf32, #tpu.memory_space<vmem>>, %arg20: memref<1x32xf32, #tpu.memory_space<vmem>>, %arg21: memref<32x128xf32, #tpu.memory_space<vmem>>, %arg22: memref<1x128xf32, #tpu.memory_space<vmem>>, %arg23: memref<1x8x128xf32, #tpu.memory_space<vmem>>) attributes {dimension_semantics = [#tpu.dimension_semantics<parallel>], iteration_bounds = array<i64: 2>, scalar_prefetch = 0 : i64, scratch_operands = 0 : i64, tpu.core_type = #tpu.core_type<tc>, window_params = [{transform_indices = @transform_0, window_bounds = array<i64: 1, 8, 32>}, {transform_indices = @transform_1, window_bounds = array<i64: 1, 1, 8>}, {pipeline_mode = #tpu.pipeline_mode<synchronous>, transform_indices = @transform_2, window_bounds = array<i64: 2, 32, 96>}, {pipeline_mode = #tpu.pipeline_mode<synchronous>, transform_indices = @transform_3, window_bounds = array<i64: 2, 1, 96>}, {pipeline_mode = #tpu.pipeline_mode<synchronous>, transform_indices = @transform_4, window_bounds = array<i64: 2, 32, 32>}, {pipeline_mode = #tpu.pipeline_mode<synchronous>, transform_indices = @transform_5, window_bounds = array<i64: 2, 1, 32>}, {pipeline_mode = #tpu.pipeline_mode<synchronous>, transform_indices = @transform_6, window_bounds = array<i64: 2, 1, 32>}, {pipeline_mode = #tpu.pipeline_mode<synchronous>, transform_indices = @transform_7, window_bounds = array<i64: 2, 1, 32>}, {pipeline_mode = #tpu.pipeline_mode<synchronous>, transform_indices = @transform_8, window_bounds = array<i64: 2, 32, 64>}, {pipeline_mode = #tpu.pipeline_mode<synchronous>, transform_indices = @transform_9, window_bounds = array<i64: 2, 1, 64>}, {pipeline_mode = #tpu.pipeline_mode<synchronous>, transform_indices = @transform_10, window_bounds = array<i64: 2, 64, 32>}, {pipeline_mode = #tpu.pipeline_mode<synchronous>, transform_indices = @transform_11, window_bounds = array<i64: 2, 1, 32>}, {pipeline_mode = #tpu.pipeline_mode<synchronous>, transform_indices = @transform_12, window_bounds = array<i64: 2, 1, 32>}, {pipeline_mode = #tpu.pipeline_mode<synchronous>, transform_indices = @transform_13, window_bounds = array<i64: 2, 1, 32>}, {pipeline_mode = #tpu.pipeline_mode<synchronous>, transform_indices = @transform_14, window_bounds = array<i64: 1, 32>}, {pipeline_mode = #tpu.pipeline_mode<synchronous>, transform_indices = @transform_15, window_bounds = array<i64: 1, 32>}, {pipeline_mode = #tpu.pipeline_mode<synchronous>, transform_indices = @transform_16, window_bounds = array<i64: 32, 32>}, {pipeline_mode = #tpu.pipeline_mode<synchronous>, transform_indices = @transform_17, window_bounds = array<i64: 1, 32>}, {pipeline_mode = #tpu.pipeline_mode<synchronous>, transform_indices = @transform_18, window_bounds = array<i64: 1, 32>}, {pipeline_mode = #tpu.pipeline_mode<synchronous>, transform_indices = @transform_19, window_bounds = array<i64: 1, 32>}, {pipeline_mode = #tpu.pipeline_mode<synchronous>, transform_indices = @transform_20, window_bounds = array<i64: 32, 128>}, {pipeline_mode = #tpu.pipeline_mode<synchronous>, transform_indices = @transform_21, window_bounds = array<i64: 1, 128>}, {transform_indices = @transform_22, window_bounds = array<i64: 1, 8, 128>}]} {
    %c0 = arith.constant 0 : index
    %c0_0 = arith.constant 0 : index
    %c0_1 = arith.constant 0 : index
    %0 = vector.load %arg1[%c0, %c0_0, %c0_1] : memref<1x8x32xf32, #tpu.memory_space<vmem>>, vector<1x8x32xf32>
    %1 = vector.shape_cast %0 : vector<1x8x32xf32> to vector<8x32xf32>
    %c0_2 = arith.constant 0 : index
    %c0_3 = arith.constant 0 : index
    %2 = vector.load %arg15[%c0_2, %c0_3] : memref<1x32xf32, #tpu.memory_space<vmem>>, vector<1x32xf32>
    %c0_4 = arith.constant 0 : index
    %c0_5 = arith.constant 0 : index
    %3 = vector.load %arg16[%c0_4, %c0_5] : memref<1x32xf32, #tpu.memory_space<vmem>>, vector<1x32xf32>
    %cst = arith.constant dense<0.000000e+00> : vector<8xf32>
    %4 = vector.multi_reduction <add>, %1, %cst [1] : vector<8x32xf32> to vector<8xf32>
    %5 = vector.shape_cast %4 : vector<8xf32> to vector<8x1xf32>
    %cst_6 = arith.constant 3.200000e+01 : f32
    %6 = vector.broadcast %cst_6 : f32 to vector<8x1xf32>
    %7 = arith.divf %5, %6 : vector<8x1xf32>
    %8 = vector.broadcast %7 : vector<8x1xf32> to vector<8x32xf32>
    %9 = arith.subf %1, %8 : vector<8x32xf32>
    %10 = arith.mulf %9, %9 : vector<8x32xf32>
    %cst_7 = arith.constant dense<0.000000e+00> : vector<8xf32>
    %11 = vector.multi_reduction <add>, %10, %cst_7 [1] : vector<8x32xf32> to vector<8xf32>
    %12 = vector.shape_cast %11 : vector<8xf32> to vector<8x1xf32>
    %cst_8 = arith.constant 3.200000e+01 : f32
    %13 = vector.broadcast %cst_8 : f32 to vector<8x1xf32>
    %14 = arith.divf %12, %13 : vector<8x1xf32>
    %15 = vector.broadcast %7 : vector<8x1xf32> to vector<8x32xf32>
    %16 = arith.subf %1, %15 : vector<8x32xf32>
    %cst_9 = arith.constant 9.99999996E-13 : f32
    %17 = vector.broadcast %cst_9 : f32 to vector<8x1xf32>
    %18 = arith.addf %14, %17 : vector<8x1xf32>
    %19 = math.rsqrt %18 : vector<8x1xf32>
    %20 = vector.broadcast %19 : vector<8x1xf32> to vector<8x32xf32>
    %21 = arith.mulf %16, %20 : vector<8x32xf32>
    %22 = vector.broadcast %2 : vector<1x32xf32> to vector<8x32xf32>
    %23 = arith.mulf %21, %22 : vector<8x32xf32>
    %24 = vector.broadcast %3 : vector<1x32xf32> to vector<8x32xf32>
    %25 = arith.addf %23, %24 : vector<8x32xf32>
    %c0_10 = arith.constant 0 : index
    %c0_11 = arith.constant 0 : index
    %c0_12 = arith.constant 0 : index
    %26 = vector.load %arg2[%c0_10, %c0_11, %c0_12] : memref<1x1x8xf32, #tpu.memory_space<vmem>>, vector<1x1x8xf32>
    %27 = vector.shape_cast %26 : vector<1x1x8xf32> to vector<1x8xf32>
    %cst_13 = arith.constant 1.000000e+00 : f32
    %28 = vector.broadcast %cst_13 : f32 to vector<1x8xf32>
    %29 = arith.subf %28, %27 : vector<1x8xf32>
    %cst_14 = arith.constant -1.000000e+09 : f32
    %30 = vector.broadcast %cst_14 : f32 to vector<1x8xf32>
    %31 = arith.mulf %29, %30 : vector<1x8xf32>
    %c0_i32 = arith.constant 0 : i32
    %32 = arith.index_cast %c0_i32 : i32 to index
    %c0_15 = arith.constant 0 : index
    %c0_16 = arith.constant 0 : index
    %33 = vector.load %arg3[%32, %c0_15, %c0_16] : memref<2x32x96xf32, #tpu.memory_space<vmem>>, vector<1x32x96xf32>
    %34 = vector.shape_cast %33 : vector<1x32x96xf32> to vector<32x96xf32>
    %cst_17 = arith.constant dense<0.000000e+00> : vector<8x96xf32>
    %35 = tpu.matmul %25, %34, %cst_17 {dimension_numbers = #tpu.dot_dimension_numbers<[1], [0], [0], [1], [0, 0, 1, 1], [], []>} : vector<8x32xf32>, vector<32x96xf32>, vector<8x96xf32> -> vector<8x96xf32>
    %36 = arith.index_cast %c0_i32 : i32 to index
    %c0_18 = arith.constant 0 : index
    %c0_19 = arith.constant 0 : index
    %37 = vector.load %arg4[%36, %c0_18, %c0_19] : memref<2x1x96xf32, #tpu.memory_space<vmem>>, vector<1x1x96xf32>
    %38 = vector.shape_cast %37 : vector<1x1x96xf32> to vector<1x96xf32>
    %39 = vector.broadcast %38 : vector<1x96xf32> to vector<8x96xf32>
    %40 = arith.addf %35, %39 : vector<8x96xf32>
    %41 = vector.extract_strided_slice %40 {offsets = [0, 0], sizes = [8, 16], strides = [1, 1]} : vector<8x96xf32> to vector<8x16xf32>
    %42 = vector.extract_strided_slice %40 {offsets = [0, 32], sizes = [8, 16], strides = [1, 1]} : vector<8x96xf32> to vector<8x16xf32>
    %43 = vector.extract_strided_slice %40 {offsets = [0, 64], sizes = [8, 16], strides = [1, 1]} : vector<8x96xf32> to vector<8x16xf32>
    %cst_20 = arith.constant dense<0.000000e+00> : vector<8x8xf32>
    %44 = tpu.matmul %41, %42, %cst_20 {dimension_numbers = #tpu.dot_dimension_numbers<[1], [1], [0], [0], [0, 0, 1, 0], [], []>} : vector<8x16xf32>, vector<8x16xf32>, vector<8x8xf32> -> vector<8x8xf32>
    %cst_21 = arith.constant 2.500000e-01 : f32
    %45 = vector.broadcast %cst_21 : f32 to vector<8x8xf32>
    %46 = arith.mulf %44, %45 : vector<8x8xf32>
    %47 = vector.broadcast %31 : vector<1x8xf32> to vector<8x8xf32>
    %48 = arith.addf %46, %47 : vector<8x8xf32>
    %cst_22 = arith.constant dense<0xFF800000> : vector<8xf32>
    %49 = vector.multi_reduction <maximumf>, %48, %cst_22 [1] : vector<8x8xf32> to vector<8xf32>
    %50 = vector.shape_cast %49 : vector<8xf32> to vector<8x1xf32>
    %51 = vector.broadcast %50 : vector<8x1xf32> to vector<8x8xf32>
    %52 = arith.subf %48, %51 : vector<8x8xf32>
    %53 = math.exp %52 : vector<8x8xf32>
    %cst_23 = arith.constant dense<0.000000e+00> : vector<8xf32>
    %54 = vector.multi_reduction <add>, %53, %cst_23 [1] : vector<8x8xf32> to vector<8xf32>
    %55 = vector.shape_cast %54 : vector<8xf32> to vector<8x1xf32>
    %56 = tpu.reciprocal %55 {approx = true} : vector<8x1xf32> -> vector<8x1xf32>
    %57 = vector.broadcast %56 : vector<8x1xf32> to vector<8x8xf32>
    %58 = arith.mulf %53, %57 : vector<8x8xf32>
    %cst_24 = arith.constant dense<0.000000e+00> : vector<8x16xf32>
    %59 = tpu.matmul %58, %43, %cst_24 {dimension_numbers = #tpu.dot_dimension_numbers<[1], [0], [0], [1], [0, 0, 1, 1], [], []>} : vector<8x8xf32>, vector<8x16xf32>, vector<8x16xf32> -> vector<8x16xf32>
    %60 = vector.extract_strided_slice %40 {offsets = [0, 16], sizes = [8, 16], strides = [1, 1]} : vector<8x96xf32> to vector<8x16xf32>
    %61 = vector.extract_strided_slice %40 {offsets = [0, 48], sizes = [8, 16], strides = [1, 1]} : vector<8x96xf32> to vector<8x16xf32>
    %62 = vector.extract_strided_slice %40 {offsets = [0, 80], sizes = [8, 16], strides = [1, 1]} : vector<8x96xf32> to vector<8x16xf32>
    %cst_25 = arith.constant dense<0.000000e+00> : vector<8x8xf32>
    %63 = tpu.matmul %60, %61, %cst_25 {dimension_numbers = #tpu.dot_dimension_numbers<[1], [1], [0], [0], [0, 0, 1, 0], [], []>} : vector<8x16xf32>, vector<8x16xf32>, vector<8x8xf32> -> vector<8x8xf32>
    %cst_26 = arith.constant 2.500000e-01 : f32
    %64 = vector.broadcast %cst_26 : f32 to vector<8x8xf32>
    %65 = arith.mulf %63, %64 : vector<8x8xf32>
    %66 = vector.broadcast %31 : vector<1x8xf32> to vector<8x8xf32>
    %67 = arith.addf %65, %66 : vector<8x8xf32>
    %cst_27 = arith.constant dense<0xFF800000> : vector<8xf32>
    %68 = vector.multi_reduction <maximumf>, %67, %cst_27 [1] : vector<8x8xf32> to vector<8xf32>
    %69 = vector.shape_cast %68 : vector<8xf32> to vector<8x1xf32>
    %70 = vector.broadcast %69 : vector<8x1xf32> to vector<8x8xf32>
    %71 = arith.subf %67, %70 : vector<8x8xf32>
    %72 = math.exp %71 : vector<8x8xf32>
    %cst_28 = arith.constant dense<0.000000e+00> : vector<8xf32>
    %73 = vector.multi_reduction <add>, %72, %cst_28 [1] : vector<8x8xf32> to vector<8xf32>
    %74 = vector.shape_cast %73 : vector<8xf32> to vector<8x1xf32>
    %75 = tpu.reciprocal %74 {approx = true} : vector<8x1xf32> -> vector<8x1xf32>
    %76 = vector.broadcast %75 : vector<8x1xf32> to vector<8x8xf32>
    %77 = arith.mulf %72, %76 : vector<8x8xf32>
    %cst_29 = arith.constant dense<0.000000e+00> : vector<8x16xf32>
    %78 = tpu.matmul %77, %62, %cst_29 {dimension_numbers = #tpu.dot_dimension_numbers<[1], [0], [0], [1], [0, 0, 1, 1], [], []>} : vector<8x8xf32>, vector<8x16xf32>, vector<8x16xf32> -> vector<8x16xf32>
    %79 = tpu.concatenate %59, %78 in 1 : vector<8x16xf32>, vector<8x16xf32> -> vector<8x32xf32>
    %80 = arith.index_cast %c0_i32 : i32 to index
    %c0_30 = arith.constant 0 : index
    %c0_31 = arith.constant 0 : index
    %81 = vector.load %arg5[%80, %c0_30, %c0_31] : memref<2x32x32xf32, #tpu.memory_space<vmem>>, vector<1x32x32xf32>
    %82 = vector.shape_cast %81 : vector<1x32x32xf32> to vector<32x32xf32>
    %cst_32 = arith.constant dense<0.000000e+00> : vector<8x32xf32>
    %83 = tpu.matmul %79, %82, %cst_32 {dimension_numbers = #tpu.dot_dimension_numbers<[1], [0], [0], [1], [0, 0, 1, 1], [], []>} : vector<8x32xf32>, vector<32x32xf32>, vector<8x32xf32> -> vector<8x32xf32>
    %84 = arith.index_cast %c0_i32 : i32 to index
    %c0_33 = arith.constant 0 : index
    %c0_34 = arith.constant 0 : index
    %85 = vector.load %arg6[%84, %c0_33, %c0_34] : memref<2x1x32xf32, #tpu.memory_space<vmem>>, vector<1x1x32xf32>
    %86 = vector.shape_cast %85 : vector<1x1x32xf32> to vector<1x32xf32>
    %87 = vector.broadcast %86 : vector<1x32xf32> to vector<8x32xf32>
    %88 = arith.addf %83, %87 : vector<8x32xf32>
    %89 = arith.addf %88, %25 : vector<8x32xf32>
    %90 = arith.index_cast %c0_i32 : i32 to index
    %c0_35 = arith.constant 0 : index
    %c0_36 = arith.constant 0 : index
    %91 = vector.load %arg7[%90, %c0_35, %c0_36] : memref<2x1x32xf32, #tpu.memory_space<vmem>>, vector<1x1x32xf32>
    %92 = vector.shape_cast %91 : vector<1x1x32xf32> to vector<1x32xf32>
    %93 = arith.index_cast %c0_i32 : i32 to index
    %c0_37 = arith.constant 0 : index
    %c0_38 = arith.constant 0 : index
    %94 = vector.load %arg8[%93, %c0_37, %c0_38] : memref<2x1x32xf32, #tpu.memory_space<vmem>>, vector<1x1x32xf32>
    %95 = vector.shape_cast %94 : vector<1x1x32xf32> to vector<1x32xf32>
    %cst_39 = arith.constant dense<0.000000e+00> : vector<8xf32>
    %96 = vector.multi_reduction <add>, %89, %cst_39 [1] : vector<8x32xf32> to vector<8xf32>
    %97 = vector.shape_cast %96 : vector<8xf32> to vector<8x1xf32>
    %cst_40 = arith.constant 3.200000e+01 : f32
    %98 = vector.broadcast %cst_40 : f32 to vector<8x1xf32>
    %99 = arith.divf %97, %98 : vector<8x1xf32>
    %100 = vector.broadcast %99 : vector<8x1xf32> to vector<8x32xf32>
    %101 = arith.subf %89, %100 : vector<8x32xf32>
    %102 = arith.mulf %101, %101 : vector<8x32xf32>
    %cst_41 = arith.constant dense<0.000000e+00> : vector<8xf32>
    %103 = vector.multi_reduction <add>, %102, %cst_41 [1] : vector<8x32xf32> to vector<8xf32>
    %104 = vector.shape_cast %103 : vector<8xf32> to vector<8x1xf32>
    %cst_42 = arith.constant 3.200000e+01 : f32
    %105 = vector.broadcast %cst_42 : f32 to vector<8x1xf32>
    %106 = arith.divf %104, %105 : vector<8x1xf32>
    %107 = vector.broadcast %99 : vector<8x1xf32> to vector<8x32xf32>
    %108 = arith.subf %89, %107 : vector<8x32xf32>
    %cst_43 = arith.constant 9.99999996E-13 : f32
    %109 = vector.broadcast %cst_43 : f32 to vector<8x1xf32>
    %110 = arith.addf %106, %109 : vector<8x1xf32>
    %111 = math.rsqrt %110 : vector<8x1xf32>
    %112 = vector.broadcast %111 : vector<8x1xf32> to vector<8x32xf32>
    %113 = arith.mulf %108, %112 : vector<8x32xf32>
    %114 = vector.broadcast %92 : vector<1x32xf32> to vector<8x32xf32>
    %115 = arith.mulf %113, %114 : vector<8x32xf32>
    %116 = vector.broadcast %95 : vector<1x32xf32> to vector<8x32xf32>
    %117 = arith.addf %115, %116 : vector<8x32xf32>
    %118 = arith.index_cast %c0_i32 : i32 to index
    %c0_44 = arith.constant 0 : index
    %c0_45 = arith.constant 0 : index
    %119 = vector.load %arg9[%118, %c0_44, %c0_45] : memref<2x32x64xf32, #tpu.memory_space<vmem>>, vector<1x32x64xf32>
    %120 = vector.shape_cast %119 : vector<1x32x64xf32> to vector<32x64xf32>
    %cst_46 = arith.constant dense<0.000000e+00> : vector<8x64xf32>
    %121 = tpu.matmul %117, %120, %cst_46 {dimension_numbers = #tpu.dot_dimension_numbers<[1], [0], [0], [1], [0, 0, 1, 1], [], []>} : vector<8x32xf32>, vector<32x64xf32>, vector<8x64xf32> -> vector<8x64xf32>
    %122 = arith.index_cast %c0_i32 : i32 to index
    %c0_47 = arith.constant 0 : index
    %c0_48 = arith.constant 0 : index
    %123 = vector.load %arg10[%122, %c0_47, %c0_48] : memref<2x1x64xf32, #tpu.memory_space<vmem>>, vector<1x1x64xf32>
    %124 = vector.shape_cast %123 : vector<1x1x64xf32> to vector<1x64xf32>
    %125 = vector.broadcast %124 : vector<1x64xf32> to vector<8x64xf32>
    %126 = arith.addf %121, %125 : vector<8x64xf32>
    %cst_49 = arith.constant 5.000000e-01 : f32
    %127 = vector.broadcast %cst_49 : f32 to vector<8x64xf32>
    %128 = arith.mulf %127, %126 : vector<8x64xf32>
    %cst_50 = arith.constant 4.471500e-02 : f32
    %129 = vector.broadcast %cst_50 : f32 to vector<8x64xf32>
    %130 = arith.mulf %129, %126 : vector<8x64xf32>
    %131 = arith.mulf %130, %126 : vector<8x64xf32>
    %132 = arith.mulf %131, %126 : vector<8x64xf32>
    %133 = arith.addf %126, %132 : vector<8x64xf32>
    %cst_51 = arith.constant 0.797884583 : f32
    %134 = vector.broadcast %cst_51 : f32 to vector<8x64xf32>
    %135 = arith.mulf %134, %133 : vector<8x64xf32>
    %136 = math.tanh %135 : vector<8x64xf32>
    %cst_52 = arith.constant 1.000000e+00 : f32
    %137 = vector.broadcast %cst_52 : f32 to vector<8x64xf32>
    %138 = arith.addf %137, %136 : vector<8x64xf32>
    %139 = arith.mulf %128, %138 : vector<8x64xf32>
    %140 = arith.index_cast %c0_i32 : i32 to index
    %c0_53 = arith.constant 0 : index
    %c0_54 = arith.constant 0 : index
    %141 = vector.load %arg11[%140, %c0_53, %c0_54] : memref<2x64x32xf32, #tpu.memory_space<vmem>>, vector<1x64x32xf32>
    %142 = vector.shape_cast %141 : vector<1x64x32xf32> to vector<64x32xf32>
    %cst_55 = arith.constant dense<0.000000e+00> : vector<8x32xf32>
    %143 = tpu.matmul %139, %142, %cst_55 {dimension_numbers = #tpu.dot_dimension_numbers<[1], [0], [0], [1], [0, 0, 1, 1], [], []>} : vector<8x64xf32>, vector<64x32xf32>, vector<8x32xf32> -> vector<8x32xf32>
    %144 = arith.index_cast %c0_i32 : i32 to index
    %c0_56 = arith.constant 0 : index
    %c0_57 = arith.constant 0 : index
    %145 = vector.load %arg12[%144, %c0_56, %c0_57] : memref<2x1x32xf32, #tpu.memory_space<vmem>>, vector<1x1x32xf32>
    %146 = vector.shape_cast %145 : vector<1x1x32xf32> to vector<1x32xf32>
    %147 = vector.broadcast %146 : vector<1x32xf32> to vector<8x32xf32>
    %148 = arith.addf %143, %147 : vector<8x32xf32>
    %149 = arith.addf %148, %117 : vector<8x32xf32>
    %150 = arith.index_cast %c0_i32 : i32 to index
    %c0_58 = arith.constant 0 : index
    %c0_59 = arith.constant 0 : index
    %151 = vector.load %arg13[%150, %c0_58, %c0_59] : memref<2x1x32xf32, #tpu.memory_space<vmem>>, vector<1x1x32xf32>
    %152 = vector.shape_cast %151 : vector<1x1x32xf32> to vector<1x32xf32>
    %153 = arith.index_cast %c0_i32 : i32 to index
    %c0_60 = arith.constant 0 : index
    %c0_61 = arith.constant 0 : index
    %154 = vector.load %arg14[%153, %c0_60, %c0_61] : memref<2x1x32xf32, #tpu.memory_space<vmem>>, vector<1x1x32xf32>
    %155 = vector.shape_cast %154 : vector<1x1x32xf32> to vector<1x32xf32>
    %cst_62 = arith.constant dense<0.000000e+00> : vector<8xf32>
    %156 = vector.multi_reduction <add>, %149, %cst_62 [1] : vector<8x32xf32> to vector<8xf32>
    %157 = vector.shape_cast %156 : vector<8xf32> to vector<8x1xf32>
    %cst_63 = arith.constant 3.200000e+01 : f32
    %158 = vector.broadcast %cst_63 : f32 to vector<8x1xf32>
    %159 = arith.divf %157, %158 : vector<8x1xf32>
    %160 = vector.broadcast %159 : vector<8x1xf32> to vector<8x32xf32>
    %161 = arith.subf %149, %160 : vector<8x32xf32>
    %162 = arith.mulf %161, %161 : vector<8x32xf32>
    %cst_64 = arith.constant dense<0.000000e+00> : vector<8xf32>
    %163 = vector.multi_reduction <add>, %162, %cst_64 [1] : vector<8x32xf32> to vector<8xf32>
    %164 = vector.shape_cast %163 : vector<8xf32> to vector<8x1xf32>
    %cst_65 = arith.constant 3.200000e+01 : f32
    %165 = vector.broadcast %cst_65 : f32 to vector<8x1xf32>
    %166 = arith.divf %164, %165 : vector<8x1xf32>
    %167 = vector.broadcast %159 : vector<8x1xf32> to vector<8x32xf32>
    %168 = arith.subf %149, %167 : vector<8x32xf32>
    %cst_66 = arith.constant 9.99999996E-13 : f32
    %169 = vector.broadcast %cst_66 : f32 to vector<8x1xf32>
    %170 = arith.addf %166, %169 : vector<8x1xf32>
    %171 = math.rsqrt %170 : vector<8x1xf32>
    %172 = vector.broadcast %171 : vector<8x1xf32> to vector<8x32xf32>
    %173 = arith.mulf %168, %172 : vector<8x32xf32>
    %174 = vector.broadcast %152 : vector<1x32xf32> to vector<8x32xf32>
    %175 = arith.mulf %173, %174 : vector<8x32xf32>
    %176 = vector.broadcast %155 : vector<1x32xf32> to vector<8x32xf32>
    %177 = arith.addf %175, %176 : vector<8x32xf32>
    %c1_i32 = arith.constant 1 : i32
    %178 = arith.index_cast %c1_i32 : i32 to index
    %c0_67 = arith.constant 0 : index
    %c0_68 = arith.constant 0 : index
    %179 = vector.load %arg3[%178, %c0_67, %c0_68] : memref<2x32x96xf32, #tpu.memory_space<vmem>>, vector<1x32x96xf32>
    %180 = vector.shape_cast %179 : vector<1x32x96xf32> to vector<32x96xf32>
    %cst_69 = arith.constant dense<0.000000e+00> : vector<8x96xf32>
    %181 = tpu.matmul %177, %180, %cst_69 {dimension_numbers = #tpu.dot_dimension_numbers<[1], [0], [0], [1], [0, 0, 1, 1], [], []>} : vector<8x32xf32>, vector<32x96xf32>, vector<8x96xf32> -> vector<8x96xf32>
    %182 = arith.index_cast %c1_i32 : i32 to index
    %c0_70 = arith.constant 0 : index
    %c0_71 = arith.constant 0 : index
    %183 = vector.load %arg4[%182, %c0_70, %c0_71] : memref<2x1x96xf32, #tpu.memory_space<vmem>>, vector<1x1x96xf32>
    %184 = vector.shape_cast %183 : vector<1x1x96xf32> to vector<1x96xf32>
    %185 = vector.broadcast %184 : vector<1x96xf32> to vector<8x96xf32>
    %186 = arith.addf %181, %185 : vector<8x96xf32>
    %187 = vector.extract_strided_slice %186 {offsets = [0, 0], sizes = [8, 16], strides = [1, 1]} : vector<8x96xf32> to vector<8x16xf32>
    %188 = vector.extract_strided_slice %186 {offsets = [0, 32], sizes = [8, 16], strides = [1, 1]} : vector<8x96xf32> to vector<8x16xf32>
    %189 = vector.extract_strided_slice %186 {offsets = [0, 64], sizes = [8, 16], strides = [1, 1]} : vector<8x96xf32> to vector<8x16xf32>
    %cst_72 = arith.constant dense<0.000000e+00> : vector<8x8xf32>
    %190 = tpu.matmul %187, %188, %cst_72 {dimension_numbers = #tpu.dot_dimension_numbers<[1], [1], [0], [0], [0, 0, 1, 0], [], []>} : vector<8x16xf32>, vector<8x16xf32>, vector<8x8xf32> -> vector<8x8xf32>
    %cst_73 = arith.constant 2.500000e-01 : f32
    %191 = vector.broadcast %cst_73 : f32 to vector<8x8xf32>
    %192 = arith.mulf %190, %191 : vector<8x8xf32>
    %193 = vector.broadcast %31 : vector<1x8xf32> to vector<8x8xf32>
    %194 = arith.addf %192, %193 : vector<8x8xf32>
    %cst_74 = arith.constant dense<0xFF800000> : vector<8xf32>
    %195 = vector.multi_reduction <maximumf>, %194, %cst_74 [1] : vector<8x8xf32> to vector<8xf32>
    %196 = vector.shape_cast %195 : vector<8xf32> to vector<8x1xf32>
    %197 = vector.broadcast %196 : vector<8x1xf32> to vector<8x8xf32>
    %198 = arith.subf %194, %197 : vector<8x8xf32>
    %199 = math.exp %198 : vector<8x8xf32>
    %cst_75 = arith.constant dense<0.000000e+00> : vector<8xf32>
    %200 = vector.multi_reduction <add>, %199, %cst_75 [1] : vector<8x8xf32> to vector<8xf32>
    %201 = vector.shape_cast %200 : vector<8xf32> to vector<8x1xf32>
    %202 = tpu.reciprocal %201 {approx = true} : vector<8x1xf32> -> vector<8x1xf32>
    %203 = vector.broadcast %202 : vector<8x1xf32> to vector<8x8xf32>
    %204 = arith.mulf %199, %203 : vector<8x8xf32>
    %cst_76 = arith.constant dense<0.000000e+00> : vector<8x16xf32>
    %205 = tpu.matmul %204, %189, %cst_76 {dimension_numbers = #tpu.dot_dimension_numbers<[1], [0], [0], [1], [0, 0, 1, 1], [], []>} : vector<8x8xf32>, vector<8x16xf32>, vector<8x16xf32> -> vector<8x16xf32>
    %206 = vector.extract_strided_slice %186 {offsets = [0, 16], sizes = [8, 16], strides = [1, 1]} : vector<8x96xf32> to vector<8x16xf32>
    %207 = vector.extract_strided_slice %186 {offsets = [0, 48], sizes = [8, 16], strides = [1, 1]} : vector<8x96xf32> to vector<8x16xf32>
    %208 = vector.extract_strided_slice %186 {offsets = [0, 80], sizes = [8, 16], strides = [1, 1]} : vector<8x96xf32> to vector<8x16xf32>
    %cst_77 = arith.constant dense<0.000000e+00> : vector<8x8xf32>
    %209 = tpu.matmul %206, %207, %cst_77 {dimension_numbers = #tpu.dot_dimension_numbers<[1], [1], [0], [0], [0, 0, 1, 0], [], []>} : vector<8x16xf32>, vector<8x16xf32>, vector<8x8xf32> -> vector<8x8xf32>
    %cst_78 = arith.constant 2.500000e-01 : f32
    %210 = vector.broadcast %cst_78 : f32 to vector<8x8xf32>
    %211 = arith.mulf %209, %210 : vector<8x8xf32>
    %212 = vector.broadcast %31 : vector<1x8xf32> to vector<8x8xf32>
    %213 = arith.addf %211, %212 : vector<8x8xf32>
    %cst_79 = arith.constant dense<0xFF800000> : vector<8xf32>
    %214 = vector.multi_reduction <maximumf>, %213, %cst_79 [1] : vector<8x8xf32> to vector<8xf32>
    %215 = vector.shape_cast %214 : vector<8xf32> to vector<8x1xf32>
    %216 = vector.broadcast %215 : vector<8x1xf32> to vector<8x8xf32>
    %217 = arith.subf %213, %216 : vector<8x8xf32>
    %218 = math.exp %217 : vector<8x8xf32>
    %cst_80 = arith.constant dense<0.000000e+00> : vector<8xf32>
    %219 = vector.multi_reduction <add>, %218, %cst_80 [1] : vector<8x8xf32> to vector<8xf32>
    %220 = vector.shape_cast %219 : vector<8xf32> to vector<8x1xf32>
    %221 = tpu.reciprocal %220 {approx = true} : vector<8x1xf32> -> vector<8x1xf32>
    %222 = vector.broadcast %221 : vector<8x1xf32> to vector<8x8xf32>
    %223 = arith.mulf %218, %222 : vector<8x8xf32>
    %cst_81 = arith.constant dense<0.000000e+00> : vector<8x16xf32>
    %224 = tpu.matmul %223, %208, %cst_81 {dimension_numbers = #tpu.dot_dimension_numbers<[1], [0], [0], [1], [0, 0, 1, 1], [], []>} : vector<8x8xf32>, vector<8x16xf32>, vector<8x16xf32> -> vector<8x16xf32>
    %225 = tpu.concatenate %205, %224 in 1 : vector<8x16xf32>, vector<8x16xf32> -> vector<8x32xf32>
    %226 = arith.index_cast %c1_i32 : i32 to index
    %c0_82 = arith.constant 0 : index
    %c0_83 = arith.constant 0 : index
    %227 = vector.load %arg5[%226, %c0_82, %c0_83] : memref<2x32x32xf32, #tpu.memory_space<vmem>>, vector<1x32x32xf32>
    %228 = vector.shape_cast %227 : vector<1x32x32xf32> to vector<32x32xf32>
    %cst_84 = arith.constant dense<0.000000e+00> : vector<8x32xf32>
    %229 = tpu.matmul %225, %228, %cst_84 {dimension_numbers = #tpu.dot_dimension_numbers<[1], [0], [0], [1], [0, 0, 1, 1], [], []>} : vector<8x32xf32>, vector<32x32xf32>, vector<8x32xf32> -> vector<8x32xf32>
    %230 = arith.index_cast %c1_i32 : i32 to index
    %c0_85 = arith.constant 0 : index
    %c0_86 = arith.constant 0 : index
    %231 = vector.load %arg6[%230, %c0_85, %c0_86] : memref<2x1x32xf32, #tpu.memory_space<vmem>>, vector<1x1x32xf32>
    %232 = vector.shape_cast %231 : vector<1x1x32xf32> to vector<1x32xf32>
    %233 = vector.broadcast %232 : vector<1x32xf32> to vector<8x32xf32>
    %234 = arith.addf %229, %233 : vector<8x32xf32>
    %235 = arith.addf %234, %177 : vector<8x32xf32>
    %236 = arith.index_cast %c1_i32 : i32 to index
    %c0_87 = arith.constant 0 : index
    %c0_88 = arith.constant 0 : index
    %237 = vector.load %arg7[%236, %c0_87, %c0_88] : memref<2x1x32xf32, #tpu.memory_space<vmem>>, vector<1x1x32xf32>
    %238 = vector.shape_cast %237 : vector<1x1x32xf32> to vector<1x32xf32>
    %239 = arith.index_cast %c1_i32 : i32 to index
    %c0_89 = arith.constant 0 : index
    %c0_90 = arith.constant 0 : index
    %240 = vector.load %arg8[%239, %c0_89, %c0_90] : memref<2x1x32xf32, #tpu.memory_space<vmem>>, vector<1x1x32xf32>
    %241 = vector.shape_cast %240 : vector<1x1x32xf32> to vector<1x32xf32>
    %cst_91 = arith.constant dense<0.000000e+00> : vector<8xf32>
    %242 = vector.multi_reduction <add>, %235, %cst_91 [1] : vector<8x32xf32> to vector<8xf32>
    %243 = vector.shape_cast %242 : vector<8xf32> to vector<8x1xf32>
    %cst_92 = arith.constant 3.200000e+01 : f32
    %244 = vector.broadcast %cst_92 : f32 to vector<8x1xf32>
    %245 = arith.divf %243, %244 : vector<8x1xf32>
    %246 = vector.broadcast %245 : vector<8x1xf32> to vector<8x32xf32>
    %247 = arith.subf %235, %246 : vector<8x32xf32>
    %248 = arith.mulf %247, %247 : vector<8x32xf32>
    %cst_93 = arith.constant dense<0.000000e+00> : vector<8xf32>
    %249 = vector.multi_reduction <add>, %248, %cst_93 [1] : vector<8x32xf32> to vector<8xf32>
    %250 = vector.shape_cast %249 : vector<8xf32> to vector<8x1xf32>
    %cst_94 = arith.constant 3.200000e+01 : f32
    %251 = vector.broadcast %cst_94 : f32 to vector<8x1xf32>
    %252 = arith.divf %250, %251 : vector<8x1xf32>
    %253 = vector.broadcast %245 : vector<8x1xf32> to vector<8x32xf32>
    %254 = arith.subf %235, %253 : vector<8x32xf32>
    %cst_95 = arith.constant 9.99999996E-13 : f32
    %255 = vector.broadcast %cst_95 : f32 to vector<8x1xf32>
    %256 = arith.addf %252, %255 : vector<8x1xf32>
    %257 = math.rsqrt %256 : vector<8x1xf32>
    %258 = vector.broadcast %257 : vector<8x1xf32> to vector<8x32xf32>
    %259 = arith.mulf %254, %258 : vector<8x32xf32>
    %260 = vector.broadcast %238 : vector<1x32xf32> to vector<8x32xf32>
    %261 = arith.mulf %259, %260 : vector<8x32xf32>
    %262 = vector.broadcast %241 : vector<1x32xf32> to vector<8x32xf32>
    %263 = arith.addf %261, %262 : vector<8x32xf32>
    %264 = arith.index_cast %c1_i32 : i32 to index
    %c0_96 = arith.constant 0 : index
    %c0_97 = arith.constant 0 : index
    %265 = vector.load %arg9[%264, %c0_96, %c0_97] : memref<2x32x64xf32, #tpu.memory_space<vmem>>, vector<1x32x64xf32>
    %266 = vector.shape_cast %265 : vector<1x32x64xf32> to vector<32x64xf32>
    %cst_98 = arith.constant dense<0.000000e+00> : vector<8x64xf32>
    %267 = tpu.matmul %263, %266, %cst_98 {dimension_numbers = #tpu.dot_dimension_numbers<[1], [0], [0], [1], [0, 0, 1, 1], [], []>} : vector<8x32xf32>, vector<32x64xf32>, vector<8x64xf32> -> vector<8x64xf32>
    %268 = arith.index_cast %c1_i32 : i32 to index
    %c0_99 = arith.constant 0 : index
    %c0_100 = arith.constant 0 : index
    %269 = vector.load %arg10[%268, %c0_99, %c0_100] : memref<2x1x64xf32, #tpu.memory_space<vmem>>, vector<1x1x64xf32>
    %270 = vector.shape_cast %269 : vector<1x1x64xf32> to vector<1x64xf32>
    %271 = vector.broadcast %270 : vector<1x64xf32> to vector<8x64xf32>
    %272 = arith.addf %267, %271 : vector<8x64xf32>
    %cst_101 = arith.constant 5.000000e-01 : f32
    %273 = vector.broadcast %cst_101 : f32 to vector<8x64xf32>
    %274 = arith.mulf %273, %272 : vector<8x64xf32>
    %cst_102 = arith.constant 4.471500e-02 : f32
    %275 = vector.broadcast %cst_102 : f32 to vector<8x64xf32>
    %276 = arith.mulf %275, %272 : vector<8x64xf32>
    %277 = arith.mulf %276, %272 : vector<8x64xf32>
    %278 = arith.mulf %277, %272 : vector<8x64xf32>
    %279 = arith.addf %272, %278 : vector<8x64xf32>
    %cst_103 = arith.constant 0.797884583 : f32
    %280 = vector.broadcast %cst_103 : f32 to vector<8x64xf32>
    %281 = arith.mulf %280, %279 : vector<8x64xf32>
    %282 = math.tanh %281 : vector<8x64xf32>
    %cst_104 = arith.constant 1.000000e+00 : f32
    %283 = vector.broadcast %cst_104 : f32 to vector<8x64xf32>
    %284 = arith.addf %283, %282 : vector<8x64xf32>
    %285 = arith.mulf %274, %284 : vector<8x64xf32>
    %286 = arith.index_cast %c1_i32 : i32 to index
    %c0_105 = arith.constant 0 : index
    %c0_106 = arith.constant 0 : index
    %287 = vector.load %arg11[%286, %c0_105, %c0_106] : memref<2x64x32xf32, #tpu.memory_space<vmem>>, vector<1x64x32xf32>
    %288 = vector.shape_cast %287 : vector<1x64x32xf32> to vector<64x32xf32>
    %cst_107 = arith.constant dense<0.000000e+00> : vector<8x32xf32>
    %289 = tpu.matmul %285, %288, %cst_107 {dimension_numbers = #tpu.dot_dimension_numbers<[1], [0], [0], [1], [0, 0, 1, 1], [], []>} : vector<8x64xf32>, vector<64x32xf32>, vector<8x32xf32> -> vector<8x32xf32>
    %290 = arith.index_cast %c1_i32 : i32 to index
    %c0_108 = arith.constant 0 : index
    %c0_109 = arith.constant 0 : index
    %291 = vector.load %arg12[%290, %c0_108, %c0_109] : memref<2x1x32xf32, #tpu.memory_space<vmem>>, vector<1x1x32xf32>
    %292 = vector.shape_cast %291 : vector<1x1x32xf32> to vector<1x32xf32>
    %293 = vector.broadcast %292 : vector<1x32xf32> to vector<8x32xf32>
    %294 = arith.addf %289, %293 : vector<8x32xf32>
    %295 = arith.addf %294, %263 : vector<8x32xf32>
    %296 = arith.index_cast %c1_i32 : i32 to index
    %c0_110 = arith.constant 0 : index
    %c0_111 = arith.constant 0 : index
    %297 = vector.load %arg13[%296, %c0_110, %c0_111] : memref<2x1x32xf32, #tpu.memory_space<vmem>>, vector<1x1x32xf32>
    %298 = vector.shape_cast %297 : vector<1x1x32xf32> to vector<1x32xf32>
    %299 = arith.index_cast %c1_i32 : i32 to index
    %c0_112 = arith.constant 0 : index
    %c0_113 = arith.constant 0 : index
    %300 = vector.load %arg14[%299, %c0_112, %c0_113] : memref<2x1x32xf32, #tpu.memory_space<vmem>>, vector<1x1x32xf32>
    %301 = vector.shape_cast %300 : vector<1x1x32xf32> to vector<1x32xf32>
    %cst_114 = arith.constant dense<0.000000e+00> : vector<8xf32>
    %302 = vector.multi_reduction <add>, %295, %cst_114 [1] : vector<8x32xf32> to vector<8xf32>
    %303 = vector.shape_cast %302 : vector<8xf32> to vector<8x1xf32>
    %cst_115 = arith.constant 3.200000e+01 : f32
    %304 = vector.broadcast %cst_115 : f32 to vector<8x1xf32>
    %305 = arith.divf %303, %304 : vector<8x1xf32>
    %306 = vector.broadcast %305 : vector<8x1xf32> to vector<8x32xf32>
    %307 = arith.subf %295, %306 : vector<8x32xf32>
    %308 = arith.mulf %307, %307 : vector<8x32xf32>
    %cst_116 = arith.constant dense<0.000000e+00> : vector<8xf32>
    %309 = vector.multi_reduction <add>, %308, %cst_116 [1] : vector<8x32xf32> to vector<8xf32>
    %310 = vector.shape_cast %309 : vector<8xf32> to vector<8x1xf32>
    %cst_117 = arith.constant 3.200000e+01 : f32
    %311 = vector.broadcast %cst_117 : f32 to vector<8x1xf32>
    %312 = arith.divf %310, %311 : vector<8x1xf32>
    %313 = vector.broadcast %305 : vector<8x1xf32> to vector<8x32xf32>
    %314 = arith.subf %295, %313 : vector<8x32xf32>
    %cst_118 = arith.constant 9.99999996E-13 : f32
    %315 = vector.broadcast %cst_118 : f32 to vector<8x1xf32>
    %316 = arith.addf %312, %315 : vector<8x1xf32>
    %317 = math.rsqrt %316 : vector<8x1xf32>
    %318 = vector.broadcast %317 : vector<8x1xf32> to vector<8x32xf32>
    %319 = arith.mulf %314, %318 : vector<8x32xf32>
    %320 = vector.broadcast %298 : vector<1x32xf32> to vector<8x32xf32>
    %321 = arith.mulf %319, %320 : vector<8x32xf32>
    %322 = vector.broadcast %301 : vector<1x32xf32> to vector<8x32xf32>
    %323 = arith.addf %321, %322 : vector<8x32xf32>
    %c2_i32 = arith.constant 2 : i32
    %c0_119 = arith.constant 0 : index
    %c0_120 = arith.constant 0 : index
    %324 = vector.load %arg17[%c0_119, %c0_120] : memref<32x32xf32, #tpu.memory_space<vmem>>, vector<32x32xf32>
    %cst_121 = arith.constant dense<0.000000e+00> : vector<8x32xf32>
    %325 = tpu.matmul %323, %324, %cst_121 {dimension_numbers = #tpu.dot_dimension_numbers<[1], [0], [0], [1], [0, 0, 1, 1], [], []>} : vector<8x32xf32>, vector<32x32xf32>, vector<8x32xf32> -> vector<8x32xf32>
    %c0_122 = arith.constant 0 : index
    %c0_123 = arith.constant 0 : index
    %326 = vector.load %arg18[%c0_122, %c0_123] : memref<1x32xf32, #tpu.memory_space<vmem>>, vector<1x32xf32>
    %327 = vector.broadcast %326 : vector<1x32xf32> to vector<8x32xf32>
    %328 = arith.addf %325, %327 : vector<8x32xf32>
    %cst_124 = arith.constant 5.000000e-01 : f32
    %329 = vector.broadcast %cst_124 : f32 to vector<8x32xf32>
    %330 = arith.mulf %329, %328 : vector<8x32xf32>
    %cst_125 = arith.constant 4.471500e-02 : f32
    %331 = vector.broadcast %cst_125 : f32 to vector<8x32xf32>
    %332 = arith.mulf %331, %328 : vector<8x32xf32>
    %333 = arith.mulf %332, %328 : vector<8x32xf32>
    %334 = arith.mulf %333, %328 : vector<8x32xf32>
    %335 = arith.addf %328, %334 : vector<8x32xf32>
    %cst_126 = arith.constant 0.797884583 : f32
    %336 = vector.broadcast %cst_126 : f32 to vector<8x32xf32>
    %337 = arith.mulf %336, %335 : vector<8x32xf32>
    %338 = math.tanh %337 : vector<8x32xf32>
    %cst_127 = arith.constant 1.000000e+00 : f32
    %339 = vector.broadcast %cst_127 : f32 to vector<8x32xf32>
    %340 = arith.addf %339, %338 : vector<8x32xf32>
    %341 = arith.mulf %330, %340 : vector<8x32xf32>
    %c0_128 = arith.constant 0 : index
    %c0_129 = arith.constant 0 : index
    %342 = vector.load %arg19[%c0_128, %c0_129] : memref<1x32xf32, #tpu.memory_space<vmem>>, vector<1x32xf32>
    %c0_130 = arith.constant 0 : index
    %c0_131 = arith.constant 0 : index
    %343 = vector.load %arg20[%c0_130, %c0_131] : memref<1x32xf32, #tpu.memory_space<vmem>>, vector<1x32xf32>
    %cst_132 = arith.constant dense<0.000000e+00> : vector<8xf32>
    %344 = vector.multi_reduction <add>, %341, %cst_132 [1] : vector<8x32xf32> to vector<8xf32>
    %345 = vector.shape_cast %344 : vector<8xf32> to vector<8x1xf32>
    %cst_133 = arith.constant 3.200000e+01 : f32
    %346 = vector.broadcast %cst_133 : f32 to vector<8x1xf32>
    %347 = arith.divf %345, %346 : vector<8x1xf32>
    %348 = vector.broadcast %347 : vector<8x1xf32> to vector<8x32xf32>
    %349 = arith.subf %341, %348 : vector<8x32xf32>
    %350 = arith.mulf %349, %349 : vector<8x32xf32>
    %cst_134 = arith.constant dense<0.000000e+00> : vector<8xf32>
    %351 = vector.multi_reduction <add>, %350, %cst_134 [1] : vector<8x32xf32> to vector<8xf32>
    %352 = vector.shape_cast %351 : vector<8xf32> to vector<8x1xf32>
    %cst_135 = arith.constant 3.200000e+01 : f32
    %353 = vector.broadcast %cst_135 : f32 to vector<8x1xf32>
    %354 = arith.divf %352, %353 : vector<8x1xf32>
    %355 = vector.broadcast %347 : vector<8x1xf32> to vector<8x32xf32>
    %356 = arith.subf %341, %355 : vector<8x32xf32>
    %cst_136 = arith.constant 9.99999996E-13 : f32
    %357 = vector.broadcast %cst_136 : f32 to vector<8x1xf32>
    %358 = arith.addf %354, %357 : vector<8x1xf32>
    %359 = math.rsqrt %358 : vector<8x1xf32>
    %360 = vector.broadcast %359 : vector<8x1xf32> to vector<8x32xf32>
    %361 = arith.mulf %356, %360 : vector<8x32xf32>
    %362 = vector.broadcast %342 : vector<1x32xf32> to vector<8x32xf32>
    %363 = arith.mulf %361, %362 : vector<8x32xf32>
    %364 = vector.broadcast %343 : vector<1x32xf32> to vector<8x32xf32>
    %365 = arith.addf %363, %364 : vector<8x32xf32>
    %c0_137 = arith.constant 0 : index
    %c0_138 = arith.constant 0 : index
    %366 = vector.load %arg21[%c0_137, %c0_138] : memref<32x128xf32, #tpu.memory_space<vmem>>, vector<32x128xf32>
    %cst_139 = arith.constant dense<0.000000e+00> : vector<8x128xf32>
    %367 = tpu.matmul %365, %366, %cst_139 {dimension_numbers = #tpu.dot_dimension_numbers<[1], [0], [0], [1], [0, 0, 1, 1], [], []>} : vector<8x32xf32>, vector<32x128xf32>, vector<8x128xf32> -> vector<8x128xf32>
    %c0_140 = arith.constant 0 : index
    %c0_141 = arith.constant 0 : index
    %368 = vector.load %arg22[%c0_140, %c0_141] : memref<1x128xf32, #tpu.memory_space<vmem>>, vector<1x128xf32>
    %369 = vector.broadcast %368 : vector<1x128xf32> to vector<8x128xf32>
    %370 = arith.addf %367, %369 : vector<8x128xf32>
    %c0_142 = arith.constant 0 : index
    %c0_143 = arith.constant 0 : index
    %c0_144 = arith.constant 0 : index
    %371 = vector.load %arg23[%c0_142, %c0_143, %c0_144] : memref<1x8x128xf32, #tpu.memory_space<vmem>>, vector<1x8x128xf32>
    %372 = vector.shape_cast %371 : vector<1x8x128xf32> to vector<8x128xf32>
    %373 = vector.shape_cast %370 : vector<8x128xf32> to vector<1x8x128xf32>
    tpu.vector_store %arg23[%c0_142, %c0_143, %c0_144], %373 {strides = array<i32>} : memref<1x8x128xf32, #tpu.memory_space<vmem>>, vector<1x8x128xf32>,
    return
  }
  func.func @transform_0(%arg0: i32) -> (i32, i32, i32) {
    %c0_i32 = arith.constant 0 : i32
    %c0_i32_0 = arith.constant 0 : i32
    %c0_i32_1 = arith.constant 0 : i32
    return %arg0, %c0_i32, %c0_i32_0 : i32, i32, i32
  }
  func.func @transform_1(%arg0: i32) -> (i32, i32, i32) {
    %c0_i32 = arith.constant 0 : i32
    %c0_i32_0 = arith.constant 0 : i32
    %c0_i32_1 = arith.constant 0 : i32
    return %arg0, %c0_i32, %c0_i32_0 : i32, i32, i32
  }
  func.func @transform_2(%arg0: i32) -> (i32, i32, i32) {
    %c0_i32 = arith.constant 0 : i32
    %c0_i32_0 = arith.constant 0 : i32
    %c0_i32_1 = arith.constant 0 : i32
    %c0_i32_2 = arith.constant 0 : i32
    return %c0_i32, %c0_i32_0, %c0_i32_1 : i32, i32, i32
  }
  func.func @transform_3(%arg0: i32) -> (i32, i32, i32) {
    %c0_i32 = arith.constant 0 : i32
    %c0_i32_0 = arith.constant 0 : i32
    %c0_i32_1 = arith.constant 0 : i32
    %c0_i32_2 = arith.constant 0 : i32
    return %c0_i32, %c0_i32_0, %c0_i32_1 : i32, i32, i32
  }
  func.func @transform_4(%arg0: i32) -> (i32, i32, i32) {
    %c0_i32 = arith.constant 0 : i32
    %c0_i32_0 = arith.constant 0 : i32
    %c0_i32_1 = arith.constant 0 : i32
    %c0_i32_2 = arith.constant 0 : i32
    return %c0_i32, %c0_i32_0, %c0_i32_1 : i32, i32, i32
  }
  func.func @transform_5(%arg0: i32) -> (i32, i32, i32) {
    %c0_i32 = arith.constant 0 : i32
    %c0_i32_0 = arith.constant 0 : i32
    %c0_i32_1 = arith.constant 0 : i32
    %c0_i32_2 = arith.constant 0 : i32
    return %c0_i32, %c0_i32_0, %c0_i32_1 : i32, i32, i32
  }
  func.func @transform_6(%arg0: i32) -> (i32, i32, i32) {
    %c0_i32 = arith.constant 0 : i32
    %c0_i32_0 = arith.constant 0 : i32
    %c0_i32_1 = arith.constant 0 : i32
    %c0_i32_2 = arith.constant 0 : i32
    return %c0_i32, %c0_i32_0, %c0_i32_1 : i32, i32, i32
  }
  func.func @transform_7(%arg0: i32) -> (i32, i32, i32) {
    %c0_i32 = arith.constant 0 : i32
    %c0_i32_0 = arith.constant 0 : i32
    %c0_i32_1 = arith.constant 0 : i32
    %c0_i32_2 = arith.constant 0 : i32
    return %c0_i32, %c0_i32_0, %c0_i32_1 : i32, i32, i32
  }
  func.func @transform_8(%arg0: i32) -> (i32, i32, i32) {
    %c0_i32 = arith.constant 0 : i32
    %c0_i32_0 = arith.constant 0 : i32
    %c0_i32_1 = arith.constant 0 : i32
    %c0_i32_2 = arith.constant 0 : i32
    return %c0_i32, %c0_i32_0, %c0_i32_1 : i32, i32, i32
  }
  func.func @transform_9(%arg0: i32) -> (i32, i32, i32) {
    %c0_i32 = arith.constant 0 : i32
    %c0_i32_0 = arith.constant 0 : i32
    %c0_i32_1 = arith.constant 0 : i32
    %c0_i32_2 = arith.constant 0 : i32
    return %c0_i32, %c0_i32_0, %c0_i32_1 : i32, i32, i32
  }
  func.func @transform_10(%arg0: i32) -> (i32, i32, i32) {
    %c0_i32 = arith.constant 0 : i32
    %c0_i32_0 = arith.constant 0 : i32
    %c0_i32_1 = arith.constant 0 : i32
    %c0_i32_2 = arith.constant 0 : i32
    return %c0_i32, %c0_i32_0, %c0_i32_1 : i32, i32, i32
  }
  func.func @transform_11(%arg0: i32) -> (i32, i32, i32) {
    %c0_i32 = arith.constant 0 : i32
    %c0_i32_0 = arith.constant 0 : i32
    %c0_i32_1 = arith.constant 0 : i32
    %c0_i32_2 = arith.constant 0 : i32
    return %c0_i32, %c0_i32_0, %c0_i32_1 : i32, i32, i32
  }
  func.func @transform_12(%arg0: i32) -> (i32, i32, i32) {
    %c0_i32 = arith.constant 0 : i32
    %c0_i32_0 = arith.constant 0 : i32
    %c0_i32_1 = arith.constant 0 : i32
    %c0_i32_2 = arith.constant 0 : i32
    return %c0_i32, %c0_i32_0, %c0_i32_1 : i32, i32, i32
  }
  func.func @transform_13(%arg0: i32) -> (i32, i32, i32) {
    %c0_i32 = arith.constant 0 : i32
    %c0_i32_0 = arith.constant 0 : i32
    %c0_i32_1 = arith.constant 0 : i32
    %c0_i32_2 = arith.constant 0 : i32
    return %c0_i32, %c0_i32_0, %c0_i32_1 : i32, i32, i32
  }
  func.func @transform_14(%arg0: i32) -> (i32, i32) {
    %c0_i32 = arith.constant 0 : i32
    %c0_i32_0 = arith.constant 0 : i32
    %c0_i32_1 = arith.constant 0 : i32
    return %c0_i32, %c0_i32_0 : i32, i32
  }
  func.func @transform_15(%arg0: i32) -> (i32, i32) {
    %c0_i32 = arith.constant 0 : i32
    %c0_i32_0 = arith.constant 0 : i32
    %c0_i32_1 = arith.constant 0 : i32
    return %c0_i32, %c0_i32_0 : i32, i32
  }
  func.func @transform_16(%arg0: i32) -> (i32, i32) {
    %c0_i32 = arith.constant 0 : i32
    %c0_i32_0 = arith.constant 0 : i32
    %c0_i32_1 = arith.constant 0 : i32
    return %c0_i32, %c0_i32_0 : i32, i32
  }
  func.func @transform_17(%arg0: i32) -> (i32, i32) {
    %c0_i32 = arith.constant 0 : i32
    %c0_i32_0 = arith.constant 0 : i32
    %c0_i32_1 = arith.constant 0 : i32
    return %c0_i32, %c0_i32_0 : i32, i32
  }
  func.func @transform_18(%arg0: i32) -> (i32, i32) {
    %c0_i32 = arith.constant 0 : i32
    %c0_i32_0 = arith.constant 0 : i32
    %c0_i32_1 = arith.constant 0 : i32
    return %c0_i32, %c0_i32_0 : i32, i32
  }
  func.func @transform_19(%arg0: i32) -> (i32, i32) {
    %c0_i32 = arith.constant 0 : i32
    %c0_i32_0 = arith.constant 0 : i32
    %c0_i32_1 = arith.constant 0 : i32
    return %c0_i32, %c0_i32_0 : i32, i32
  }
  func.func @transform_20(%arg0: i32) -> (i32, i32) {
    %c0_i32 = arith.constant 0 : i32
    %c0_i32_0 = arith.constant 0 : i32
    %c0_i32_1 = arith.constant 0 : i32
    return %c0_i32, %c0_i32_0 : i32, i32
  }
  func.func @transform_21(%arg0: i32) -> (i32, i32) {
    %c0_i32 = arith.constant 0 : i32
    %c0_i32_0 = arith.constant 0 : i32
    %c0_i32_1 = arith.constant 0 : i32
    return %c0_i32, %c0_i32_0 : i32, i32
  }
  func.func @transform_22(%arg0: i32) -> (i32, i32, i32) {
    %c0_i32 = arith.constant 0 : i32
    %c0_i32_0 = arith.constant 0 : i32
    %c0_i32_1 = arith.constant 0 : i32
    return %arg0, %c0_i32, %c0_i32_0 : i32, i32, i32
  }
}

</mosaic_0001>

<llo_original>
// kernel: bert_mlm_forward.1
$region0: #{bert_mlm_forward.1}
  #allocation0 [shape = 'u32[]', space=smem, size = 0x4, offset = 0x4, fixed_abs, tag = 'smem constant byte address 0x4 - core index']
  #allocation1 [shape = 'u32[144,128]{1,0:T(1,128)}', space=vmem, size = 0x12000, scoped, tag = 'internal scratch']
  %s0 = inlined_call_operand.vmem [shape: f32[2,8,32], index: 0, kind: input, shape index: {}]
  %s1 = inlined_call_operand.vmem [shape: f32[2,1,8], index: 1, kind: input, shape index: {}]
  %s2 = inlined_call_operand.vmem [shape: f32[2,32,96], index: 2, kind: input, shape index: {}]
  %s3 = inlined_call_operand.vmem [shape: f32[2,1,96], index: 3, kind: input, shape index: {}]
  %s4 = inlined_call_operand.vmem [shape: f32[2,32,32], index: 4, kind: input, shape index: {}]
  %s5 = inlined_call_operand.vmem [shape: f32[2,1,32], index: 5, kind: input, shape index: {}]
  %s6 = inlined_call_operand.vmem [shape: f32[2,1,32], index: 6, kind: input, shape index: {}]
  %s7 = inlined_call_operand.vmem [shape: f32[2,1,32], index: 7, kind: input, shape index: {}]
  %s8 = inlined_call_operand.vmem [shape: f32[2,32,64], index: 8, kind: input, shape index: {}]
  %s9 = inlined_call_operand.vmem [shape: f32[2,1,64], index: 9, kind: input, shape index: {}]
  %s10 = inlined_call_operand.vmem [shape: f32[2,64,32], index: 10, kind: input, shape index: {}]
  %s11 = inlined_call_operand.vmem [shape: f32[2,1,32], index: 11, kind: input, shape index: {}]
  %s12 = inlined_call_operand.vmem [shape: f32[2,1,32], index: 12, kind: input, shape index: {}]
  %s13 = inlined_call_operand.vmem [shape: f32[2,1,32], index: 13, kind: input, shape index: {}]
  %s14 = inlined_call_operand.vmem [shape: f32[1,32], index: 14, kind: input, shape index: {}]
  %s15 = inlined_call_operand.vmem [shape: f32[1,32], index: 15, kind: input, shape index: {}]
  %s16 = inlined_call_operand.vmem [shape: f32[32,32], index: 16, kind: input, shape index: {}]
  %s17 = inlined_call_operand.vmem [shape: f32[1,32], index: 17, kind: input, shape index: {}]
  %s18 = inlined_call_operand.vmem [shape: f32[1,32], index: 18, kind: input, shape index: {}]
  %s19 = inlined_call_operand.vmem [shape: f32[1,32], index: 19, kind: input, shape index: {}]
  %s20 = inlined_call_operand.vmem [shape: f32[32,128], index: 20, kind: input, shape index: {}]
  %s21 = inlined_call_operand.vmem [shape: f32[1,128], index: 21, kind: input, shape index: {}]
  %s22 = inlined_call_operand.hbm [shape: f32[2,8,128], index: 22, kind: output, shape index: {}]
  %s23 = sld [smem:[#allocation0]]
  $region121: #{bert_mlm_forward.1} parent=0
    _
  %s25 = ssub.s32 1, %s23
  %s26 = scalar_select 0, %s25, %s23
  $region1: #{bert_mlm_forward.1} parent=0
    #allocation2 [shape = 'u8[8192]{0}', space=vmem, size = 0x2000, scoped, tag = 'output window, operand 0']
    #allocation3 [shape = 's32[2]{0}', space=sflag, size = 0x8, scoped, tag = 'scoped memory for bert_mlm_forward.1']
    %27 = vsyncpa [#allocation3], 0
    %s28 = scalar_lea.sflag [#allocation3], 1
    %29 = vsyncpa %s28, 0
    loop: start=0, step=1, limit=4
    $region2: #{bert_mlm_forward.1} parent=1 // loop_pre_header
      _
    $region3: #{bert_mlm_forward.1} parent=1 // loop_header
      %s31 = sphi 0, %s35
      %p32 = scmp.ge.s32.totalorder %s31, 4
      %s41 = sphi 0, %s43
      %s44 = sphi 0, %s41
      %s45 = sphi 0, %s44
      %s61 = sphi 0, %s45
      %s67 = sphi 0, %s69
      %s70 = sphi 0, %s67
      %s71 = sphi 0, %s70
      %s87 = sphi 0, %s71
      %s91 = sphi 0, %s91
      %s93 = sphi 0, %s91
      %s94 = sphi 0, %s93
      %s108 = sphi 0, %s94
      %s112 = sphi 0, %s112
      %s114 = sphi 0, %s112
      %s115 = sphi 0, %s114
      %s129 = sphi 0, %s115
      %s133 = sphi 0, %s133
      %s135 = sphi 0, %s133
      %s136 = sphi 0, %s135
      %s150 = sphi 0, %s136
      %s154 = sphi 0, %s154
      %s156 = sphi 0, %s154
      %s157 = sphi 0, %s156
      %s171 = sphi 0, %s157
      %s175 = sphi 0, %s175
      %s177 = sphi 0, %s175
      %s178 = sphi 0, %s177
      %s192 = sphi 0, %s178
      %s196 = sphi 0, %s196
      %s198 = sphi 0, %s196
      %s199 = sphi 0, %s198
      %s213 = sphi 0, %s199
      %s217 = sphi 0, %s217
      %s219 = sphi 0, %s217
      %s220 = sphi 0, %s219
      %s234 = sphi 0, %s220
      %s238 = sphi 0, %s238
      %s240 = sphi 0, %s238
      %s241 = sphi 0, %s240
      %s255 = sphi 0, %s241
      %s259 = sphi 0, %s259
      %s261 = sphi 0, %s259
      %s262 = sphi 0, %s261
      %s276 = sphi 0, %s262
      %s280 = sphi 0, %s280
      %s282 = sphi 0, %s280
      %s283 = sphi 0, %s282
      %s297 = sphi 0, %s283
      %s301 = sphi 0, %s301
      %s303 = sphi 0, %s301
      %s304 = sphi 0, %s303
      %s318 = sphi 0, %s304
      %s322 = sphi 0, %s322
      %s324 = sphi 0, %s322
      %s325 = sphi 0, %s324
      %s339 = sphi 0, %s325
      %s343 = sphi 0, %s343
      %s345 = sphi 0, %s343
      %s346 = sphi 0, %s345
      %s360 = sphi 0, %s346
      %s364 = sphi 0, %s364
      %s366 = sphi 0, %s364
      %s367 = sphi 0, %s366
      %s381 = sphi 0, %s367
      %s385 = sphi 0, %s385
      %s387 = sphi 0, %s385
      %s388 = sphi 0, %s387
      %s402 = sphi 0, %s388
      %s406 = sphi 0, %s406
      %s408 = sphi 0, %s406
      %s409 = sphi 0, %s408
      %s423 = sphi 0, %s409
      %s427 = sphi 0, %s427
      %s429 = sphi 0, %s427
      %s430 = sphi 0, %s429
      %s444 = sphi 0, %s430
      %s448 = sphi 0, %s448
      %s450 = sphi 0, %s448
      %s451 = sphi 0, %s450
      %s465 = sphi 0, %s451
      %s469 = sphi 0, %s469
      %s471 = sphi 0, %s469
      %s472 = sphi 0, %s471
      %s486 = sphi 0, %s472
      %s490 = sphi 0, %s490
      %s492 = sphi 0, %s490
      %s493 = sphi 0, %s492
      %s507 = sphi 0, %s493
      %s513 = sphi 0, %s515
      %s516 = sphi 0, %s513
      %s517 = sphi 0, %s516
      %s533 = sphi 0, %s517
    $region4: #{bert_mlm_forward.1} parent=1 // loop_header_branch
      %34 = sbr.rel (%p32) target = $region8
    $region5: #{bert_mlm_forward.1} parent=1 // loop_body
      %s36 = ssub.s32 %s31, 1
      %s37 = ssub.s32 %s31, 2
      %s38 = sadd.s32 %s31, 1
      %s39 = ssub.s32 %s31, %s38
      %p40 = scmp.eq.s32.totalorder %s39, 0
      %s42 = sadd.s32 %s41, 1
      %s43 = scalar_select %p40, %s41, %s42
      %p46 = pneg %p40
      %p47 = scmp.eq.s32.totalorder %s31, 1
      %p48 = por %p46, %p47
      %p49 = scmp.ne.s32.totalorder %s41, %s44
      %p50 = scmp.eq.s32.totalorder %s31, 0
      %p51 = por %p49, %p50
      %p52 = scmp.ne.s32.totalorder %s41, %s44
      %p53 = scmp.eq.s32.totalorder %s36, 1
      %p54 = por %p52, %p53
      %p55 = scmp.ne.s32.totalorder %s44, %s45
      %p56 = scmp.eq.s32.totalorder %s36, 0
      %p57 = por %p55, %p56
      %p58 = scmp.ne.s32.totalorder %s44, %s45
      %p59 = scmp.eq.s32.totalorder %s37, 1
      %p60 = por %p58, %p59
      %p62 = scmp.ne.s32.totalorder %s45, %s61
      %p63 = scmp.eq.s32.totalorder %s37, 0
      %p64 = por %p62, %p63
      %s65 = ssub.s32 %s31, %s38
      %p66 = scmp.eq.s32.totalorder %s65, 0
      %s68 = sadd.s32 %s67, 1
      %s69 = scalar_select %p66, %s67, %s68
      %p72 = pneg %p66
      %p73 = scmp.eq.s32.totalorder %s31, 1
      %p74 = por %p72, %p73
      %p75 = scmp.ne.s32.totalorder %s67, %s70
      %p76 = scmp.eq.s32.totalorder %s31, 0
      %p77 = por %p75, %p76
      %p78 = scmp.ne.s32.totalorder %s67, %s70
      %p79 = scmp.eq.s32.totalorder %s36, 1
      %p80 = por %p78, %p79
      %p81 = scmp.ne.s32.totalorder %s70, %s71
      %p82 = scmp.eq.s32.totalorder %s36, 0
      %p83 = por %p81, %p82
      %p84 = scmp.ne.s32.totalorder %s70, %s71
      %p85 = scmp.eq.s32.totalorder %s37, 1
      %p86 = por %p84, %p85
      %p88 = scmp.ne.s32.totalorder %s71, %s87
      %p89 = scmp.eq.s32.totalorder %s37, 0
      %p90 = por %p88, %p89
      %s92 = sadd.s32 %s91, 1
      %p95 = scmp.eq.s32.totalorder %s31, 1
      %p96 = scmp.ne.s32.totalorder %s91, %s93
      %p97 = scmp.eq.s32.totalorder %s31, 0
      %p98 = por %p96, %p97
      %p99 = scmp.ne.s32.totalorder %s91, %s93
      %p100 = scmp.eq.s32.totalorder %s36, 1
      %p101 = por %p99, %p100
      %p102 = scmp.ne.s32.totalorder %s93, %s94
      %p103 = scmp.eq.s32.totalorder %s36, 0
      %p104 = por %p102, %p103
      %p105 = scmp.ne.s32.totalorder %s93, %s94
      %p106 = scmp.eq.s32.totalorder %s37, 1
      %p107 = por %p105, %p106
      %p109 = scmp.ne.s32.totalorder %s94, %s108
      %p110 = scmp.eq.s32.totalorder %s37, 0
      %p111 = por %p109, %p110
      %s113 = sadd.s32 %s112, 1
      %p116 = scmp.eq.s32.totalorder %s31, 1
      %p117 = scmp.ne.s32.totalorder %s112, %s114
      %p118 = scmp.eq.s32.totalorder %s31, 0
      %p119 = por %p117, %p118
      %p120 = scmp.ne.s32.totalorder %s112, %s114
      %p121 = scmp.eq.s32.totalorder %s36, 1
      %p122 = por %p120, %p121
      %p123 = scmp.ne.s32.totalorder %s114, %s115
      %p124 = scmp.eq.s32.totalorder %s36, 0
      %p125 = por %p123, %p124
      %p126 = scmp.ne.s32.totalorder %s114, %s115
      %p127 = scmp.eq.s32.totalorder %s37, 1
      %p128 = por %p126, %p127
      %p130 = scmp.ne.s32.totalorder %s115, %s129
      %p131 = scmp.eq.s32.totalorder %s37, 0
      %p132 = por %p130, %p131
      %s134 = sadd.s32 %s133, 1
      %p137 = scmp.eq.s32.totalorder %s31, 1
      %p138 = scmp.ne.s32.totalorder %s133, %s135
      %p139 = scmp.eq.s32.totalorder %s31, 0
      %p140 = por %p138, %p139
      %p141 = scmp.ne.s32.totalorder %s133, %s135
      %p142 = scmp.eq.s32.totalorder %s36, 1
      %p143 = por %p141, %p142
      %p144 = scmp.ne.s32.totalorder %s135, %s136
      %p145 = scmp.eq.s32.totalorder %s36, 0
      %p146 = por %p144, %p145
      %p147 = scmp.ne.s32.totalorder %s135, %s136
      %p148 = scmp.eq.s32.totalorder %s37, 1
      %p149 = por %p147, %p148
      %p151 = scmp.ne.s32.totalorder %s136, %s150
      %p152 = scmp.eq.s32.totalorder %s37, 0
      %p153 = por %p151, %p152
      %s155 = sadd.s32 %s154, 1
      %p158 = scmp.eq.s32.totalorder %s31, 1
      %p159 = scmp.ne.s32.totalorder %s154, %s156
      %p160 = scmp.eq.s32.totalorder %s31, 0
      %p161 = por %p159, %p160
      %p162 = scmp.ne.s32.totalorder %s154, %s156
      %p163 = scmp.eq.s32.totalorder %s36, 1
      %p164 = por %p162, %p163
      %p165 = scmp.ne.s32.totalorder %s156, %s157
      %p166 = scmp.eq.s32.totalorder %s36, 0
      %p167 = por %p165, %p166
      %p168 = scmp.ne.s32.totalorder %s156, %s157
      %p169 = scmp.eq.s32.totalorder %s37, 1
      %p170 = por %p168, %p169
      %p172 = scmp.ne.s32.totalorder %s157, %s171
      %p173 = scmp.eq.s32.totalorder %s37, 0
      %p174 = por %p172, %p173
      %s176 = sadd.s32 %s175, 1
      %p179 = scmp.eq.s32.totalorder %s31, 1
      %p180 = scmp.ne.s32.totalorder %s175, %s177
      %p181 = scmp.eq.s32.totalorder %s31, 0
      %p182 = por %p180, %p181
      %p183 = scmp.ne.s32.totalorder %s175, %s177
      %p184 = scmp.eq.s32.totalorder %s36, 1
      %p185 = por %p183, %p184
      %p186 = scmp.ne.s32.totalorder %s177, %s178
      %p187 = scmp.eq.s32.totalorder %s36, 0
      %p188 = por %p186, %p187
      %p189 = scmp.ne.s32.totalorder %s177, %s178
      %p190 = scmp.eq.s32.totalorder %s37, 1
      %p191 = por %p189, %p190
      %p193 = scmp.ne.s32.totalorder %s178, %s192
      %p194 = scmp.eq.s32.totalorder %s37, 0
      %p195 = por %p193, %p194
      %s197 = sadd.s32 %s196, 1
      %p200 = scmp.eq.s32.totalorder %s31, 1
      %p201 = scmp.ne.s32.totalorder %s196, %s198
      %p202 = scmp.eq.s32.totalorder %s31, 0
      %p203 = por %p201, %p202
      %p204 = scmp.ne.s32.totalorder %s196, %s198
      %p205 = scmp.eq.s32.totalorder %s36, 1
      %p206 = por %p204, %p205
      %p207 = scmp.ne.s32.totalorder %s198, %s199
      %p208 = scmp.eq.s32.totalorder %s36, 0
      %p209 = por %p207, %p208
      %p210 = scmp.ne.s32.totalorder %s198, %s199
      %p211 = scmp.eq.s32.totalorder %s37, 1
      %p212 = por %p210, %p211
      %p214 = scmp.ne.s32.totalorder %s199, %s213
      %p215 = scmp.eq.s32.totalorder %s37, 0
      %p216 = por %p214, %p215
      %s218 = sadd.s32 %s217, 1
      %p221 = scmp.eq.s32.totalorder %s31, 1
      %p222 = scmp.ne.s32.totalorder %s217, %s219
      %p223 = scmp.eq.s32.totalorder %s31, 0
      %p224 = por %p222, %p223
      %p225 = scmp.ne.s32.totalorder %s217, %s219
      %p226 = scmp.eq.s32.totalorder %s36, 1
      %p227 = por %p225, %p226
      %p228 = scmp.ne.s32.totalorder %s219, %s220
      %p229 = scmp.eq.s32.totalorder %s36, 0
      %p230 = por %p228, %p229
      %p231 = scmp.ne.s32.totalorder %s219, %s220
      %p232 = scmp.eq.s32.totalorder %s37, 1
      %p233 = por %p231, %p232
      %p235 = scmp.ne.s32.totalorder %s220, %s234
      %p236 = scmp.eq.s32.totalorder %s37, 0
      %p237 = por %p235, %p236
      %s239 = sadd.s32 %s238, 1
      %p242 = scmp.eq.s32.totalorder %s31, 1
      %p243 = scmp.ne.s32.totalorder %s238, %s240
      %p244 = scmp.eq.s32.totalorder %s31, 0
      %p245 = por %p243, %p244
      %p246 = scmp.ne.s32.totalorder %s238, %s240
      %p247 = scmp.eq.s32.totalorder %s36, 1
      %p248 = por %p246, %p247
      %p249 = scmp.ne.s32.totalorder %s240, %s241
      %p250 = scmp.eq.s32.totalorder %s36, 0
      %p251 = por %p249, %p250
      %p252 = scmp.ne.s32.totalorder %s240, %s241
      %p253 = scmp.eq.s32.totalorder %s37, 1
      %p254 = por %p252, %p253
      %p256 = scmp.ne.s32.totalorder %s241, %s255
      %p257 = scmp.eq.s32.totalorder %s37, 0
      %p258 = por %p256, %p257
      %s260 = sadd.s32 %s259, 1
      %p263 = scmp.eq.s32.totalorder %s31, 1
      %p264 = scmp.ne.s32.totalorder %s259, %s261
      %p265 = scmp.eq.s32.totalorder %s31, 0
      %p266 = por %p264, %p265
      %p267 = scmp.ne.s32.totalorder %s259, %s261
      %p268 = scmp.eq.s32.totalorder %s36, 1
      %p269 = por %p267, %p268
      %p270 = scmp.ne.s32.totalorder %s261, %s262
      %p271 = scmp.eq.s32.totalorder %s36, 0
      %p272 = por %p270, %p271
      %p273 = scmp.ne.s32.totalorder %s261, %s262
      %p274 = scmp.eq.s32.totalorder %s37, 1
      %p275 = por %p273, %p274
      %p277 = scmp.ne.s32.totalorder %s262, %s276
      %p278 = scmp.eq.s32.totalorder %s37, 0
      %p279 = por %p277, %p278
      %s281 = sadd.s32 %s280, 1
      %p284 = scmp.eq.s32.totalorder %s31, 1
      %p285 = scmp.ne.s32.totalorder %s280, %s282
      %p286 = scmp.eq.s32.totalorder %s31, 0
      %p287 = por %p285, %p286
      %p288 = scmp.ne.s32.totalorder %s280, %s282
      %p289 = scmp.eq.s32.totalorder %s36, 1
      %p290 = por %p288, %p289
      %p291 = scmp.ne.s32.totalorder %s282, %s283
      %p292 = scmp.eq.s32.totalorder %s36, 0
      %p293 = por %p291, %p292
      %p294 = scmp.ne.s32.totalorder %s282, %s283
      %p295 = scmp.eq.s32.totalorder %s37, 1
      %p296 = por %p294, %p295
      %p298 = scmp.ne.s32.totalorder %s283, %s297
      %p299 = scmp.eq.s32.totalorder %s37, 0
      %p300 = por %p298, %p299
      %s302 = sadd.s32 %s301, 1
      %p305 = scmp.eq.s32.totalorder %s31, 1
      %p306 = scmp.ne.s32.totalorder %s301, %s303
      %p307 = scmp.eq.s32.totalorder %s31, 0
      %p308 = por %p306, %p307
      %p309 = scmp.ne.s32.totalorder %s301, %s303
      %p310 = scmp.eq.s32.totalorder %s36, 1
      %p311 = por %p309, %p310
      %p312 = scmp.ne.s32.totalorder %s303, %s304
      %p313 = scmp.eq.s32.totalorder %s36, 0
      %p314 = por %p312, %p313
      %p315 = scmp.ne.s32.totalorder %s303, %s304
      %p316 = scmp.eq.s32.totalorder %s37, 1
      %p317 = por %p315, %p316
      %p319 = scmp.ne.s32.totalorder %s304, %s318
      %p320 = scmp.eq.s32.totalorder %s37, 0
      %p321 = por %p319, %p320
      %s323 = sadd.s32 %s322, 1
      %p326 = scmp.eq.s32.totalorder %s31, 1
      %p327 = scmp.ne.s32.totalorder %s322, %s324
      %p328 = scmp.eq.s32.totalorder %s31, 0
      %p329 = por %p327, %p328
      %p330 = scmp.ne.s32.totalorder %s322, %s324
      %p331 = scmp.eq.s32.totalorder %s36, 1
      %p332 = por %p330, %p331
      %p333 = scmp.ne.s32.totalorder %s324, %s325
      %p334 = scmp.eq.s32.totalorder %s36, 0
      %p335 = por %p333, %p334
      %p336 = scmp.ne.s32.totalorder %s324, %s325
      %p337 = scmp.eq.s32.totalorder %s37, 1
      %p338 = por %p336, %p337
      %p340 = scmp.ne.s32.totalorder %s325, %s339
      %p341 = scmp.eq.s32.totalorder %s37, 0
      %p342 = por %p340, %p341
      %s344 = sadd.s32 %s343, 1
      %p347 = scmp.eq.s32.totalorder %s31, 1
      %p348 = scmp.ne.s32.totalorder %s343, %s345
      %p349 = scmp.eq.s32.totalorder %s31, 0
      %p350 = por %p348, %p349
      %p351 = scmp.ne.s32.totalorder %s343, %s345
      %p352 = scmp.eq.s32.totalorder %s36, 1
      %p353 = por %p351, %p352
      %p354 = scmp.ne.s32.totalorder %s345, %s346
      %p355 = scmp.eq.s32.totalorder %s36, 0
      %p356 = por %p354, %p355
      %p357 = scmp.ne.s32.totalorder %s345, %s346
      %p358 = scmp.eq.s32.totalorder %s37, 1
      %p359 = por %p357, %p358
      %p361 = scmp.ne.s32.totalorder %s346, %s360
      %p362 = scmp.eq.s32.totalorder %s37, 0
      %p363 = por %p361, %p362
      %s365 = sadd.s32 %s364, 1
      %p368 = scmp.eq.s32.totalorder %s31, 1
      %p369 = scmp.ne.s32.totalorder %s364, %s366
      %p370 = scmp.eq.s32.totalorder %s31, 0
      %p371 = por %p369, %p370
      %p372 = scmp.ne.s32.totalorder %s364, %s366
      %p373 = scmp.eq.s32.totalorder %s36, 1
      %p374 = por %p372, %p373
      %p375 = scmp.ne.s32.totalorder %s366, %s367
      %p376 = scmp.eq.s32.totalorder %s36, 0
      %p377 = por %p375, %p376
      %p378 = scmp.ne.s32.totalorder %s366, %s367
      %p379 = scmp.eq.s32.totalorder %s37, 1
      %p380 = por %p378, %p379
      %p382 = scmp.ne.s32.totalorder %s367, %s381
      %p383 = scmp.eq.s32.totalorder %s37, 0
      %p384 = por %p382, %p383
      %s386 = sadd.s32 %s385, 1
      %p389 = scmp.eq.s32.totalorder %s31, 1
      %p390 = scmp.ne.s32.totalorder %s385, %s387
      %p391 = scmp.eq.s32.totalorder %s31, 0
      %p392 = por %p390, %p391
      %p393 = scmp.ne.s32.totalorder %s385, %s387
      %p394 = scmp.eq.s32.totalorder %s36, 1
      %p395 = por %p393, %p394
      %p396 = scmp.ne.s32.totalorder %s387, %s388
      %p397 = scmp.eq.s32.totalorder %s36, 0
      %p398 = por %p396, %p397
      %p399 = scmp.ne.s32.totalorder %s387, %s388
      %p400 = scmp.eq.s32.totalorder %s37, 1
      %p401 = por %p399, %p400
      %p403 = scmp.ne.s32.totalorder %s388, %s402
      %p404 = scmp.eq.s32.totalorder %s37, 0
      %p405 = por %p403, %p404
      %s407 = sadd.s32 %s406, 1
      %p410 = scmp.eq.s32.totalorder %s31, 1
      %p411 = scmp.ne.s32.totalorder %s406, %s408
      %p412 = scmp.eq.s32.totalorder %s31, 0
      %p413 = por %p411, %p412
      %p414 = scmp.ne.s32.totalorder %s406, %s408
      %p415 = scmp.eq.s32.totalorder %s36, 1
      %p416 = por %p414, %p415
      %p417 = scmp.ne.s32.totalorder %s408, %s409
      %p418 = scmp.eq.s32.totalorder %s36, 0
      %p419 = por %p417, %p418
      %p420 = scmp.ne.s32.totalorder %s408, %s409
      %p421 = scmp.eq.s32.totalorder %s37, 1
      %p422 = por %p420, %p421
      %p424 = scmp.ne.s32.totalorder %s409, %s423
      %p425 = scmp.eq.s32.totalorder %s37, 0
      %p426 = por %p424, %p425
      %s428 = sadd.s32 %s427, 1
      %p431 = scmp.eq.s32.totalorder %s31, 1
      %p432 = scmp.ne.s32.totalorder %s427, %s429
      %p433 = scmp.eq.s32.totalorder %s31, 0
      %p434 = por %p432, %p433
      %p435 = scmp.ne.s32.totalorder %s427, %s429
      %p436 = scmp.eq.s32.totalorder %s36, 1
      %p437 = por %p435, %p436
      %p438 = scmp.ne.s32.totalorder %s429, %s430
      %p439 = scmp.eq.s32.totalorder %s36, 0
      %p440 = por %p438, %p439
      %p441 = scmp.ne.s32.totalorder %s429, %s430
      %p442 = scmp.eq.s32.totalorder %s37, 1
      %p443 = por %p441, %p442
      %p445 = scmp.ne.s32.totalorder %s430, %s444
      %p446 = scmp.eq.s32.totalorder %s37, 0
      %p447 = por %p445, %p446
      %s449 = sadd.s32 %s448, 1
      %p452 = scmp.eq.s32.totalorder %s31, 1
      %p453 = scmp.ne.s32.totalorder %s448, %s450
      %p454 = scmp.eq.s32.totalorder %s31, 0
      %p455 = por %p453, %p454
      %p456 = scmp.ne.s32.totalorder %s448, %s450
      %p457 = scmp.eq.s32.totalorder %s36, 1
      %p458 = por %p456, %p457
      %p459 = scmp.ne.s32.totalorder %s450, %s451
      %p460 = scmp.eq.s32.totalorder %s36, 0
      %p461 = por %p459, %p460
      %p462 = scmp.ne.s32.totalorder %s450, %s451
      %p463 = scmp.eq.s32.totalorder %s37, 1
      %p464 = por %p462, %p463
      %p466 = scmp.ne.s32.totalorder %s451, %s465
      %p467 = scmp.eq.s32.totalorder %s37, 0
      %p468 = por %p466, %p467
      %s470 = sadd.s32 %s469, 1
      %p473 = scmp.eq.s32.totalorder %s31, 1
      %p474 = scmp.ne.s32.totalorder %s469, %s471
      %p475 = scmp.eq.s32.totalorder %s31, 0
      %p476 = por %p474, %p475
      %p477 = scmp.ne.s32.totalorder %s469, %s471
      %p478 = scmp.eq.s32.totalorder %s36, 1
      %p479 = por %p477, %p478
      %p480 = scmp.ne.s32.totalorder %s471, %s472
      %p481 = scmp.eq.s32.totalorder %s36, 0
      %p482 = por %p480, %p481
      %p483 = scmp.ne.s32.totalorder %s471, %s472
      %p484 = scmp.eq.s32.totalorder %s37, 1
      %p485 = por %p483, %p484
      %p487 = scmp.ne.s32.totalorder %s472, %s486
      %p488 = scmp.eq.s32.totalorder %s37, 0
      %p489 = por %p487, %p488
      %s491 = sadd.s32 %s490, 1
      %p494 = scmp.eq.s32.totalorder %s31, 1
      %p495 = scmp.ne.s32.totalorder %s490, %s492
      %p496 = scmp.eq.s32.totalorder %s31, 0
      %p497 = por %p495, %p496
      %p498 = scmp.ne.s32.totalorder %s490, %s492
      %p499 = scmp.eq.s32.totalorder %s36, 1
      %p500 = por %p498, %p499
      %p501 = scmp.ne.s32.totalorder %s492, %s493
      %p502 = scmp.eq.s32.totalorder %s36, 0
      %p503 = por %p501, %p502
      %p504 = scmp.ne.s32.totalorder %s492, %s493
      %p505 = scmp.eq.s32.totalorder %s37, 1
      %p506 = por %p504, %p505
      %p508 = scmp.ne.s32.totalorder %s493, %s507
      %p509 = scmp.eq.s32.totalorder %s37, 0
      %p510 = por %p508, %p509
      %s511 = ssub.s32 %s31, %s38
      %p512 = scmp.eq.s32.totalorder %s511, 0
      %s514 = sadd.s32 %s513, 1
      %s515 = scalar_select %p512, %s513, %s514
      %p518 = pneg %p512
      %p519 = scmp.eq.s32.totalorder %s31, 1
      %p520 = por %p518, %p519
      %p521 = scmp.ne.s32.totalorder %s513, %s516
      %p522 = scmp.eq.s32.totalorder %s31, 0
      %p523 = por %p521, %p522
      %p524 = scmp.ne.s32.totalorder %s513, %s516
      %p525 = scmp.eq.s32.totalorder %s36, 1
      %p526 = por %p524, %p525
      %p527 = scmp.ne.s32.totalorder %s516, %s517
      %p528 = scmp.eq.s32.totalorder %s36, 0
      %p529 = por %p527, %p528
      %p530 = scmp.ne.s32.totalorder %s516, %s517
      %p531 = scmp.eq.s32.totalorder %s37, 1
      %p532 = por %p530, %p531
      %p534 = scmp.ne.s32.totalorder %s517, %s533
      %p535 = scmp.eq.s32.totalorder %s37, 0
      %p536 = por %p534, %p535
      %p537 = scmp.le.s32.totalorder 1, %s31
      %p538 = scmp.lt.s32.totalorder %s31, 3
      %p539 = pnand %p537, %p538
      %p540 = pneg %p539
      // Predicated region
      $region9: #{bert_mlm_forward.1} parent=5 // pred_check
        _
      $region10: #{bert_mlm_forward.1} parent=5 // pred_check_branch
        %542 = sbr.rel (%p539) target = $region12
      $region11: #{bert_mlm_forward.1} parent=5 // pred_region
        %s543 = ssub.s32 %s31, 1
        // Predicated region
        $region13: #{bert_mlm_forward.1} parent=11 // pred_check
          %p544 = pneg %p104
        $region14: #{bert_mlm_forward.1} parent=11 // pred_check_branch
          %546 = sbr.rel (%p544) target = $region16
        $region15: #{bert_mlm_forward.1} parent=11 // pred_region
          _
        $region16: #{bert_mlm_forward.1} parent=11 // pred_fallthru
          _
        // Predicated region
        $region17: #{bert_mlm_forward.1} parent=11 // pred_check
          %p547 = pneg %p125
        $region18: #{bert_mlm_forward.1} parent=11 // pred_check_branch
          %549 = sbr.rel (%p547) target = $region20
        $region19: #{bert_mlm_forward.1} parent=11 // pred_region
          _
        $region20: #{bert_mlm_forward.1} parent=11 // pred_fallthru
          _
        // Predicated region
        $region21: #{bert_mlm_forward.1} parent=11 // pred_check
          %p550 = pneg %p146
        $region22: #{bert_mlm_forward.1} parent=11 // pred_check_branch
          %552 = sbr.rel (%p550) target = $region24
        $region23: #{bert_mlm_forward.1} parent=11 // pred_region
          _
        $region24: #{bert_mlm_forward.1} parent=11 // pred_fallthru
          _
        // Predicated region
        $region25: #{bert_mlm_forward.1} parent=11 // pred_check
          %p553 = pneg %p167
        $region26: #{bert_mlm_forward.1} parent=11 // pred_check_branch
          %555 = sbr.rel (%p553) target = $region28
        $region27: #{bert_mlm_forward.1} parent=11 // pred_region
          _
        $region28: #{bert_mlm_forward.1} parent=11 // pred_fallthru
          _
        // Predicated region
        $region29: #{bert_mlm_forward.1} parent=11 // pred_check
          %p556 = pneg %p188
        $region30: #{bert_mlm_forward.1} parent=11 // pred_check_branch
          %558 = sbr.rel (%p556) target = $region32
        $region31: #{bert_mlm_forward.1} parent=11 // pred_region
          _
        $region32: #{bert_mlm_forward.1} parent=11 // pred_fallthru
          _
        // Predicated region
        $region33: #{bert_mlm_forward.1} parent=11 // pred_check
          %p559 = pneg %p209
        $region34: #{bert_mlm_forward.1} parent=11 // pred_check_branch
          %561 = sbr.rel (%p559) target = $region36
        $region35: #{bert_mlm_forward.1} parent=11 // pred_region
          _
        $region36: #{bert_mlm_forward.1} parent=11 // pred_fallthru
          _
        // Predicated region
        $region37: #{bert_mlm_forward.1} parent=11 // pred_check
          %p562 = pneg %p230
        $region38: #{bert_mlm_forward.1} parent=11 // pred_check_branch
          %564 = sbr.rel (%p562) target = $region40
        $region39: #{bert_mlm_forward.1} parent=11 // pred_region
          _
        $region40: #{bert_mlm_forward.1} parent=11 // pred_fallthru
          _
        // Predicated region
        $region41: #{bert_mlm_forward.1} parent=11 // pred_check
          %p565 = pneg %p251
        $region42: #{bert_mlm_forward.1} parent=11 // pred_check_branch
          %567 = sbr.rel (%p565) target = $region44
        $region43: #{bert_mlm_forward.1} parent=11 // pred_region
          _
        $region44: #{bert_mlm_forward.1} parent=11 // pred_fallthru
          _
        // Predicated region
        $region45: #{bert_mlm_forward.1} parent=11 // pred_check
          %p568 = pneg %p272
        $region46: #{bert_mlm_forward.1} parent=11 // pred_check_branch
          %570 = sbr.rel (%p568) target = $region48
        $region47: #{bert_mlm_forward.1} parent=11 // pred_region
          _
        $region48: #{bert_mlm_forward.1} parent=11 // pred_fallthru
          _
        // Predicated region
        $region49: #{bert_mlm_forward.1} parent=11 // pred_check
          %p571 = pneg %p293
        $region50: #{bert_mlm_forward.1} parent=11 // pred_check_branch
          %573 = sbr.rel (%p571) target = $region52
        $region51: #{bert_mlm_forward.1} parent=11 // pred_region
          _
        $region52: #{bert_mlm_forward.1} parent=11 // pred_fallthru
          _
        // Predicated region
        $region53: #{bert_mlm_forward.1} parent=11 // pred_check
          %p574 = pneg %p314
        $region54: #{bert_mlm_forward.1} parent=11 // pred_check_branch
          %576 = sbr.rel (%p574) target = $region56
        $region55: #{bert_mlm_forward.1} parent=11 // pred_region
          _
        $region56: #{bert_mlm_forward.1} parent=11 // pred_fallthru
          _
        // Predicated region
        $region57: #{bert_mlm_forward.1} parent=11 // pred_check
          %p577 = pneg %p335
        $region58: #{bert_mlm_forward.1} parent=11 // pred_check_branch
          %579 = sbr.rel (%p577) target = $region60
        $region59: #{bert_mlm_forward.1} parent=11 // pred_region
          _
        $region60: #{bert_mlm_forward.1} parent=11 // pred_fallthru
          _
        // Predicated region
        $region61: #{bert_mlm_forward.1} parent=11 // pred_check
          %p580 = pneg %p356
        $region62: #{bert_mlm_forward.1} parent=11 // pred_check_branch
          %582 = sbr.rel (%p580) target = $region64
        $region63: #{bert_mlm_forward.1} parent=11 // pred_region
          _
        $region64: #{bert_mlm_forward.1} parent=11 // pred_fallthru
          _
        // Predicated region
        $region65: #{bert_mlm_forward.1} parent=11 // pred_check
          %p583 = pneg %p377
        $region66: #{bert_mlm_forward.1} parent=11 // pred_check_branch
          %585 = sbr.rel (%p583) target = $region68
        $region67: #{bert_mlm_forward.1} parent=11 // pred_region
          _
        $region68: #{bert_mlm_forward.1} parent=11 // pred_fallthru
          _
        // Predicated region
        $region69: #{bert_mlm_forward.1} parent=11 // pred_check
          %p586 = pneg %p398
        $region70: #{bert_mlm_forward.1} parent=11 // pred_check_branch
          %588 = sbr.rel (%p586) target = $region72
        $region71: #{bert_mlm_forward.1} parent=11 // pred_region
          _
        $region72: #{bert_mlm_forward.1} parent=11 // pred_fallthru
          _
        // Predicated region
        $region73: #{bert_mlm_forward.1} parent=11 // pred_check
          %p589 = pneg %p419
        $region74: #{bert_mlm_forward.1} parent=11 // pred_check_branch
          %591 = sbr.rel (%p589) target = $region76
        $region75: #{bert_mlm_forward.1} parent=11 // pred_region
          _
        $region76: #{bert_mlm_forward.1} parent=11 // pred_fallthru
          _
        // Predicated region
        $region77: #{bert_mlm_forward.1} parent=11 // pred_check
          %p592 = pneg %p440
        $region78: #{bert_mlm_forward.1} parent=11 // pred_check_branch
          %594 = sbr.rel (%p592) target = $region80
        $region79: #{bert_mlm_forward.1} parent=11 // pred_region
          _
        $region80: #{bert_mlm_forward.1} parent=11 // pred_fallthru
          _
        // Predicated region
        $region81: #{bert_mlm_forward.1} parent=11 // pred_check
          %p595 = pneg %p461
        $region82: #{bert_mlm_forward.1} parent=11 // pred_check_branch
          %597 = sbr.rel (%p595) target = $region84
        $region83: #{bert_mlm_forward.1} parent=11 // pred_region
          _
        $region84: #{bert_mlm_forward.1} parent=11 // pred_fallthru
          _
        // Predicated region
        $region85: #{bert_mlm_forward.1} parent=11 // pred_check
          %p598 = pneg %p482
        $region86: #{bert_mlm_forward.1} parent=11 // pred_check_branch
          %600 = sbr.rel (%p598) target = $region88
        $region87: #{bert_mlm_forward.1} parent=11 // pred_region
          _
        $region88: #{bert_mlm_forward.1} parent=11 // pred_fallthru
          _
        // Predicated region
        $region89: #{bert_mlm_forward.1} parent=11 // pred_check
          %p601 = pneg %p503
        $region90: #{bert_mlm_forward.1} parent=11 // pred_check_branch
          %603 = sbr.rel (%p601) target = $region92
        $region91: #{bert_mlm_forward.1} parent=11 // pred_region
          _
        $region92: #{bert_mlm_forward.1} parent=11 // pred_fallthru
          _
      $region12: #{bert_mlm_forward.1} parent=5 // pred_fallthru
        _
      %p604 = scmp.lt.s32.totalorder %s31, 2
      // Predicated region
      $region93: #{bert_mlm_forward.1} parent=5 // pred_check
        %p605 = pneg %p604
      $region94: #{bert_mlm_forward.1} parent=5 // pred_check_branch
        %607 = sbr.rel (%p605) target = $region96
      $region95: #{bert_mlm_forward.1} parent=5 // pred_region
        // Predicated region
        $region97: #{bert_mlm_forward.1} parent=95 // pred_check
          %p608 = pneg %p51
        $region98: #{bert_mlm_forward.1} parent=95 // pred_check_branch
          %610 = sbr.rel (%p608) target = $region100
        $region99: #{bert_mlm_forward.1} parent=95 // pred_region
          %p611 = scmp.lt.s32.totalorder %s31, 1
          %s612 = scalar_select %p611, %s31, 1
          %s613 = smul.addr %s612, 8
          %s614 = scalar_lea.vmem %s0, %s613
        $region100: #{bert_mlm_forward.1} parent=95 // pred_fallthru
          _
        // Predicated region
        $region101: #{bert_mlm_forward.1} parent=95 // pred_check
          %p615 = pneg %p77
        $region102: #{bert_mlm_forward.1} parent=95 // pred_check_branch
          %617 = sbr.rel (%p615) target = $region104
        $region103: #{bert_mlm_forward.1} parent=95 // pred_region
          %p618 = scmp.lt.s32.totalorder %s31, 1
          %s619 = scalar_select %p618, %s31, 1
          %s620 = scalar_lea.vmem %s1, %s619
        $region104: #{bert_mlm_forward.1} parent=95 // pred_fallthru
          _
      $region96: #{bert_mlm_forward.1} parent=5 // pred_fallthru
        _
      %p621 = scmp.le.s32.totalorder 1, %s31
      %p622 = scmp.lt.s32.totalorder %s31, 3
      %p623 = pnand %p621, %p622
      %p624 = pneg %p623
      // Predicated region
      $region105: #{bert_mlm_forward.1} parent=5 // pred_check
        _
      $region106: #{bert_mlm_forward.1} parent=5 // pred_check_branch
        %626 = sbr.rel (%p623) target = $region108
      $region107: #{bert_mlm_forward.1} parent=5 // pred_region
        %s627 = ssub.s32 %s31, 1
        %p628 = scmp.lt.s32.totalorder %s36, 1
        %s629 = scalar_select %p628, %s36, 1
        %s630 = smul.addr %s629, 8
        %s631 = scalar_lea.vmem %s0, %s630
        %p632 = pneg %p57
        %p633 = pneg %p54
        %p634 = scmp.lt.s32.totalorder %s36, 1
        %s635 = scalar_select %p634, %s36, 1
        %s636 = scalar_lea.vmem %s1, %s635
        %p637 = pneg %p83
        %p638 = pneg %p80
        %p639 = pneg %p104
        %p640 = pneg %p101
        %p641 = pneg %p125
        %p642 = pneg %p122
        %p643 = pneg %p146
        %p644 = pneg %p143
        %p645 = pneg %p167
        %p646 = pneg %p164
        %p647 = pneg %p188
        %p648 = pneg %p185
        %p649 = pneg %p209
        %p650 = pneg %p206
        %p651 = pneg %p230
        %p652 = pneg %p227
        %p653 = pneg %p251
        %p654 = pneg %p248
        %p655 = pneg %p272
        %p656 = pneg %p269
        %p657 = pneg %p293
        %p658 = pneg %p290
        %p659 = pneg %p314
        %p660 = pneg %p311
        %p661 = pneg %p335
        %p662 = pneg %p332
        %p663 = pneg %p356
        %p664 = pneg %p353
        %p665 = pneg %p377
        %p666 = pneg %p374
        %p667 = pneg %p398
        %p668 = pneg %p395
        %p669 = pneg %p419
        %p670 = pneg %p416
        %p671 = pneg %p440
        %p672 = pneg %p437
        %p673 = pneg %p461
        %p674 = pneg %p458
        %p675 = pneg %p482
        %p676 = pneg %p479
        %p677 = pneg %p503
        %p678 = pneg %p500
        %p679 = pneg %p529
        %p680 = pneg %p526
        %s681 = sand.u32 %s516, 1
        %s682 = scalar_lea.sflag [#allocation3], %s681
        %s683 = sand.u32 %s516, 1
        %s684 = smul.addr %s683, 8
        %s685 = scalar_lea.vmem [#allocation2], %s684
        %p686 = scmp.lt.s32.totalorder %s36, 1
        %s687 = scalar_select %p686, %s36, 1
        %s688 = smul.addr %s687, 8
        %s689 = scalar_lea.vmem %s0, %s688
        %p690 = scmp.lt.s32.totalorder %s36, 1
        %s691 = scalar_select %p690, %s36, 1
        %s692 = scalar_lea.vmem %s1, %s691
        %v693 = vld [vmem:[%s689] sm:$0xff]
        %v694 = vld [vmem:[%s14] sm:$0x1]
        %v695 = vld [vmem:[%s15] sm:$0x1]
        %vm696 = vcmask 261120
        %v697 = vsel %vm696, %v693, 0.0
        %698 = vadd.xlane.f32.xlu0 %v697
        %v699 = vpop.xlane.xlu0 %698
        %v700 = vrcp.pop 32.0
        %v701 = vmul.f32 %v699, %v700
        %v702 = vsub.f32 %v693, %v701
        %v703 = vmul.f32 %v702, %v702
        %v704 = vsel %vm696, %v703, 0.0
        %705 = vadd.xlane.f32.xlu0 %v704
        %v706 = vpop.xlane.xlu0 %705
        %v707 = vmul.f32 %v706, %v700
        %v708 = vadd.f32 %v707, 1e-12
        %v709 = vrsqrt.pop %v708
        %v710 = vmul.f32 %v702, %v709
        %v712 = vlaneseq
        %v713 = vshrl.u32 %v712, 7
        %v714 = vsub.s32 0, %v713
        %v715 = vrot.slane %v694, %v714
        %v717 = vmul.f32 %v710, %v715
        %v719 = vlaneseq
        %v720 = vshrl.u32 %v719, 7
        %v721 = vsub.s32 0, %v720
        %v722 = vrot.slane %v695, %v721
        %v724 = vadd.f32 %v717, %v722
        %v725 = vld [vmem:[%s692] sm:$0x1]
        %v726 = vsub.f32 1.0, %v725
        %v727 = vmul.f32 %v726, -1e+09
        %v728 = vld [vmem:[%s2] sm:$0xff]
        %v729 = vld [vmem:[%s2 + $0x8] sm:$0xff]
        %v730 = vld [vmem:[%s2 + $0x10] sm:$0xff]
        %v731 = vld [vmem:[%s2 + $0x18] sm:$0xff]
        %v732 = vld [vmem:[%s3] sm:$0x1]
        %v734 = vlaneseq
        %v735 = vshrl.u32 %v734, 7
        %v736 = vsub.s32 0, %v735
        %v737 = vrot.slane %v732, %v736
        %v740 = vsel %vm696, %v724, 0
        %742 = vmatprep.subr.mxu0 0.0
        %743 = vmatpush1.msra.mxu0 %v728
        %744 = vmatprep.subr.mxu0 0.0
        %745 = vmatpush1.msra.mxu0 %v729
        %746 = vmatprep.subr.mxu0 0.0
        %747 = vmatpush1.msra.mxu0 %v730
        %748 = vmatprep.subr.mxu0 0.0
        %749 = vmatpush1.msra.mxu0 %v731
        %750 = vmatprep.subr.mxu0 0.0
        %751 = vmatpush1.msra.mxu0 0.0
        %752 = vmatprep.subr.mxu0 0.0
        %753 = vmatpush1.msra.mxu0 0.0
        %754 = vmatprep.subr.mxu0 0.0
        %755 = vmatpush1.msra.mxu0 0.0
        %756 = vmatprep.subr.mxu0 0.0
        %757 = vmatpush1.msra.mxu0 0.0
        %758 = vmatprep.subr.mxu0 0.0
        %759 = vmatpush1.msra.mxu0 0.0
        %760 = vmatprep.subr.mxu0 0.0
        %761 = vmatpush1.msra.mxu0 0.0
        %762 = vmatprep.subr.mxu0 0.0
        %763 = vmatpush1.msra.mxu0 0.0
        %764 = vmatprep.subr.mxu0 0.0
        %765 = vmatpush1.msra.mxu0 0.0
        %766 = vmatprep.subr.mxu0 0.0
        %767 = vmatpush1.msra.mxu0 0.0
        %768 = vmatprep.subr.mxu0 0.0
        %769 = vmatpush1.msra.mxu0 0.0
        %770 = vmatprep.subr.mxu0 0.0
        %771 = vmatpush1.msra.mxu0 0.0
        %772 = vmatprep.subr.mxu0 0.0
        %773 = vmatpush1.msra.mxu0 0.0
        %774 = vmatprep.subr.mxu0 0.0
        %775 = vmatpush1.msra.mxu0 0.0
        %776 = vmatprep.subr.mxu0 0.0
        %777 = vmatpush1.msra.mxu0 0.0
        %778 = vmatprep.subr.mxu0 0.0
        %779 = vmatpush1.msra.mxu0 0.0
        %780 = vmatprep.subr.mxu0 0.0
        %781 = vmatpush1.msra.mxu0 0.0
        %782 = vmatprep.subr.mxu0 0.0
        %783 = vmatpush1.msra.mxu0 0.0
        %784 = vmatprep.subr.mxu0 0.0
        %785 = vmatpush1.msra.mxu0 0.0
        %786 = vmatprep.subr.mxu0 0.0
        %787 = vmatpush1.msra.mxu0 0.0
        %788 = vmatprep.subr.mxu0 0.0
        %789 = vmatpush1.msra.mxu0 0.0
        %790 = vmatprep.subr.mxu0 0.0
        %791 = vmatpush1.msra.mxu0 0.0
        %792 = vmatprep.subr.mxu0 0.0
        %793 = vmatpush1.msra.mxu0 0.0
        %794 = vmatprep.subr.mxu0 0.0
        %795 = vmatpush1.msra.mxu0 0.0
        %796 = vmatprep.subr.mxu0 0.0
        %797 = vmatpush1.msra.mxu0 0.0
        %798 = vmatprep.subr.mxu0 0.0
        %799 = vmatpush1.msra.mxu0 0.0
        %800 = vmatprep.subr.mxu0 0.0
        %801 = vmatpush1.msra.mxu0 0.0
        %802 = vmatprep.subr.mxu0 0.0
        %803 = vmatpush1.msra.mxu0 0.0
        %804 = vmatprep.subr.mxu0 0.0
        %805 = vmatpush1.msra.mxu0 0.0
        %806 = vmatprep.mubr.f32.mxu0 0.0
        %807 = vmatmul.mubr.f32.gmra.mrb[0].mxu0 %v740
        %v808 = vpop.f32.mrb[0].mxu0
        %v809 = vadd.f32 %v737, %v808
        %v810 = vpop.f32.mrb[0].mxu0
        %811 = vdwg.mxu0
        %813 = vrot.lane.b32.xlu0 %v809, 96
        %v814 = vpop.permute.xlu0 %813
        %vm815 = vcmask 130048
        %v816 = vsel %vm815, %v809, 0
        %v818 = vsel %vm815, %v814, 0
        %820 = vmatprep.subr.mxu0 0.0
        %821 = vmatpush1.xpose.msra.mxu0 %v818
        %822 = vmatprep.subr.mxu0 0.0
        %823 = vmatpush1.xpose.msra.mxu0 0.0
        %824 = vmatprep.subr.mxu0 0.0
        %825 = vmatpush1.xpose.msra.mxu0 0.0
        %826 = vmatprep.subr.mxu0 0.0
        %827 = vmatpush1.xpose.msra.mxu0 0.0
        %828 = vmatprep.subr.mxu0 0.0
        %829 = vmatpush1.xpose.msra.mxu0 0.0
        %830 = vmatprep.subr.mxu0 0.0
        %831 = vmatpush1.xpose.msra.mxu0 0.0
        %832 = vmatprep.subr.mxu0 0.0
        %833 = vmatpush1.xpose.msra.mxu0 0.0
        %834 = vmatprep.subr.mxu0 0.0
        %835 = vmatpush1.xpose.msra.mxu0 0.0
        %836 = vmatprep.subr.mxu0 0.0
        %837 = vmatpush1.xpose.msra.mxu0 0.0
        %838 = vmatprep.subr.mxu0 0.0
        %839 = vmatpush1.xpose.msra.mxu0 0.0
        %840 = vmatprep.subr.mxu0 0.0
        %841 = vmatpush1.xpose.msra.mxu0 0.0
        %842 = vmatprep.subr.mxu0 0.0
        %843 = vmatpush1.xpose.msra.mxu0 0.0
        %844 = vmatprep.subr.mxu0 0.0
        %845 = vmatpush1.xpose.msra.mxu0 0.0
        %846 = vmatprep.subr.mxu0 0.0
        %847 = vmatpush1.xpose.msra.mxu0 0.0
        %848 = vmatprep.subr.mxu0 0.0
        %849 = vmatpush1.xpose.msra.mxu0 0.0
        %850 = vmatprep.subr.mxu0 0.0
        %851 = vmatpush1.xpose.msra.mxu0 0.0
        %852 = vmatprep.subr.mxu0 0.0
        %853 = vmatpush1.xpose.msra.mxu0 0.0
        %854 = vmatprep.subr.mxu0 0.0
        %855 = vmatpush1.xpose.msra.mxu0 0.0
        %856 = vmatprep.subr.mxu0 0.0
        %857 = vmatpush1.xpose.msra.mxu0 0.0
        %858 = vmatprep.subr.mxu0 0.0
        %859 = vmatpush1.xpose.msra.mxu0 0.0
        %860 = vmatprep.subr.mxu0 0.0
        %861 = vmatpush1.xpose.msra.mxu0 0.0
        %862 = vmatprep.subr.mxu0 0.0
        %863 = vmatpush1.xpose.msra.mxu0 0.0
        %864 = vmatprep.subr.mxu0 0.0
        %865 = vmatpush1.xpose.msra.mxu0 0.0
        %866 = vmatprep.subr.mxu0 0.0
        %867 = vmatpush1.xpose.msra.mxu0 0.0
        %868 = vmatprep.subr.mxu0 0.0
        %869 = vmatpush1.xpose.msra.mxu0 0.0
        %870 = vmatprep.subr.mxu0 0.0
        %871 = vmatpush1.xpose.msra.mxu0 0.0
        %872 = vmatprep.subr.mxu0 0.0
        %873 = vmatpush1.xpose.msra.mxu0 0.0
        %874 = vmatprep.subr.mxu0 0.0
        %875 = vmatpush1.xpose.msra.mxu0 0.0
        %876 = vmatprep.subr.mxu0 0.0
        %877 = vmatpush1.xpose.msra.mxu0 0.0
        %878 = vmatprep.subr.mxu0 0.0
        %879 = vmatpush1.xpose.msra.mxu0 0.0
        %880 = vmatprep.subr.mxu0 0.0
        %881 = vmatpush1.xpose.msra.mxu0 0.0
        %882 = vmatprep.subr.mxu0 0.0
        %883 = vmatpush1.xpose.msra.mxu0 0.0
        %884 = vmatprep.mubr.f32.mxu0 0.0
        %885 = vmatmul.mubr.f32.gmra.mrb[0].mxu0 %v816
        %v886 = vpop.f32.mrb[0].mxu0
        %v887 = vadd.f32 0.0, %v886
        %v888 = vpop.f32.mrb[0].mxu0
        %889 = vdwg.mxu0
        %v890 = vmul.f32 %v887, 0.25
        %v892 = vlaneseq
        %v893 = vshrl.u32 %v892, 7
        %v894 = vsub.s32 0, %v893
        %v895 = vrot.slane %v727, %v894
        %v897 = vadd.f32 %v890, %v895
        %vm898 = vcmask 64512
        %v899 = vsel %vm898, %v897, -inf
        %900 = vmax.xlane.f32.xlu0 %v899
        %v901 = vpop.xlane.xlu0 %900
        %v902 = vsub.f32 %v897, %v901
        %v903 = vmul.f32 %v902, 1.442695
        %v904 = vpow.pop %v903
        %v905 = vsel %vm898, %v904, 0.0
        %906 = vadd.xlane.f32.xlu0 %v905
        %v907 = vpop.xlane.xlu0 %906
        %v908 = vrcp.pop %v907
        %v909 = vmul.f32 %v904, %v908
        %910 = vrot.lane.b32.xlu0 %v809, 64
        %v911 = vpop.permute.xlu0 %910
        %v914 = vsel %vm898, %v909, 0
        %916 = vmatprep.subr.mxu0 0.0
        %917 = vmatpush1.msra.mxu0 %v911
        %918 = vmatprep.subr.mxu0 0.0
        %919 = vmatpush1.msra.mxu0 0.0
        %920 = vmatprep.subr.mxu0 0.0
        %921 = vmatpush1.msra.mxu0 0.0
        %922 = vmatprep.subr.mxu0 0.0
        %923 = vmatpush1.msra.mxu0 0.0
        %924 = vmatprep.subr.mxu0 0.0
        %925 = vmatpush1.msra.mxu0 0.0
        %926 = vmatprep.subr.mxu0 0.0
        %927 = vmatpush1.msra.mxu0 0.0
        %928 = vmatprep.subr.mxu0 0.0
        %929 = vmatpush1.msra.mxu0 0.0
        %930 = vmatprep.subr.mxu0 0.0
        %931 = vmatpush1.msra.mxu0 0.0
        %932 = vmatprep.subr.mxu0 0.0
        %933 = vmatpush1.msra.mxu0 0.0
        %934 = vmatprep.subr.mxu0 0.0
        %935 = vmatpush1.msra.mxu0 0.0
        %936 = vmatprep.subr.mxu0 0.0
        %937 = vmatpush1.msra.mxu0 0.0
        %938 = vmatprep.subr.mxu0 0.0
        %939 = vmatpush1.msra.mxu0 0.0
        %940 = vmatprep.subr.mxu0 0.0
        %941 = vmatpush1.msra.mxu0 0.0
        %942 = vmatprep.subr.mxu0 0.0
        %943 = vmatpush1.msra.mxu0 0.0
        %944 = vmatprep.subr.mxu0 0.0
        %945 = vmatpush1.msra.mxu0 0.0
        %946 = vmatprep.subr.mxu0 0.0
        %947 = vmatpush1.msra.mxu0 0.0
        %948 = vmatprep.subr.mxu0 0.0
        %949 = vmatpush1.msra.mxu0 0.0
        %950 = vmatprep.subr.mxu0 0.0
        %951 = vmatpush1.msra.mxu0 0.0
        %952 = vmatprep.subr.mxu0 0.0
        %953 = vmatpush1.msra.mxu0 0.0
        %954 = vmatprep.subr.mxu0 0.0
        %955 = vmatpush1.msra.mxu0 0.0
        %956 = vmatprep.subr.mxu0 0.0
        %957 = vmatpush1.msra.mxu0 0.0
        %958 = vmatprep.subr.mxu0 0.0
        %959 = vmatpush1.msra.mxu0 0.0
        %960 = vmatprep.subr.mxu0 0.0
        %961 = vmatpush1.msra.mxu0 0.0
        %962 = vmatprep.subr.mxu0 0.0
        %963 = vmatpush1.msra.mxu0 0.0
        %964 = vmatprep.subr.mxu0 0.0
        %965 = vmatpush1.msra.mxu0 0.0
        %966 = vmatprep.subr.mxu0 0.0
        %967 = vmatpush1.msra.mxu0 0.0
        %968 = vmatprep.subr.mxu0 0.0
        %969 = vmatpush1.msra.mxu0 0.0
        %970 = vmatprep.subr.mxu0 0.0
        %971 = vmatpush1.msra.mxu0 0.0
        %972 = vmatprep.subr.mxu0 0.0
        %973 = vmatpush1.msra.mxu0 0.0
        %974 = vmatprep.subr.mxu0 0.0
        %975 = vmatpush1.msra.mxu0 0.0
        %976 = vmatprep.subr.mxu0 0.0
        %977 = vmatpush1.msra.mxu0 0.0
        %978 = vmatprep.subr.mxu0 0.0
        %979 = vmatpush1.msra.mxu0 0.0
        %980 = vmatprep.mubr.f32.mxu0 0.0
        %981 = vmatmul.mubr.f32.gmra.mrb[0].mxu0 %v914
        %v982 = vpop.f32.mrb[0].mxu0
        %v983 = vadd.f32 0.0, %v982
        %v984 = vpop.f32.mrb[0].mxu0
        %985 = vdwg.mxu0
        %986 = vrot.lane.b32.xlu0 %v809, 112
        %v987 = vpop.permute.xlu0 %986
        %988 = vrot.lane.b32.xlu0 %v809, 80
        %v989 = vpop.permute.xlu0 %988
        %v990 = vsel %vm815, %v987, 0
        %v992 = vsel %vm815, %v989, 0
        %994 = vmatprep.subr.mxu0 0.0
        %995 = vmatpush1.xpose.msra.mxu0 %v992
        %996 = vmatprep.subr.mxu0 0.0
        %997 = vmatpush1.xpose.msra.mxu0 0.0
        %998 = vmatprep.subr.mxu0 0.0
        %999 = vmatpush1.xpose.msra.mxu0 0.0
        %1000 = vmatprep.subr.mxu0 0.0
        %1001 = vmatpush1.xpose.msra.mxu0 0.0
        %1002 = vmatprep.subr.mxu0 0.0
        %1003 = vmatpush1.xpose.msra.mxu0 0.0
        %1004 = vmatprep.subr.mxu0 0.0
        %1005 = vmatpush1.xpose.msra.mxu0 0.0
        %1006 = vmatprep.subr.mxu0 0.0
        %1007 = vmatpush1.xpose.msra.mxu0 0.0
        %1008 = vmatprep.subr.mxu0 0.0
        %1009 = vmatpush1.xpose.msra.mxu0 0.0
        %1010 = vmatprep.subr.mxu0 0.0
        %1011 = vmatpush1.xpose.msra.mxu0 0.0
        %1012 = vmatprep.subr.mxu0 0.0
        %1013 = vmatpush1.xpose.msra.mxu0 0.0
        %1014 = vmatprep.subr.mxu0 0.0
        %1015 = vmatpush1.xpose.msra.mxu0 0.0
        %1016 = vmatprep.subr.mxu0 0.0
        %1017 = vmatpush1.xpose.msra.mxu0 0.0
        %1018 = vmatprep.subr.mxu0 0.0
        %1019 = vmatpush1.xpose.msra.mxu0 0.0
        %1020 = vmatprep.subr.mxu0 0.0
        %1021 = vmatpush1.xpose.msra.mxu0 0.0
        %1022 = vmatprep.subr.mxu0 0.0
        %1023 = vmatpush1.xpose.msra.mxu0 0.0
        %1024 = vmatprep.subr.mxu0 0.0
        %1025 = vmatpush1.xpose.msra.mxu0 0.0
        %1026 = vmatprep.subr.mxu0 0.0
        %1027 = vmatpush1.xpose.msra.mxu0 0.0
        %1028 = vmatprep.subr.mxu0 0.0
        %1029 = vmatpush1.xpose.msra.mxu0 0.0
        %1030 = vmatprep.subr.mxu0 0.0
        %1031 = vmatpush1.xpose.msra.mxu0 0.0
        %1032 = vmatprep.subr.mxu0 0.0
        %1033 = vmatpush1.xpose.msra.mxu0 0.0
        %1034 = vmatprep.subr.mxu0 0.0
        %1035 = vmatpush1.xpose.msra.mxu0 0.0
        %1036 = vmatprep.subr.mxu0 0.0
        %1037 = vmatpush1.xpose.msra.mxu0 0.0
        %1038 = vmatprep.subr.mxu0 0.0
        %1039 = vmatpush1.xpose.msra.mxu0 0.0
        %1040 = vmatprep.subr.mxu0 0.0
        %1041 = vmatpush1.xpose.msra.mxu0 0.0
        %1042 = vmatprep.subr.mxu0 0.0
        %1043 = vmatpush1.xpose.msra.mxu0 0.0
        %1044 = vmatprep.subr.mxu0 0.0
        %1045 = vmatpush1.xpose.msra.mxu0 0.0
        %1046 = vmatprep.subr.mxu0 0.0
        %1047 = vmatpush1.xpose.msra.mxu0 0.0
        %1048 = vmatprep.subr.mxu0 0.0
        %1049 = vmatpush1.xpose.msra.mxu0 0.0
        %1050 = vmatprep.subr.mxu0 0.0
        %1051 = vmatpush1.xpose.msra.mxu0 0.0
        %1052 = vmatprep.subr.mxu0 0.0
        %1053 = vmatpush1.xpose.msra.mxu0 0.0
        %1054 = vmatprep.subr.mxu0 0.0
        %1055 = vmatpush1.xpose.msra.mxu0 0.0
        %1056 = vmatprep.subr.mxu0 0.0
        %1057 = vmatpush1.xpose.msra.mxu0 0.0
        %1058 = vmatprep.mubr.f32.mxu0 0.0
        %1059 = vmatmul.mubr.f32.gmra.mrb[0].mxu0 %v990
        %v1060 = vpop.f32.mrb[0].mxu0
        %v1061 = vadd.f32 0.0, %v1060
        %v1062 = vpop.f32.mrb[0].mxu0
        %1063 = vdwg.mxu0
        %v1064 = vmul.f32 %v1061, 0.25
        %v1065 = vadd.f32 %v1064, %v895
        %v1066 = vsel %vm898, %v1065, -inf
        %1067 = vmax.xlane.f32.xlu0 %v1066
        %v1068 = vpop.xlane.xlu0 %1067
        %v1069 = vsub.f32 %v1065, %v1068
        %v1070 = vmul.f32 %v1069, 1.442695
        %v1071 = vpow.pop %v1070
        %v1072 = vsel %vm898, %v1071, 0.0
        %1073 = vadd.xlane.f32.xlu0 %v1072
        %v1074 = vpop.xlane.xlu0 %1073
        %v1075 = vrcp.pop %v1074
        %v1076 = vmul.f32 %v1071, %v1075
        %1077 = vrot.lane.b32.xlu0 %v809, 48
        %v1078 = vpop.permute.xlu0 %1077
        %v1081 = vsel %vm898, %v1076, 0
        %1083 = vmatprep.subr.mxu0 0.0
        %1084 = vmatpush1.msra.mxu0 %v1078
        %1085 = vmatprep.subr.mxu0 0.0
        %1086 = vmatpush1.msra.mxu0 0.0
        %1087 = vmatprep.subr.mxu0 0.0
        %1088 = vmatpush1.msra.mxu0 0.0
        %1089 = vmatprep.subr.mxu0 0.0
        %1090 = vmatpush1.msra.mxu0 0.0
        %1091 = vmatprep.subr.mxu0 0.0
        %1092 = vmatpush1.msra.mxu0 0.0
        %1093 = vmatprep.subr.mxu0 0.0
        %1094 = vmatpush1.msra.mxu0 0.0
        %1095 = vmatprep.subr.mxu0 0.0
        %1096 = vmatpush1.msra.mxu0 0.0
        %1097 = vmatprep.subr.mxu0 0.0
        %1098 = vmatpush1.msra.mxu0 0.0
        %1099 = vmatprep.subr.mxu0 0.0
        %1100 = vmatpush1.msra.mxu0 0.0
        %1101 = vmatprep.subr.mxu0 0.0
        %1102 = vmatpush1.msra.mxu0 0.0
        %1103 = vmatprep.subr.mxu0 0.0
        %1104 = vmatpush1.msra.mxu0 0.0
        %1105 = vmatprep.subr.mxu0 0.0
        %1106 = vmatpush1.msra.mxu0 0.0
        %1107 = vmatprep.subr.mxu0 0.0
        %1108 = vmatpush1.msra.mxu0 0.0
        %1109 = vmatprep.subr.mxu0 0.0
        %1110 = vmatpush1.msra.mxu0 0.0
        %1111 = vmatprep.subr.mxu0 0.0
        %1112 = vmatpush1.msra.mxu0 0.0
        %1113 = vmatprep.subr.mxu0 0.0
        %1114 = vmatpush1.msra.mxu0 0.0
        %1115 = vmatprep.subr.mxu0 0.0
        %1116 = vmatpush1.msra.mxu0 0.0
        %1117 = vmatprep.subr.mxu0 0.0
        %1118 = vmatpush1.msra.mxu0 0.0
        %1119 = vmatprep.subr.mxu0 0.0
        %1120 = vmatpush1.msra.mxu0 0.0
        %1121 = vmatprep.subr.mxu0 0.0
        %1122 = vmatpush1.msra.mxu0 0.0
        %1123 = vmatprep.subr.mxu0 0.0
        %1124 = vmatpush1.msra.mxu0 0.0
        %1125 = vmatprep.subr.mxu0 0.0
        %1126 = vmatpush1.msra.mxu0 0.0
        %1127 = vmatprep.subr.mxu0 0.0
        %1128 = vmatpush1.msra.mxu0 0.0
        %1129 = vmatprep.subr.mxu0 0.0
        %1130 = vmatpush1.msra.mxu0 0.0
        %1131 = vmatprep.subr.mxu0 0.0
        %1132 = vmatpush1.msra.mxu0 0.0
        %1133 = vmatprep.subr.mxu0 0.0
        %1134 = vmatpush1.msra.mxu0 0.0
        %1135 = vmatprep.subr.mxu0 0.0
        %1136 = vmatpush1.msra.mxu0 0.0
        %1137 = vmatprep.subr.mxu0 0.0
        %1138 = vmatpush1.msra.mxu0 0.0
        %1139 = vmatprep.subr.mxu0 0.0
        %1140 = vmatpush1.msra.mxu0 0.0
        %1141 = vmatprep.subr.mxu0 0.0
        %1142 = vmatpush1.msra.mxu0 0.0
        %1143 = vmatprep.subr.mxu0 0.0
        %1144 = vmatpush1.msra.mxu0 0.0
        %1145 = vmatprep.subr.mxu0 0.0
        %1146 = vmatpush1.msra.mxu0 0.0
        %1147 = vmatprep.mubr.f32.mxu0 0.0
        %1148 = vmatmul.mubr.f32.gmra.mrb[0].mxu0 %v1081
        %v1149 = vpop.f32.mrb[0].mxu0
        %v1150 = vadd.f32 0.0, %v1149
        %v1151 = vpop.f32.mrb[0].mxu0
        %1152 = vdwg.mxu0
        %1154 = vrot.lane.b32.xlu0 %v1150, 16
        %v1155 = vpop.permute.xlu0 %1154
        %v1157 = vsel %vm815, %v983, %v1155
        %v1158 = vld [vmem:[%s4] sm:$0xff]
        %v1159 = vld [vmem:[%s4 + $0x8] sm:$0xff]
        %v1160 = vld [vmem:[%s4 + $0x10] sm:$0xff]
        %v1161 = vld [vmem:[%s4 + $0x18] sm:$0xff]
        %v1162 = vld [vmem:[%s5] sm:$0x1]
        %v1164 = vlaneseq
        %v1165 = vshrl.u32 %v1164, 7
        %v1166 = vsub.s32 0, %v1165
        %v1167 = vrot.slane %v1162, %v1166
        %v1170 = vsel %vm696, %v1157, 0
        %1172 = vmatprep.subr.mxu0 0.0
        %1173 = vmatpush1.msra.mxu0 %v1158
        %1174 = vmatprep.subr.mxu0 0.0
        %1175 = vmatpush1.msra.mxu0 %v1159
        %1176 = vmatprep.subr.mxu0 0.0
        %1177 = vmatpush1.msra.mxu0 %v1160
        %1178 = vmatprep.subr.mxu0 0.0
        %1179 = vmatpush1.msra.mxu0 %v1161
        %1180 = vmatprep.subr.mxu0 0.0
        %1181 = vmatpush1.msra.mxu0 0.0
        %1182 = vmatprep.subr.mxu0 0.0
        %1183 = vmatpush1.msra.mxu0 0.0
        %1184 = vmatprep.subr.mxu0 0.0
        %1185 = vmatpush1.msra.mxu0 0.0
        %1186 = vmatprep.subr.mxu0 0.0
        %1187 = vmatpush1.msra.mxu0 0.0
        %1188 = vmatprep.subr.mxu0 0.0
        %1189 = vmatpush1.msra.mxu0 0.0
        %1190 = vmatprep.subr.mxu0 0.0
        %1191 = vmatpush1.msra.mxu0 0.0
        %1192 = vmatprep.subr.mxu0 0.0
        %1193 = vmatpush1.msra.mxu0 0.0
        %1194 = vmatprep.subr.mxu0 0.0
        %1195 = vmatpush1.msra.mxu0 0.0
        %1196 = vmatprep.subr.mxu0 0.0
        %1197 = vmatpush1.msra.mxu0 0.0
        %1198 = vmatprep.subr.mxu0 0.0
        %1199 = vmatpush1.msra.mxu0 0.0
        %1200 = vmatprep.subr.mxu0 0.0
        %1201 = vmatpush1.msra.mxu0 0.0
        %1202 = vmatprep.subr.mxu0 0.0
        %1203 = vmatpush1.msra.mxu0 0.0
        %1204 = vmatprep.subr.mxu0 0.0
        %1205 = vmatpush1.msra.mxu0 0.0
        %1206 = vmatprep.subr.mxu0 0.0
        %1207 = vmatpush1.msra.mxu0 0.0
        %1208 = vmatprep.subr.mxu0 0.0
        %1209 = vmatpush1.msra.mxu0 0.0
        %1210 = vmatprep.subr.mxu0 0.0
        %1211 = vmatpush1.msra.mxu0 0.0
        %1212 = vmatprep.subr.mxu0 0.0
        %1213 = vmatpush1.msra.mxu0 0.0
        %1214 = vmatprep.subr.mxu0 0.0
        %1215 = vmatpush1.msra.mxu0 0.0
        %1216 = vmatprep.subr.mxu0 0.0
        %1217 = vmatpush1.msra.mxu0 0.0
        %1218 = vmatprep.subr.mxu0 0.0
        %1219 = vmatpush1.msra.mxu0 0.0
        %1220 = vmatprep.subr.mxu0 0.0
        %1221 = vmatpush1.msra.mxu0 0.0
        %1222 = vmatprep.subr.mxu0 0.0
        %1223 = vmatpush1.msra.mxu0 0.0
        %1224 = vmatprep.subr.mxu0 0.0
        %1225 = vmatpush1.msra.mxu0 0.0
        %1226 = vmatprep.subr.mxu0 0.0
        %1227 = vmatpush1.msra.mxu0 0.0
        %1228 = vmatprep.subr.mxu0 0.0
        %1229 = vmatpush1.msra.mxu0 0.0
        %1230 = vmatprep.subr.mxu0 0.0
        %1231 = vmatpush1.msra.mxu0 0.0
        %1232 = vmatprep.subr.mxu0 0.0
        %1233 = vmatpush1.msra.mxu0 0.0
        %1234 = vmatprep.subr.mxu0 0.0
        %1235 = vmatpush1.msra.mxu0 0.0
        %1236 = vmatprep.mubr.f32.mxu0 0.0
        %1237 = vmatmul.mubr.f32.gmra.mrb[0].mxu0 %v1170
        %v1238 = vpop.f32.mrb[0].mxu0
        %v1239 = vadd.f32 %v1167, %v1238
        %v1240 = vpop.f32.mrb[0].mxu0
        %1241 = vdwg.mxu0
        %v1242 = vadd.f32 %v1239, %v724
        %v1243 = vld [vmem:[%s6] sm:$0x1]
        %v1244 = vld [vmem:[%s7] sm:$0x1]
        %v1245 = vsel %vm696, %v1242, 0.0
        %1246 = vadd.xlane.f32.xlu0 %v1245
        %v1247 = vpop.xlane.xlu0 %1246
        %v1248 = vmul.f32 %v1247, %v700
        %v1249 = vsub.f32 %v1242, %v1248
        %v1250 = vmul.f32 %v1249, %v1249
        %v1251 = vsel %vm696, %v1250, 0.0
        %1252 = vadd.xlane.f32.xlu0 %v1251
        %v1253 = vpop.xlane.xlu0 %1252
        %v1254 = vmul.f32 %v1253, %v700
        %v1255 = vadd.f32 %v1254, 1e-12
        %v1256 = vrsqrt.pop %v1255
        %v1257 = vmul.f32 %v1249, %v1256
        %v1259 = vlaneseq
        %v1260 = vshrl.u32 %v1259, 7
        %v1261 = vsub.s32 0, %v1260
        %v1262 = vrot.slane %v1243, %v1261
        %v1264 = vmul.f32 %v1257, %v1262
        %v1266 = vlaneseq
        %v1267 = vshrl.u32 %v1266, 7
        %v1268 = vsub.s32 0, %v1267
        %v1269 = vrot.slane %v1244, %v1268
        %v1271 = vadd.f32 %v1264, %v1269
        %v1272 = vld [vmem:[%s8] sm:$0xff]
        %v1273 = vld [vmem:[%s8 + $0x8] sm:$0xff]
        %v1274 = vld [vmem:[%s8 + $0x10] sm:$0xff]
        %v1275 = vld [vmem:[%s8 + $0x18] sm:$0xff]
        %v1276 = vld [vmem:[%s9] sm:$0x1]
        %v1278 = vlaneseq
        %v1279 = vshrl.u32 %v1278, 7
        %v1280 = vsub.s32 0, %v1279
        %v1281 = vrot.slane %v1276, %v1280
        %v1284 = vsel %vm696, %v1271, 0
        %1286 = vmatprep.subr.mxu0 0.0
        %1287 = vmatpush1.msra.mxu0 %v1272
        %1288 = vmatprep.subr.mxu0 0.0
        %1289 = vmatpush1.msra.mxu0 %v1273
        %1290 = vmatprep.subr.mxu0 0.0
        %1291 = vmatpush1.msra.mxu0 %v1274
        %1292 = vmatprep.subr.mxu0 0.0
        %1293 = vmatpush1.msra.mxu0 %v1275
        %1294 = vmatprep.subr.mxu0 0.0
        %1295 = vmatpush1.msra.mxu0 0.0
        %1296 = vmatprep.subr.mxu0 0.0
        %1297 = vmatpush1.msra.mxu0 0.0
        %1298 = vmatprep.subr.mxu0 0.0
        %1299 = vmatpush1.msra.mxu0 0.0
        %1300 = vmatprep.subr.mxu0 0.0
        %1301 = vmatpush1.msra.mxu0 0.0
        %1302 = vmatprep.subr.mxu0 0.0
        %1303 = vmatpush1.msra.mxu0 0.0
        %1304 = vmatprep.subr.mxu0 0.0
        %1305 = vmatpush1.msra.mxu0 0.0
        %1306 = vmatprep.subr.mxu0 0.0
        %1307 = vmatpush1.msra.mxu0 0.0
        %1308 = vmatprep.subr.mxu0 0.0
        %1309 = vmatpush1.msra.mxu0 0.0
        %1310 = vmatprep.subr.mxu0 0.0
        %1311 = vmatpush1.msra.mxu0 0.0
        %1312 = vmatprep.subr.mxu0 0.0
        %1313 = vmatpush1.msra.mxu0 0.0
        %1314 = vmatprep.subr.mxu0 0.0
        %1315 = vmatpush1.msra.mxu0 0.0
        %1316 = vmatprep.subr.mxu0 0.0
        %1317 = vmatpush1.msra.mxu0 0.0
        %1318 = vmatprep.subr.mxu0 0.0
        %1319 = vmatpush1.msra.mxu0 0.0
        %1320 = vmatprep.subr.mxu0 0.0
        %1321 = vmatpush1.msra.mxu0 0.0
        %1322 = vmatprep.subr.mxu0 0.0
        %1323 = vmatpush1.msra.mxu0 0.0
        %1324 = vmatprep.subr.mxu0 0.0
        %1325 = vmatpush1.msra.mxu0 0.0
        %1326 = vmatprep.subr.mxu0 0.0
        %1327 = vmatpush1.msra.mxu0 0.0
        %1328 = vmatprep.subr.mxu0 0.0
        %1329 = vmatpush1.msra.mxu0 0.0
        %1330 = vmatprep.subr.mxu0 0.0
        %1331 = vmatpush1.msra.mxu0 0.0
        %1332 = vmatprep.subr.mxu0 0.0
        %1333 = vmatpush1.msra.mxu0 0.0
        %1334 = vmatprep.subr.mxu0 0.0
        %1335 = vmatpush1.msra.mxu0 0.0
        %1336 = vmatprep.subr.mxu0 0.0
        %1337 = vmatpush1.msra.mxu0 0.0
        %1338 = vmatprep.subr.mxu0 0.0
        %1339 = vmatpush1.msra.mxu0 0.0
        %1340 = vmatprep.subr.mxu0 0.0
        %1341 = vmatpush1.msra.mxu0 0.0
        %1342 = vmatprep.subr.mxu0 0.0
        %1343 = vmatpush1.msra.mxu0 0.0
        %1344 = vmatprep.subr.mxu0 0.0
        %1345 = vmatpush1.msra.mxu0 0.0
        %1346 = vmatprep.subr.mxu0 0.0
        %1347 = vmatpush1.msra.mxu0 0.0
        %1348 = vmatprep.subr.mxu0 0.0
        %1349 = vmatpush1.msra.mxu0 0.0
        %1350 = vmatprep.mubr.f32.mxu0 0.0
        %1351 = vmatmul.mubr.f32.gmra.mrb[0].mxu0 %v1284
        %v1352 = vpop.f32.mrb[0].mxu0
        %v1353 = vadd.f32 %v1281, %v1352
        %v1354 = vpop.f32.mrb[0].mxu0
        %1355 = vdwg.mxu0
        %v1356 = vmul.f32 %v1353, 0.5
        %v1357 = vmul.f32 %v1353, 0.044715
        %v1358 = vmul.f32 %v1357, %v1353
        %v1359 = vmul.f32 %v1358, %v1353
        %v1360 = vadd.f32 %v1353, %v1359
        %v1361 = vmul.f32 %v1360, 0.7978846
        %v1362 = vtanh.pop %v1361
        %v1363 = vadd.f32 %v1362, 1.0
        %v1364 = vmul.f32 %v1356, %v1363
        %v1365 = vld [vmem:[%s10] sm:$0xff]
        %v1366 = vld [vmem:[%s10 + $0x8] sm:$0xff]
        %v1367 = vld [vmem:[%s10 + $0x10] sm:$0xff]
        %v1368 = vld [vmem:[%s10 + $0x18] sm:$0xff]
        %v1369 = vld [vmem:[%s10 + $0x20] sm:$0xff]
        %v1370 = vld [vmem:[%s10 + $0x28] sm:$0xff]
        %v1371 = vld [vmem:[%s10 + $0x30] sm:$0xff]
        %v1372 = vld [vmem:[%s10 + $0x38] sm:$0xff]
        %v1373 = vld [vmem:[%s11] sm:$0x1]
        %v1375 = vlaneseq
        %v1376 = vshrl.u32 %v1375, 7
        %v1377 = vsub.s32 0, %v1376
        %v1378 = vrot.slane %v1373, %v1377
        %vm1380 = vcmask 523264
        %v1382 = vsel %vm1380, %v1364, 0
        %1384 = vmatprep.subr.mxu0 0.0
        %1385 = vmatpush1.msra.mxu0 %v1365
        %1386 = vmatprep.subr.mxu0 0.0
        %1387 = vmatpush1.msra.mxu0 %v1366
        %1388 = vmatprep.subr.mxu0 0.0
        %1389 = vmatpush1.msra.mxu0 %v1367
        %1390 = vmatprep.subr.mxu0 0.0
        %1391 = vmatpush1.msra.mxu0 %v1368
        %1392 = vmatprep.subr.mxu0 0.0
        %1393 = vmatpush1.msra.mxu0 %v1369
        %1394 = vmatprep.subr.mxu0 0.0
        %1395 = vmatpush1.msra.mxu0 %v1370
        %1396 = vmatprep.subr.mxu0 0.0
        %1397 = vmatpush1.msra.mxu0 %v1371
        %1398 = vmatprep.subr.mxu0 0.0
        %1399 = vmatpush1.msra.mxu0 %v1372
        %1400 = vmatprep.subr.mxu0 0.0
        %1401 = vmatpush1.msra.mxu0 0.0
        %1402 = vmatprep.subr.mxu0 0.0
        %1403 = vmatpush1.msra.mxu0 0.0
        %1404 = vmatprep.subr.mxu0 0.0
        %1405 = vmatpush1.msra.mxu0 0.0
        %1406 = vmatprep.subr.mxu0 0.0
        %1407 = vmatpush1.msra.mxu0 0.0
        %1408 = vmatprep.subr.mxu0 0.0
        %1409 = vmatpush1.msra.mxu0 0.0
        %1410 = vmatprep.subr.mxu0 0.0
        %1411 = vmatpush1.msra.mxu0 0.0
        %1412 = vmatprep.subr.mxu0 0.0
        %1413 = vmatpush1.msra.mxu0 0.0
        %1414 = vmatprep.subr.mxu0 0.0
        %1415 = vmatpush1.msra.mxu0 0.0
        %1416 = vmatprep.subr.mxu0 0.0
        %1417 = vmatpush1.msra.mxu0 0.0
        %1418 = vmatprep.subr.mxu0 0.0
        %1419 = vmatpush1.msra.mxu0 0.0
        %1420 = vmatprep.subr.mxu0 0.0
        %1421 = vmatpush1.msra.mxu0 0.0
        %1422 = vmatprep.subr.mxu0 0.0
        %1423 = vmatpush1.msra.mxu0 0.0
        %1424 = vmatprep.subr.mxu0 0.0
        %1425 = vmatpush1.msra.mxu0 0.0
        %1426 = vmatprep.subr.mxu0 0.0
        %1427 = vmatpush1.msra.mxu0 0.0
        %1428 = vmatprep.subr.mxu0 0.0
        %1429 = vmatpush1.msra.mxu0 0.0
        %1430 = vmatprep.subr.mxu0 0.0
        %1431 = vmatpush1.msra.mxu0 0.0
        %1432 = vmatprep.subr.mxu0 0.0
        %1433 = vmatpush1.msra.mxu0 0.0
        %1434 = vmatprep.subr.mxu0 0.0
        %1435 = vmatpush1.msra.mxu0 0.0
        %1436 = vmatprep.subr.mxu0 0.0
        %1437 = vmatpush1.msra.mxu0 0.0
        %1438 = vmatprep.subr.mxu0 0.0
        %1439 = vmatpush1.msra.mxu0 0.0
        %1440 = vmatprep.subr.mxu0 0.0
        %1441 = vmatpush1.msra.mxu0 0.0
        %1442 = vmatprep.subr.mxu0 0.0
        %1443 = vmatpush1.msra.mxu0 0.0
        %1444 = vmatprep.subr.mxu0 0.0
        %1445 = vmatpush1.msra.mxu0 0.0
        %1446 = vmatprep.subr.mxu0 0.0
        %1447 = vmatpush1.msra.mxu0 0.0
        %1448 = vmatprep.mubr.f32.mxu0 0.0
        %1449 = vmatmul.mubr.f32.gmra.mrb[0].mxu0 %v1382
        %v1450 = vpop.f32.mrb[0].mxu0
        %v1451 = vadd.f32 %v1378, %v1450
        %v1452 = vpop.f32.mrb[0].mxu0
        %1453 = vdwg.mxu0
        %v1454 = vadd.f32 %v1451, %v1271
        %v1455 = vld [vmem:[%s12] sm:$0x1]
        %v1456 = vld [vmem:[%s13] sm:$0x1]
        %v1457 = vsel %vm696, %v1454, 0.0
        %1458 = vadd.xlane.f32.xlu0 %v1457
        %v1459 = vpop.xlane.xlu0 %1458
        %v1460 = vmul.f32 %v1459, %v700
        %v1461 = vsub.f32 %v1454, %v1460
        %v1462 = vmul.f32 %v1461, %v1461
        %v1463 = vsel %vm696, %v1462, 0.0
        %1464 = vadd.xlane.f32.xlu0 %v1463
        %v1465 = vpop.xlane.xlu0 %1464
        %v1466 = vmul.f32 %v1465, %v700
        %v1467 = vadd.f32 %v1466, 1e-12
        %v1468 = vrsqrt.pop %v1467
        %v1469 = vmul.f32 %v1461, %v1468
        %v1471 = vlaneseq
        %v1472 = vshrl.u32 %v1471, 7
        %v1473 = vsub.s32 0, %v1472
        %v1474 = vrot.slane %v1455, %v1473
        %v1476 = vmul.f32 %v1469, %v1474
        %v1478 = vlaneseq
        %v1479 = vshrl.u32 %v1478, 7
        %v1480 = vsub.s32 0, %v1479
        %v1481 = vrot.slane %v1456, %v1480
        %v1483 = vadd.f32 %v1476, %v1481
        %s1484 = scalar_lea.vmem %s2, 32
        %v1485 = vld [vmem:[%s1484] sm:$0xff]
        %v1486 = vld [vmem:[%s1484 + $0x8] sm:$0xff]
        %v1487 = vld [vmem:[%s1484 + $0x10] sm:$0xff]
        %v1488 = vld [vmem:[%s1484 + $0x18] sm:$0xff]
        %s1489 = scalar_lea.vmem %s3, 1
        %v1490 = vld [vmem:[%s1489] sm:$0x1]
        %v1492 = vlaneseq
        %v1493 = vshrl.u32 %v1492, 7
        %v1494 = vsub.s32 0, %v1493
        %v1495 = vrot.slane %v1490, %v1494
        %v1498 = vsel %vm696, %v1483, 0
        %1500 = vmatprep.subr.mxu0 0.0
        %1501 = vmatpush1.msra.mxu0 %v1485
        %1502 = vmatprep.subr.mxu0 0.0
        %1503 = vmatpush1.msra.mxu0 %v1486
        %1504 = vmatprep.subr.mxu0 0.0
        %1505 = vmatpush1.msra.mxu0 %v1487
        %1506 = vmatprep.subr.mxu0 0.0
        %1507 = vmatpush1.msra.mxu0 %v1488
        %1508 = vmatprep.subr.mxu0 0.0
        %1509 = vmatpush1.msra.mxu0 0.0
        %1510 = vmatprep.subr.mxu0 0.0
        %1511 = vmatpush1.msra.mxu0 0.0
        %1512 = vmatprep.subr.mxu0 0.0
        %1513 = vmatpush1.msra.mxu0 0.0
        %1514 = vmatprep.subr.mxu0 0.0
        %1515 = vmatpush1.msra.mxu0 0.0
        %1516 = vmatprep.subr.mxu0 0.0
        %1517 = vmatpush1.msra.mxu0 0.0
        %1518 = vmatprep.subr.mxu0 0.0
        %1519 = vmatpush1.msra.mxu0 0.0
        %1520 = vmatprep.subr.mxu0 0.0
        %1521 = vmatpush1.msra.mxu0 0.0
        %1522 = vmatprep.subr.mxu0 0.0
        %1523 = vmatpush1.msra.mxu0 0.0
        %1524 = vmatprep.subr.mxu0 0.0
        %1525 = vmatpush1.msra.mxu0 0.0
        %1526 = vmatprep.subr.mxu0 0.0
        %1527 = vmatpush1.msra.mxu0 0.0
        %1528 = vmatprep.subr.mxu0 0.0
        %1529 = vmatpush1.msra.mxu0 0.0
        %1530 = vmatprep.subr.mxu0 0.0
        %1531 = vmatpush1.msra.mxu0 0.0
        %1532 = vmatprep.subr.mxu0 0.0
        %1533 = vmatpush1.msra.mxu0 0.0
        %1534 = vmatprep.subr.mxu0 0.0
        %1535 = vmatpush1.msra.mxu0 0.0
        %1536 = vmatprep.subr.mxu0 0.0
        %1537 = vmatpush1.msra.mxu0 0.0
        %1538 = vmatprep.subr.mxu0 0.0
        %1539 = vmatpush1.msra.mxu0 0.0
        %1540 = vmatprep.subr.mxu0 0.0
        %1541 = vmatpush1.msra.mxu0 0.0
        %1542 = vmatprep.subr.mxu0 0.0
        %1543 = vmatpush1.msra.mxu0 0.0
        %1544 = vmatprep.subr.mxu0 0.0
        %1545 = vmatpush1.msra.mxu0 0.0
        %1546 = vmatprep.subr.mxu0 0.0
        %1547 = vmatpush1.msra.mxu0 0.0
        %1548 = vmatprep.subr.mxu0 0.0
        %1549 = vmatpush1.msra.mxu0 0.0
        %1550 = vmatprep.subr.mxu0 0.0
        %1551 = vmatpush1.msra.mxu0 0.0
        %1552 = vmatprep.subr.mxu0 0.0
        %1553 = vmatpush1.msra.mxu0 0.0
        %1554 = vmatprep.subr.mxu0 0.0
        %1555 = vmatpush1.msra.mxu0 0.0
        %1556 = vmatprep.subr.mxu0 0.0
        %1557 = vmatpush1.msra.mxu0 0.0
        %1558 = vmatprep.subr.mxu0 0.0
        %1559 = vmatpush1.msra.mxu0 0.0
        %1560 = vmatprep.subr.mxu0 0.0
        %1561 = vmatpush1.msra.mxu0 0.0
        %1562 = vmatprep.subr.mxu0 0.0
        %1563 = vmatpush1.msra.mxu0 0.0
        %1564 = vmatprep.mubr.f32.mxu0 0.0
        %1565 = vmatmul.mubr.f32.gmra.mrb[0].mxu0 %v1498
        %v1566 = vpop.f32.mrb[0].mxu0
        %v1567 = vadd.f32 %v1495, %v1566
        %v1568 = vpop.f32.mrb[0].mxu0
        %1569 = vdwg.mxu0
        %1571 = vrot.lane.b32.xlu0 %v1567, 96
        %v1572 = vpop.permute.xlu0 %1571
        %v1573 = vsel %vm815, %v1567, 0
        %v1575 = vsel %vm815, %v1572, 0
        %1577 = vmatprep.subr.mxu0 0.0
        %1578 = vmatpush1.xpose.msra.mxu0 %v1575
        %1579 = vmatprep.subr.mxu0 0.0
        %1580 = vmatpush1.xpose.msra.mxu0 0.0
        %1581 = vmatprep.subr.mxu0 0.0
        %1582 = vmatpush1.xpose.msra.mxu0 0.0
        %1583 = vmatprep.subr.mxu0 0.0
        %1584 = vmatpush1.xpose.msra.mxu0 0.0
        %1585 = vmatprep.subr.mxu0 0.0
        %1586 = vmatpush1.xpose.msra.mxu0 0.0
        %1587 = vmatprep.subr.mxu0 0.0
        %1588 = vmatpush1.xpose.msra.mxu0 0.0
        %1589 = vmatprep.subr.mxu0 0.0
        %1590 = vmatpush1.xpose.msra.mxu0 0.0
        %1591 = vmatprep.subr.mxu0 0.0
        %1592 = vmatpush1.xpose.msra.mxu0 0.0
        %1593 = vmatprep.subr.mxu0 0.0
        %1594 = vmatpush1.xpose.msra.mxu0 0.0
        %1595 = vmatprep.subr.mxu0 0.0
        %1596 = vmatpush1.xpose.msra.mxu0 0.0
        %1597 = vmatprep.subr.mxu0 0.0
        %1598 = vmatpush1.xpose.msra.mxu0 0.0
        %1599 = vmatprep.subr.mxu0 0.0
        %1600 = vmatpush1.xpose.msra.mxu0 0.0
        %1601 = vmatprep.subr.mxu0 0.0
        %1602 = vmatpush1.xpose.msra.mxu0 0.0
        %1603 = vmatprep.subr.mxu0 0.0
        %1604 = vmatpush1.xpose.msra.mxu0 0.0
        %1605 = vmatprep.subr.mxu0 0.0
        %1606 = vmatpush1.xpose.msra.mxu0 0.0
        %1607 = vmatprep.subr.mxu0 0.0
        %1608 = vmatpush1.xpose.msra.mxu0 0.0
        %1609 = vmatprep.subr.mxu0 0.0
        %1610 = vmatpush1.xpose.msra.mxu0 0.0
        %1611 = vmatprep.subr.mxu0 0.0
        %1612 = vmatpush1.xpose.msra.mxu0 0.0
        %1613 = vmatprep.subr.mxu0 0.0
        %1614 = vmatpush1.xpose.msra.mxu0 0.0
        %1615 = vmatprep.subr.mxu0 0.0
        %1616 = vmatpush1.xpose.msra.mxu0 0.0
        %1617 = vmatprep.subr.mxu0 0.0
        %1618 = vmatpush1.xpose.msra.mxu0 0.0
        %1619 = vmatprep.subr.mxu0 0.0
        %1620 = vmatpush1.xpose.msra.mxu0 0.0
        %1621 = vmatprep.subr.mxu0 0.0
        %1622 = vmatpush1.xpose.msra.mxu0 0.0
        %1623 = vmatprep.subr.mxu0 0.0
        %1624 = vmatpush1.xpose.msra.mxu0 0.0
        %1625 = vmatprep.subr.mxu0 0.0
        %1626 = vmatpush1.xpose.msra.mxu0 0.0
        %1627 = vmatprep.subr.mxu0 0.0
        %1628 = vmatpush1.xpose.msra.mxu0 0.0
        %1629 = vmatprep.subr.mxu0 0.0
        %1630 = vmatpush1.xpose.msra.mxu0 0.0
        %1631 = vmatprep.subr.mxu0 0.0
        %1632 = vmatpush1.xpose.msra.mxu0 0.0
        %1633 = vmatprep.subr.mxu0 0.0
        %1634 = vmatpush1.xpose.msra.mxu0 0.0
        %1635 = vmatprep.subr.mxu0 0.0
        %1636 = vmatpush1.xpose.msra.mxu0 0.0
        %1637 = vmatprep.subr.mxu0 0.0
        %1638 = vmatpush1.xpose.msra.mxu0 0.0
        %1639 = vmatprep.subr.mxu0 0.0
        %1640 = vmatpush1.xpose.msra.mxu0 0.0
        %1641 = vmatprep.mubr.f32.mxu0 0.0
        %1642 = vmatmul.mubr.f32.gmra.mrb[0].mxu0 %v1573
        %v1643 = vpop.f32.mrb[0].mxu0
        %v1644 = vadd.f32 0.0, %v1643
        %v1645 = vpop.f32.mrb[0].mxu0
        %1646 = vdwg.mxu0
        %v1647 = vmul.f32 %v1644, 0.25
        %v1648 = vadd.f32 %v1647, %v895
        %v1649 = vsel %vm898, %v1648, -inf
        %1650 = vmax.xlane.f32.xlu0 %v1649
        %v1651 = vpop.xlane.xlu0 %1650
        %v1652 = vsub.f32 %v1648, %v1651
        %v1653 = vmul.f32 %v1652, 1.442695
        %v1654 = vpow.pop %v1653
        %v1655 = vsel %vm898, %v1654, 0.0
        %1656 = vadd.xlane.f32.xlu0 %v1655
        %v1657 = vpop.xlane.xlu0 %1656
        %v1658 = vrcp.pop %v1657
        %v1659 = vmul.f32 %v1654, %v1658
        %1660 = vrot.lane.b32.xlu0 %v1567, 64
        %v1661 = vpop.permute.xlu0 %1660
        %v1664 = vsel %vm898, %v1659, 0
        %1666 = vmatprep.subr.mxu0 0.0
        %1667 = vmatpush1.msra.mxu0 %v1661
        %1668 = vmatprep.subr.mxu0 0.0
        %1669 = vmatpush1.msra.mxu0 0.0
        %1670 = vmatprep.subr.mxu0 0.0
        %1671 = vmatpush1.msra.mxu0 0.0
        %1672 = vmatprep.subr.mxu0 0.0
        %1673 = vmatpush1.msra.mxu0 0.0
        %1674 = vmatprep.subr.mxu0 0.0
        %1675 = vmatpush1.msra.mxu0 0.0
        %1676 = vmatprep.subr.mxu0 0.0
        %1677 = vmatpush1.msra.mxu0 0.0
        %1678 = vmatprep.subr.mxu0 0.0
        %1679 = vmatpush1.msra.mxu0 0.0
        %1680 = vmatprep.subr.mxu0 0.0
        %1681 = vmatpush1.msra.mxu0 0.0
        %1682 = vmatprep.subr.mxu0 0.0
        %1683 = vmatpush1.msra.mxu0 0.0
        %1684 = vmatprep.subr.mxu0 0.0
        %1685 = vmatpush1.msra.mxu0 0.0
        %1686 = vmatprep.subr.mxu0 0.0
        %1687 = vmatpush1.msra.mxu0 0.0
        %1688 = vmatprep.subr.mxu0 0.0
        %1689 = vmatpush1.msra.mxu0 0.0
        %1690 = vmatprep.subr.mxu0 0.0
        %1691 = vmatpush1.msra.mxu0 0.0
        %1692 = vmatprep.subr.mxu0 0.0
        %1693 = vmatpush1.msra.mxu0 0.0
        %1694 = vmatprep.subr.mxu0 0.0
        %1695 = vmatpush1.msra.mxu0 0.0
        %1696 = vmatprep.subr.mxu0 0.0
        %1697 = vmatpush1.msra.mxu0 0.0
        %1698 = vmatprep.subr.mxu0 0.0
        %1699 = vmatpush1.msra.mxu0 0.0
        %1700 = vmatprep.subr.mxu0 0.0
        %1701 = vmatpush1.msra.mxu0 0.0
        %1702 = vmatprep.subr.mxu0 0.0
        %1703 = vmatpush1.msra.mxu0 0.0
        %1704 = vmatprep.subr.mxu0 0.0
        %1705 = vmatpush1.msra.mxu0 0.0
        %1706 = vmatprep.subr.mxu0 0.0
        %1707 = vmatpush1.msra.mxu0 0.0
        %1708 = vmatprep.subr.mxu0 0.0
        %1709 = vmatpush1.msra.mxu0 0.0
        %1710 = vmatprep.subr.mxu0 0.0
        %1711 = vmatpush1.msra.mxu0 0.0
        %1712 = vmatprep.subr.mxu0 0.0
        %1713 = vmatpush1.msra.mxu0 0.0
        %1714 = vmatprep.subr.mxu0 0.0
        %1715 = vmatpush1.msra.mxu0 0.0
        %1716 = vmatprep.subr.mxu0 0.0
        %1717 = vmatpush1.msra.mxu0 0.0
        %1718 = vmatprep.subr.mxu0 0.0
        %1719 = vmatpush1.msra.mxu0 0.0
        %1720 = vmatprep.subr.mxu0 0.0
        %1721 = vmatpush1.msra.mxu0 0.0
        %1722 = vmatprep.subr.mxu0 0.0
        %1723 = vmatpush1.msra.mxu0 0.0
        %1724 = vmatprep.subr.mxu0 0.0
        %1725 = vmatpush1.msra.mxu0 0.0
        %1726 = vmatprep.subr.mxu0 0.0
        %1727 = vmatpush1.msra.mxu0 0.0
        %1728 = vmatprep.subr.mxu0 0.0
        %1729 = vmatpush1.msra.mxu0 0.0
        %1730 = vmatprep.mubr.f32.mxu0 0.0
        %1731 = vmatmul.mubr.f32.gmra.mrb[0].mxu0 %v1664
        %v1732 = vpop.f32.mrb[0].mxu0
        %v1733 = vadd.f32 0.0, %v1732
        %v1734 = vpop.f32.mrb[0].mxu0
        %1735 = vdwg.mxu0
        %1736 = vrot.lane.b32.xlu0 %v1567, 112
        %v1737 = vpop.permute.xlu0 %1736
        %1738 = vrot.lane.b32.xlu0 %v1567, 80
        %v1739 = vpop.permute.xlu0 %1738
        %v1740 = vsel %vm815, %v1737, 0
        %v1742 = vsel %vm815, %v1739, 0
        %1744 = vmatprep.subr.mxu0 0.0
        %1745 = vmatpush1.xpose.msra.mxu0 %v1742
        %1746 = vmatprep.subr.mxu0 0.0
        %1747 = vmatpush1.xpose.msra.mxu0 0.0
        %1748 = vmatprep.subr.mxu0 0.0
        %1749 = vmatpush1.xpose.msra.mxu0 0.0
        %1750 = vmatprep.subr.mxu0 0.0
        %1751 = vmatpush1.xpose.msra.mxu0 0.0
        %1752 = vmatprep.subr.mxu0 0.0
        %1753 = vmatpush1.xpose.msra.mxu0 0.0
        %1754 = vmatprep.subr.mxu0 0.0
        %1755 = vmatpush1.xpose.msra.mxu0 0.0
        %1756 = vmatprep.subr.mxu0 0.0
        %1757 = vmatpush1.xpose.msra.mxu0 0.0
        %1758 = vmatprep.subr.mxu0 0.0
        %1759 = vmatpush1.xpose.msra.mxu0 0.0
        %1760 = vmatprep.subr.mxu0 0.0
        %1761 = vmatpush1.xpose.msra.mxu0 0.0
        %1762 = vmatprep.subr.mxu0 0.0
        %1763 = vmatpush1.xpose.msra.mxu0 0.0
        %1764 = vmatprep.subr.mxu0 0.0
        %1765 = vmatpush1.xpose.msra.mxu0 0.0
        %1766 = vmatprep.subr.mxu0 0.0
        %1767 = vmatpush1.xpose.msra.mxu0 0.0
        %1768 = vmatprep.subr.mxu0 0.0
        %1769 = vmatpush1.xpose.msra.mxu0 0.0
        %1770 = vmatprep.subr.mxu0 0.0
        %1771 = vmatpush1.xpose.msra.mxu0 0.0
        %1772 = vmatprep.subr.mxu0 0.0
        %1773 = vmatpush1.xpose.msra.mxu0 0.0
        %1774 = vmatprep.subr.mxu0 0.0
        %1775 = vmatpush1.xpose.msra.mxu0 0.0
        %1776 = vmatprep.subr.mxu0 0.0
        %1777 = vmatpush1.xpose.msra.mxu0 0.0
        %1778 = vmatprep.subr.mxu0 0.0
        %1779 = vmatpush1.xpose.msra.mxu0 0.0
        %1780 = vmatprep.subr.mxu0 0.0
        %1781 = vmatpush1.xpose.msra.mxu0 0.0
        %1782 = vmatprep.subr.mxu0 0.0
        %1783 = vmatpush1.xpose.msra.mxu0 0.0
        %1784 = vmatprep.subr.mxu0 0.0
        %1785 = vmatpush1.xpose.msra.mxu0 0.0
        %1786 = vmatprep.subr.mxu0 0.0
        %1787 = vmatpush1.xpose.msra.mxu0 0.0
        %1788 = vmatprep.subr.mxu0 0.0
        %1789 = vmatpush1.xpose.msra.mxu0 0.0
        %1790 = vmatprep.subr.mxu0 0.0
        %1791 = vmatpush1.xpose.msra.mxu0 0.0
        %1792 = vmatprep.subr.mxu0 0.0
        %1793 = vmatpush1.xpose.msra.mxu0 0.0
        %1794 = vmatprep.subr.mxu0 0.0
        %1795 = vmatpush1.xpose.msra.mxu0 0.0
        %1796 = vmatprep.subr.mxu0 0.0
        %1797 = vmatpush1.xpose.msra.mxu0 0.0
        %1798 = vmatprep.subr.mxu0 0.0
        %1799 = vmatpush1.xpose.msra.mxu0 0.0
        %1800 = vmatprep.subr.mxu0 0.0
        %1801 = vmatpush1.xpose.msra.mxu0 0.0
        %1802 = vmatprep.subr.mxu0 0.0
        %1803 = vmatpush1.xpose.msra.mxu0 0.0
        %1804 = vmatprep.subr.mxu0 0.0
        %1805 = vmatpush1.xpose.msra.mxu0 0.0
        %1806 = vmatprep.subr.mxu0 0.0
        %1807 = vmatpush1.xpose.msra.mxu0 0.0
        %1808 = vmatprep.mubr.f32.mxu0 0.0
        %1809 = vmatmul.mubr.f32.gmra.mrb[0].mxu0 %v1740
        %v1810 = vpop.f32.mrb[0].mxu0
        %v1811 = vadd.f32 0.0, %v1810
        %v1812 = vpop.f32.mrb[0].mxu0
        %1813 = vdwg.mxu0
        %v1814 = vmul.f32 %v1811, 0.25
        %v1815 = vadd.f32 %v1814, %v895
        %v1816 = vsel %vm898, %v1815, -inf
        %1817 = vmax.xlane.f32.xlu0 %v1816
        %v1818 = vpop.xlane.xlu0 %1817
        %v1819 = vsub.f32 %v1815, %v1818
        %v1820 = vmul.f32 %v1819, 1.442695
        %v1821 = vpow.pop %v1820
        %v1822 = vsel %vm898, %v1821, 0.0
        %1823 = vadd.xlane.f32.xlu0 %v1822
        %v1824 = vpop.xlane.xlu0 %1823
        %v1825 = vrcp.pop %v1824
        %v1826 = vmul.f32 %v1821, %v1825
        %1827 = vrot.lane.b32.xlu0 %v1567, 48
        %v1828 = vpop.permute.xlu0 %1827
        %v1831 = vsel %vm898, %v1826, 0
        %1833 = vmatprep.subr.mxu0 0.0
        %1834 = vmatpush1.msra.mxu0 %v1828
        %1835 = vmatprep.subr.mxu0 0.0
        %1836 = vmatpush1.msra.mxu0 0.0
        %1837 = vmatprep.subr.mxu0 0.0
        %1838 = vmatpush1.msra.mxu0 0.0
        %1839 = vmatprep.subr.mxu0 0.0
        %1840 = vmatpush1.msra.mxu0 0.0
        %1841 = vmatprep.subr.mxu0 0.0
        %1842 = vmatpush1.msra.mxu0 0.0
        %1843 = vmatprep.subr.mxu0 0.0
        %1844 = vmatpush1.msra.mxu0 0.0
        %1845 = vmatprep.subr.mxu0 0.0
        %1846 = vmatpush1.msra.mxu0 0.0
        %1847 = vmatprep.subr.mxu0 0.0
        %1848 = vmatpush1.msra.mxu0 0.0
        %1849 = vmatprep.subr.mxu0 0.0
        %1850 = vmatpush1.msra.mxu0 0.0
        %1851 = vmatprep.subr.mxu0 0.0
        %1852 = vmatpush1.msra.mxu0 0.0
        %1853 = vmatprep.subr.mxu0 0.0
        %1854 = vmatpush1.msra.mxu0 0.0
        %1855 = vmatprep.subr.mxu0 0.0
        %1856 = vmatpush1.msra.mxu0 0.0
        %1857 = vmatprep.subr.mxu0 0.0
        %1858 = vmatpush1.msra.mxu0 0.0
        %1859 = vmatprep.subr.mxu0 0.0
        %1860 = vmatpush1.msra.mxu0 0.0
        %1861 = vmatprep.subr.mxu0 0.0
        %1862 = vmatpush1.msra.mxu0 0.0
        %1863 = vmatprep.subr.mxu0 0.0
        %1864 = vmatpush1.msra.mxu0 0.0
        %1865 = vmatprep.subr.mxu0 0.0
        %1866 = vmatpush1.msra.mxu0 0.0
        %1867 = vmatprep.subr.mxu0 0.0
        %1868 = vmatpush1.msra.mxu0 0.0
        %1869 = vmatprep.subr.mxu0 0.0
        %1870 = vmatpush1.msra.mxu0 0.0
        %1871 = vmatprep.subr.mxu0 0.0
        %1872 = vmatpush1.msra.mxu0 0.0
        %1873 = vmatprep.subr.mxu0 0.0
        %1874 = vmatpush1.msra.mxu0 0.0
        %1875 = vmatprep.subr.mxu0 0.0
        %1876 = vmatpush1.msra.mxu0 0.0
        %1877 = vmatprep.subr.mxu0 0.0
        %1878 = vmatpush1.msra.mxu0 0.0
        %1879 = vmatprep.subr.mxu0 0.0
        %1880 = vmatpush1.msra.mxu0 0.0
        %1881 = vmatprep.subr.mxu0 0.0
        %1882 = vmatpush1.msra.mxu0 0.0
        %1883 = vmatprep.subr.mxu0 0.0
        %1884 = vmatpush1.msra.mxu0 0.0
        %1885 = vmatprep.subr.mxu0 0.0
        %1886 = vmatpush1.msra.mxu0 0.0
        %1887 = vmatprep.subr.mxu0 0.0
        %1888 = vmatpush1.msra.mxu0 0.0
        %1889 = vmatprep.subr.mxu0 0.0
        %1890 = vmatpush1.msra.mxu0 0.0
        %1891 = vmatprep.subr.mxu0 0.0
        %1892 = vmatpush1.msra.mxu0 0.0
        %1893 = vmatprep.subr.mxu0 0.0
        %1894 = vmatpush1.msra.mxu0 0.0
        %1895 = vmatprep.subr.mxu0 0.0
        %1896 = vmatpush1.msra.mxu0 0.0
        %1897 = vmatprep.mubr.f32.mxu0 0.0
        %1898 = vmatmul.mubr.f32.gmra.mrb[0].mxu0 %v1831
        %v1899 = vpop.f32.mrb[0].mxu0
        %v1900 = vadd.f32 0.0, %v1899
        %v1901 = vpop.f32.mrb[0].mxu0
        %1902 = vdwg.mxu0
        %1904 = vrot.lane.b32.xlu0 %v1900, 16
        %v1905 = vpop.permute.xlu0 %1904
        %v1907 = vsel %vm815, %v1733, %v1905
        %s1908 = scalar_lea.vmem %s4, 32
        %v1909 = vld [vmem:[%s1908] sm:$0xff]
        %v1910 = vld [vmem:[%s1908 + $0x8] sm:$0xff]
        %v1911 = vld [vmem:[%s1908 + $0x10] sm:$0xff]
        %v1912 = vld [vmem:[%s1908 + $0x18] sm:$0xff]
        %s1913 = scalar_lea.vmem %s5, 1
        %v1914 = vld [vmem:[%s1913] sm:$0x1]
        %v1916 = vlaneseq
        %v1917 = vshrl.u32 %v1916, 7
        %v1918 = vsub.s32 0, %v1917
        %v1919 = vrot.slane %v1914, %v1918
        %v1922 = vsel %vm696, %v1907, 0
        %1924 = vmatprep.subr.mxu0 0.0
        %1925 = vmatpush1.msra.mxu0 %v1909
        %1926 = vmatprep.subr.mxu0 0.0
        %1927 = vmatpush1.msra.mxu0 %v1910
        %1928 = vmatprep.subr.mxu0 0.0
        %1929 = vmatpush1.msra.mxu0 %v1911
        %1930 = vmatprep.subr.mxu0 0.0
        %1931 = vmatpush1.msra.mxu0 %v1912
        %1932 = vmatprep.subr.mxu0 0.0
        %1933 = vmatpush1.msra.mxu0 0.0
        %1934 = vmatprep.subr.mxu0 0.0
        %1935 = vmatpush1.msra.mxu0 0.0
        %1936 = vmatprep.subr.mxu0 0.0
        %1937 = vmatpush1.msra.mxu0 0.0
        %1938 = vmatprep.subr.mxu0 0.0
        %1939 = vmatpush1.msra.mxu0 0.0
        %1940 = vmatprep.subr.mxu0 0.0
        %1941 = vmatpush1.msra.mxu0 0.0
        %1942 = vmatprep.subr.mxu0 0.0
        %1943 = vmatpush1.msra.mxu0 0.0
        %1944 = vmatprep.subr.mxu0 0.0
        %1945 = vmatpush1.msra.mxu0 0.0
        %1946 = vmatprep.subr.mxu0 0.0
        %1947 = vmatpush1.msra.mxu0 0.0
        %1948 = vmatprep.subr.mxu0 0.0
        %1949 = vmatpush1.msra.mxu0 0.0
        %1950 = vmatprep.subr.mxu0 0.0
        %1951 = vmatpush1.msra.mxu0 0.0
        %1952 = vmatprep.subr.mxu0 0.0
        %1953 = vmatpush1.msra.mxu0 0.0
        %1954 = vmatprep.subr.mxu0 0.0
        %1955 = vmatpush1.msra.mxu0 0.0
        %1956 = vmatprep.subr.mxu0 0.0
        %1957 = vmatpush1.msra.mxu0 0.0
        %1958 = vmatprep.subr.mxu0 0.0
        %1959 = vmatpush1.msra.mxu0 0.0
        %1960 = vmatprep.subr.mxu0 0.0
        %1961 = vmatpush1.msra.mxu0 0.0
        %1962 = vmatprep.subr.mxu0 0.0
        %1963 = vmatpush1.msra.mxu0 0.0
        %1964 = vmatprep.subr.mxu0 0.0
        %1965 = vmatpush1.msra.mxu0 0.0
        %1966 = vmatprep.subr.mxu0 0.0
        %1967 = vmatpush1.msra.mxu0 0.0
        %1968 = vmatprep.subr.mxu0 0.0
        %1969 = vmatpush1.msra.mxu0 0.0
        %1970 = vmatprep.subr.mxu0 0.0
        %1971 = vmatpush1.msra.mxu0 0.0
        %1972 = vmatprep.subr.mxu0 0.0
        %1973 = vmatpush1.msra.mxu0 0.0
        %1974 = vmatprep.subr.mxu0 0.0
        %1975 = vmatpush1.msra.mxu0 0.0
        %1976 = vmatprep.subr.mxu0 0.0
        %1977 = vmatpush1.msra.mxu0 0.0
        %1978 = vmatprep.subr.mxu0 0.0
        %1979 = vmatpush1.msra.mxu0 0.0
        %1980 = vmatprep.subr.mxu0 0.0
        %1981 = vmatpush1.msra.mxu0 0.0
        %1982 = vmatprep.subr.mxu0 0.0
        %1983 = vmatpush1.msra.mxu0 0.0
        %1984 = vmatprep.subr.mxu0 0.0
        %1985 = vmatpush1.msra.mxu0 0.0
        %1986 = vmatprep.subr.mxu0 0.0
        %1987 = vmatpush1.msra.mxu0 0.0
        %1988 = vmatprep.mubr.f32.mxu0 0.0
        %1989 = vmatmul.mubr.f32.gmra.mrb[0].mxu0 %v1922
        %v1990 = vpop.f32.mrb[0].mxu0
        %v1991 = vadd.f32 %v1919, %v1990
        %v1992 = vpop.f32.mrb[0].mxu0
        %1993 = vdwg.mxu0
        %v1994 = vadd.f32 %v1991, %v1483
        %s1995 = scalar_lea.vmem %s6, 1
        %v1996 = vld [vmem:[%s1995] sm:$0x1]
        %s1997 = scalar_lea.vmem %s7, 1
        %v1998 = vld [vmem:[%s1997] sm:$0x1]
        %v1999 = vsel %vm696, %v1994, 0.0
        %2000 = vadd.xlane.f32.xlu0 %v1999
        %v2001 = vpop.xlane.xlu0 %2000
        %v2002 = vmul.f32 %v2001, %v700
        %v2003 = vsub.f32 %v1994, %v2002
        %v2004 = vmul.f32 %v2003, %v2003
        %v2005 = vsel %vm696, %v2004, 0.0
        %2006 = vadd.xlane.f32.xlu0 %v2005
        %v2007 = vpop.xlane.xlu0 %2006
        %v2008 = vmul.f32 %v2007, %v700
        %v2009 = vadd.f32 %v2008, 1e-12
        %v2010 = vrsqrt.pop %v2009
        %v2011 = vmul.f32 %v2003, %v2010
        %v2013 = vlaneseq
        %v2014 = vshrl.u32 %v2013, 7
        %v2015 = vsub.s32 0, %v2014
        %v2016 = vrot.slane %v1996, %v2015
        %v2018 = vmul.f32 %v2011, %v2016
        %v2020 = vlaneseq
        %v2021 = vshrl.u32 %v2020, 7
        %v2022 = vsub.s32 0, %v2021
        %v2023 = vrot.slane %v1998, %v2022
        %v2025 = vadd.f32 %v2018, %v2023
        %s2026 = scalar_lea.vmem %s8, 32
        %v2027 = vld [vmem:[%s2026] sm:$0xff]
        %v2028 = vld [vmem:[%s2026 + $0x8] sm:$0xff]
        %v2029 = vld [vmem:[%s2026 + $0x10] sm:$0xff]
        %v2030 = vld [vmem:[%s2026 + $0x18] sm:$0xff]
        %s2031 = scalar_lea.vmem %s9, 1
        %v2032 = vld [vmem:[%s2031] sm:$0x1]
        %v2034 = vlaneseq
        %v2035 = vshrl.u32 %v2034, 7
        %v2036 = vsub.s32 0, %v2035
        %v2037 = vrot.slane %v2032, %v2036
        %v2040 = vsel %vm696, %v2025, 0
        %2042 = vmatprep.subr.mxu0 0.0
        %2043 = vmatpush1.msra.mxu0 %v2027
        %2044 = vmatprep.subr.mxu0 0.0
        %2045 = vmatpush1.msra.mxu0 %v2028
        %2046 = vmatprep.subr.mxu0 0.0
        %2047 = vmatpush1.msra.mxu0 %v2029
        %2048 = vmatprep.subr.mxu0 0.0
        %2049 = vmatpush1.msra.mxu0 %v2030
        %2050 = vmatprep.subr.mxu0 0.0
        %2051 = vmatpush1.msra.mxu0 0.0
        %2052 = vmatprep.subr.mxu0 0.0
        %2053 = vmatpush1.msra.mxu0 0.0
        %2054 = vmatprep.subr.mxu0 0.0
        %2055 = vmatpush1.msra.mxu0 0.0
        %2056 = vmatprep.subr.mxu0 0.0
        %2057 = vmatpush1.msra.mxu0 0.0
        %2058 = vmatprep.subr.mxu0 0.0
        %2059 = vmatpush1.msra.mxu0 0.0
        %2060 = vmatprep.subr.mxu0 0.0
        %2061 = vmatpush1.msra.mxu0 0.0
        %2062 = vmatprep.subr.mxu0 0.0
        %2063 = vmatpush1.msra.mxu0 0.0
        %2064 = vmatprep.subr.mxu0 0.0
        %2065 = vmatpush1.msra.mxu0 0.0
        %2066 = vmatprep.subr.mxu0 0.0
        %2067 = vmatpush1.msra.mxu0 0.0
        %2068 = vmatprep.subr.mxu0 0.0
        %2069 = vmatpush1.msra.mxu0 0.0
        %2070 = vmatprep.subr.mxu0 0.0
        %2071 = vmatpush1.msra.mxu0 0.0
        %2072 = vmatprep.subr.mxu0 0.0
        %2073 = vmatpush1.msra.mxu0 0.0
        %2074 = vmatprep.subr.mxu0 0.0
        %2075 = vmatpush1.msra.mxu0 0.0
        %2076 = vmatprep.subr.mxu0 0.0
        %2077 = vmatpush1.msra.mxu0 0.0
        %2078 = vmatprep.subr.mxu0 0.0
        %2079 = vmatpush1.msra.mxu0 0.0
        %2080 = vmatprep.subr.mxu0 0.0
        %2081 = vmatpush1.msra.mxu0 0.0
        %2082 = vmatprep.subr.mxu0 0.0
        %2083 = vmatpush1.msra.mxu0 0.0
        %2084 = vmatprep.subr.mxu0 0.0
        %2085 = vmatpush1.msra.mxu0 0.0
        %2086 = vmatprep.subr.mxu0 0.0
        %2087 = vmatpush1.msra.mxu0 0.0
        %2088 = vmatprep.subr.mxu0 0.0
        %2089 = vmatpush1.msra.mxu0 0.0
        %2090 = vmatprep.subr.mxu0 0.0
        %2091 = vmatpush1.msra.mxu0 0.0
        %2092 = vmatprep.subr.mxu0 0.0
        %2093 = vmatpush1.msra.mxu0 0.0
        %2094 = vmatprep.subr.mxu0 0.0
        %2095 = vmatpush1.msra.mxu0 0.0
        %2096 = vmatprep.subr.mxu0 0.0
        %2097 = vmatpush1.msra.mxu0 0.0
        %2098 = vmatprep.subr.mxu0 0.0
        %2099 = vmatpush1.msra.mxu0 0.0
        %2100 = vmatprep.subr.mxu0 0.0
        %2101 = vmatpush1.msra.mxu0 0.0
        %2102 = vmatprep.subr.mxu0 0.0
        %2103 = vmatpush1.msra.mxu0 0.0
        %2104 = vmatprep.subr.mxu0 0.0
        %2105 = vmatpush1.msra.mxu0 0.0
        %2106 = vmatprep.mubr.f32.mxu0 0.0
        %2107 = vmatmul.mubr.f32.gmra.mrb[0].mxu0 %v2040
        %v2108 = vpop.f32.mrb[0].mxu0
        %v2109 = vadd.f32 %v2037, %v2108
        %v2110 = vpop.f32.mrb[0].mxu0
        %2111 = vdwg.mxu0
        %v2112 = vmul.f32 %v2109, 0.5
        %v2113 = vmul.f32 %v2109, 0.044715
        %v2114 = vmul.f32 %v2113, %v2109
        %v2115 = vmul.f32 %v2114, %v2109
        %v2116 = vadd.f32 %v2109, %v2115
        %v2117 = vmul.f32 %v2116, 0.7978846
        %v2118 = vtanh.pop %v2117
        %v2119 = vadd.f32 %v2118, 1.0
        %v2120 = vmul.f32 %v2112, %v2119
        %s2121 = scalar_lea.vmem %s10, 64
        %v2122 = vld [vmem:[%s2121] sm:$0xff]
        %v2123 = vld [vmem:[%s2121 + $0x8] sm:$0xff]
        %v2124 = vld [vmem:[%s2121 + $0x10] sm:$0xff]
        %v2125 = vld [vmem:[%s2121 + $0x18] sm:$0xff]
        %v2126 = vld [vmem:[%s2121 + $0x20] sm:$0xff]
        %v2127 = vld [vmem:[%s2121 + $0x28] sm:$0xff]
        %v2128 = vld [vmem:[%s2121 + $0x30] sm:$0xff]
        %v2129 = vld [vmem:[%s2121 + $0x38] sm:$0xff]
        %s2130 = scalar_lea.vmem %s11, 1
        %v2131 = vld [vmem:[%s2130] sm:$0x1]
        %v2133 = vlaneseq
        %v2134 = vshrl.u32 %v2133, 7
        %v2135 = vsub.s32 0, %v2134
        %v2136 = vrot.slane %v2131, %v2135
        %v2139 = vsel %vm1380, %v2120, 0
        %2141 = vmatprep.subr.mxu0 0.0
        %2142 = vmatpush1.msra.mxu0 %v2122
        %2143 = vmatprep.subr.mxu0 0.0
        %2144 = vmatpush1.msra.mxu0 %v2123
        %2145 = vmatprep.subr.mxu0 0.0
        %2146 = vmatpush1.msra.mxu0 %v2124
        %2147 = vmatprep.subr.mxu0 0.0
        %2148 = vmatpush1.msra.mxu0 %v2125
        %2149 = vmatprep.subr.mxu0 0.0
        %2150 = vmatpush1.msra.mxu0 %v2126
        %2151 = vmatprep.subr.mxu0 0.0
        %2152 = vmatpush1.msra.mxu0 %v2127
        %2153 = vmatprep.subr.mxu0 0.0
        %2154 = vmatpush1.msra.mxu0 %v2128
        %2155 = vmatprep.subr.mxu0 0.0
        %2156 = vmatpush1.msra.mxu0 %v2129
        %2157 = vmatprep.subr.mxu0 0.0
        %2158 = vmatpush1.msra.mxu0 0.0
        %2159 = vmatprep.subr.mxu0 0.0
        %2160 = vmatpush1.msra.mxu0 0.0
        %2161 = vmatprep.subr.mxu0 0.0
        %2162 = vmatpush1.msra.mxu0 0.0
        %2163 = vmatprep.subr.mxu0 0.0
        %2164 = vmatpush1.msra.mxu0 0.0
        %2165 = vmatprep.subr.mxu0 0.0
        %2166 = vmatpush1.msra.mxu0 0.0
        %2167 = vmatprep.subr.mxu0 0.0
        %2168 = vmatpush1.msra.mxu0 0.0
        %2169 = vmatprep.subr.mxu0 0.0
        %2170 = vmatpush1.msra.mxu0 0.0
        %2171 = vmatprep.subr.mxu0 0.0
        %2172 = vmatpush1.msra.mxu0 0.0
        %2173 = vmatprep.subr.mxu0 0.0
        %2174 = vmatpush1.msra.mxu0 0.0
        %2175 = vmatprep.subr.mxu0 0.0
        %2176 = vmatpush1.msra.mxu0 0.0
        %2177 = vmatprep.subr.mxu0 0.0
        %2178 = vmatpush1.msra.mxu0 0.0
        %2179 = vmatprep.subr.mxu0 0.0
        %2180 = vmatpush1.msra.mxu0 0.0
        %2181 = vmatprep.subr.mxu0 0.0
        %2182 = vmatpush1.msra.mxu0 0.0
        %2183 = vmatprep.subr.mxu0 0.0
        %2184 = vmatpush1.msra.mxu0 0.0
        %2185 = vmatprep.subr.mxu0 0.0
        %2186 = vmatpush1.msra.mxu0 0.0
        %2187 = vmatprep.subr.mxu0 0.0
        %2188 = vmatpush1.msra.mxu0 0.0
        %2189 = vmatprep.subr.mxu0 0.0
        %2190 = vmatpush1.msra.mxu0 0.0
        %2191 = vmatprep.subr.mxu0 0.0
        %2192 = vmatpush1.msra.mxu0 0.0
        %2193 = vmatprep.subr.mxu0 0.0
        %2194 = vmatpush1.msra.mxu0 0.0
        %2195 = vmatprep.subr.mxu0 0.0
        %2196 = vmatpush1.msra.mxu0 0.0
        %2197 = vmatprep.subr.mxu0 0.0
        %2198 = vmatpush1.msra.mxu0 0.0
        %2199 = vmatprep.subr.mxu0 0.0
        %2200 = vmatpush1.msra.mxu0 0.0
        %2201 = vmatprep.subr.mxu0 0.0
        %2202 = vmatpush1.msra.mxu0 0.0
        %2203 = vmatprep.subr.mxu0 0.0
        %2204 = vmatpush1.msra.mxu0 0.0
        %2205 = vmatprep.mubr.f32.mxu0 0.0
        %2206 = vmatmul.mubr.f32.gmra.mrb[0].mxu0 %v2139
        %v2207 = vpop.f32.mrb[0].mxu0
        %v2208 = vadd.f32 %v2136, %v2207
        %v2209 = vpop.f32.mrb[0].mxu0
        %2210 = vdwg.mxu0
        %v2211 = vadd.f32 %v2208, %v2025
        %s2212 = scalar_lea.vmem %s12, 1
        %v2213 = vld [vmem:[%s2212] sm:$0x1]
        %s2214 = scalar_lea.vmem %s13, 1
        %v2215 = vld [vmem:[%s2214] sm:$0x1]
        %v2216 = vsel %vm696, %v2211, 0.0
        %2217 = vadd.xlane.f32.xlu0 %v2216
        %v2218 = vpop.xlane.xlu0 %2217
        %v2219 = vmul.f32 %v2218, %v700
        %v2220 = vsub.f32 %v2211, %v2219
        %v2221 = vmul.f32 %v2220, %v2220
        %v2222 = vsel %vm696, %v2221, 0.0
        %2223 = vadd.xlane.f32.xlu0 %v2222
        %v2224 = vpop.xlane.xlu0 %2223
        %v2225 = vmul.f32 %v2224, %v700
        %v2226 = vadd.f32 %v2225, 1e-12
        %v2227 = vrsqrt.pop %v2226
        %v2228 = vmul.f32 %v2220, %v2227
        %v2230 = vlaneseq
        %v2231 = vshrl.u32 %v2230, 7
        %v2232 = vsub.s32 0, %v2231
        %v2233 = vrot.slane %v2213, %v2232
        %v2235 = vmul.f32 %v2228, %v2233
        %v2237 = vlaneseq
        %v2238 = vshrl.u32 %v2237, 7
        %v2239 = vsub.s32 0, %v2238
        %v2240 = vrot.slane %v2215, %v2239
        %v2242 = vadd.f32 %v2235, %v2240
        %v2243 = vld [vmem:[%s16] sm:$0xff]
        %v2244 = vld [vmem:[%s16 + $0x8] sm:$0xff]
        %v2245 = vld [vmem:[%s16 + $0x10] sm:$0xff]
        %v2246 = vld [vmem:[%s16 + $0x18] sm:$0xff]
        %v2247 = vld [vmem:[%s17] sm:$0x1]
        %v2249 = vlaneseq
        %v2250 = vshrl.u32 %v2249, 7
        %v2251 = vsub.s32 0, %v2250
        %v2252 = vrot.slane %v2247, %v2251
        %v2255 = vsel %vm696, %v2242, 0
        %2257 = vmatprep.subr.mxu0 0.0
        %2258 = vmatpush1.msra.mxu0 %v2243
        %2259 = vmatprep.subr.mxu0 0.0
        %2260 = vmatpush1.msra.mxu0 %v2244
        %2261 = vmatprep.subr.mxu0 0.0
        %2262 = vmatpush1.msra.mxu0 %v2245
        %2263 = vmatprep.subr.mxu0 0.0
        %2264 = vmatpush1.msra.mxu0 %v2246
        %2265 = vmatprep.subr.mxu0 0.0
        %2266 = vmatpush1.msra.mxu0 0.0
        %2267 = vmatprep.subr.mxu0 0.0
        %2268 = vmatpush1.msra.mxu0 0.0
        %2269 = vmatprep.subr.mxu0 0.0
        %2270 = vmatpush1.msra.mxu0 0.0
        %2271 = vmatprep.subr.mxu0 0.0
        %2272 = vmatpush1.msra.mxu0 0.0
        %2273 = vmatprep.subr.mxu0 0.0
        %2274 = vmatpush1.msra.mxu0 0.0
        %2275 = vmatprep.subr.mxu0 0.0
        %2276 = vmatpush1.msra.mxu0 0.0
        %2277 = vmatprep.subr.mxu0 0.0
        %2278 = vmatpush1.msra.mxu0 0.0
        %2279 = vmatprep.subr.mxu0 0.0
        %2280 = vmatpush1.msra.mxu0 0.0
        %2281 = vmatprep.subr.mxu0 0.0
        %2282 = vmatpush1.msra.mxu0 0.0
        %2283 = vmatprep.subr.mxu0 0.0
        %2284 = vmatpush1.msra.mxu0 0.0
        %2285 = vmatprep.subr.mxu0 0.0
        %2286 = vmatpush1.msra.mxu0 0.0
        %2287 = vmatprep.subr.mxu0 0.0
        %2288 = vmatpush1.msra.mxu0 0.0
        %2289 = vmatprep.subr.mxu0 0.0
        %2290 = vmatpush1.msra.mxu0 0.0
        %2291 = vmatprep.subr.mxu0 0.0
        %2292 = vmatpush1.msra.mxu0 0.0
        %2293 = vmatprep.subr.mxu0 0.0
        %2294 = vmatpush1.msra.mxu0 0.0
        %2295 = vmatprep.subr.mxu0 0.0
        %2296 = vmatpush1.msra.mxu0 0.0
        %2297 = vmatprep.subr.mxu0 0.0
        %2298 = vmatpush1.msra.mxu0 0.0
        %2299 = vmatprep.subr.mxu0 0.0
        %2300 = vmatpush1.msra.mxu0 0.0
        %2301 = vmatprep.subr.mxu0 0.0
        %2302 = vmatpush1.msra.mxu0 0.0
        %2303 = vmatprep.subr.mxu0 0.0
        %2304 = vmatpush1.msra.mxu0 0.0
        %2305 = vmatprep.subr.mxu0 0.0
        %2306 = vmatpush1.msra.mxu0 0.0
        %2307 = vmatprep.subr.mxu0 0.0
        %2308 = vmatpush1.msra.mxu0 0.0
        %2309 = vmatprep.subr.mxu0 0.0
        %2310 = vmatpush1.msra.mxu0 0.0
        %2311 = vmatprep.subr.mxu0 0.0
        %2312 = vmatpush1.msra.mxu0 0.0
        %2313 = vmatprep.subr.mxu0 0.0
        %2314 = vmatpush1.msra.mxu0 0.0
        %2315 = vmatprep.subr.mxu0 0.0
        %2316 = vmatpush1.msra.mxu0 0.0
        %2317 = vmatprep.subr.mxu0 0.0
        %2318 = vmatpush1.msra.mxu0 0.0
        %2319 = vmatprep.subr.mxu0 0.0
        %2320 = vmatpush1.msra.mxu0 0.0
        %2321 = vmatprep.mubr.f32.mxu0 0.0
        %2322 = vmatmul.mubr.f32.gmra.mrb[0].mxu0 %v2255
        %v2323 = vpop.f32.mrb[0].mxu0
        %v2324 = vadd.f32 %v2252, %v2323
        %v2325 = vpop.f32.mrb[0].mxu0
        %2326 = vdwg.mxu0
        %v2327 = vmul.f32 %v2324, 0.5
        %v2328 = vmul.f32 %v2324, 0.044715
        %v2329 = vmul.f32 %v2328, %v2324
        %v2330 = vmul.f32 %v2329, %v2324
        %v2331 = vadd.f32 %v2324, %v2330
        %v2332 = vmul.f32 %v2331, 0.7978846
        %v2333 = vtanh.pop %v2332
        %v2334 = vadd.f32 %v2333, 1.0
        %v2335 = vmul.f32 %v2327, %v2334
        %v2336 = vld [vmem:[%s18] sm:$0x1]
        %v2337 = vld [vmem:[%s19] sm:$0x1]
        %v2338 = vsel %vm696, %v2335, 0.0
        %2339 = vadd.xlane.f32.xlu0 %v2338
        %v2340 = vpop.xlane.xlu0 %2339
        %v2341 = vmul.f32 %v2340, %v700
        %v2342 = vsub.f32 %v2335, %v2341
        %v2343 = vmul.f32 %v2342, %v2342
        %v2344 = vsel %vm696, %v2343, 0.0
        %2345 = vadd.xlane.f32.xlu0 %v2344
        %v2346 = vpop.xlane.xlu0 %2345
        %v2347 = vmul.f32 %v2346, %v700
        %v2348 = vadd.f32 %v2347, 1e-12
        %v2349 = vrsqrt.pop %v2348
        %v2350 = vmul.f32 %v2342, %v2349
        %v2352 = vlaneseq
        %v2353 = vshrl.u32 %v2352, 7
        %v2354 = vsub.s32 0, %v2353
        %v2355 = vrot.slane %v2336, %v2354
        %v2357 = vmul.f32 %v2350, %v2355
        %v2359 = vlaneseq
        %v2360 = vshrl.u32 %v2359, 7
        %v2361 = vsub.s32 0, %v2360
        %v2362 = vrot.slane %v2337, %v2361
        %v2364 = vadd.f32 %v2357, %v2362
        %v2365 = vld [vmem:[%s20] sm:$0xff]
        %v2366 = vld [vmem:[%s20 + $0x8] sm:$0xff]
        %v2367 = vld [vmem:[%s20 + $0x10] sm:$0xff]
        %v2368 = vld [vmem:[%s20 + $0x18] sm:$0xff]
        %v2369 = vld [vmem:[%s21] sm:$0x1]
        %v2371 = vlaneseq
        %v2372 = vshrl.u32 %v2371, 7
        %v2373 = vsub.s32 0, %v2372
        %v2374 = vrot.slane %v2369, %v2373
        %v2377 = vsel %vm696, %v2364, 0
        %2379 = vmatprep.subr.mxu0 0.0
        %2380 = vmatpush1.msra.mxu0 %v2365
        %2381 = vmatprep.subr.mxu0 0.0
        %2382 = vmatpush1.msra.mxu0 %v2366
        %2383 = vmatprep.subr.mxu0 0.0
        %2384 = vmatpush1.msra.mxu0 %v2367
        %2385 = vmatprep.subr.mxu0 0.0
        %2386 = vmatpush1.msra.mxu0 %v2368
        %2387 = vmatprep.subr.mxu0 0.0
        %2388 = vmatpush1.msra.mxu0 0.0
        %2389 = vmatprep.subr.mxu0 0.0
        %2390 = vmatpush1.msra.mxu0 0.0
        %2391 = vmatprep.subr.mxu0 0.0
        %2392 = vmatpush1.msra.mxu0 0.0
        %2393 = vmatprep.subr.mxu0 0.0
        %2394 = vmatpush1.msra.mxu0 0.0
        %2395 = vmatprep.subr.mxu0 0.0
        %2396 = vmatpush1.msra.mxu0 0.0
        %2397 = vmatprep.subr.mxu0 0.0
        %2398 = vmatpush1.msra.mxu0 0.0
        %2399 = vmatprep.subr.mxu0 0.0
        %2400 = vmatpush1.msra.mxu0 0.0
        %2401 = vmatprep.subr.mxu0 0.0
        %2402 = vmatpush1.msra.mxu0 0.0
        %2403 = vmatprep.subr.mxu0 0.0
        %2404 = vmatpush1.msra.mxu0 0.0
        %2405 = vmatprep.subr.mxu0 0.0
        %2406 = vmatpush1.msra.mxu0 0.0
        %2407 = vmatprep.subr.mxu0 0.0
        %2408 = vmatpush1.msra.mxu0 0.0
        %2409 = vmatprep.subr.mxu0 0.0
        %2410 = vmatpush1.msra.mxu0 0.0
        %2411 = vmatprep.subr.mxu0 0.0
        %2412 = vmatpush1.msra.mxu0 0.0
        %2413 = vmatprep.subr.mxu0 0.0
        %2414 = vmatpush1.msra.mxu0 0.0
        %2415 = vmatprep.subr.mxu0 0.0
        %2416 = vmatpush1.msra.mxu0 0.0
        %2417 = vmatprep.subr.mxu0 0.0
        %2418 = vmatpush1.msra.mxu0 0.0
        %2419 = vmatprep.subr.mxu0 0.0
        %2420 = vmatpush1.msra.mxu0 0.0
        %2421 = vmatprep.subr.mxu0 0.0
        %2422 = vmatpush1.msra.mxu0 0.0
        %2423 = vmatprep.subr.mxu0 0.0
        %2424 = vmatpush1.msra.mxu0 0.0
        %2425 = vmatprep.subr.mxu0 0.0
        %2426 = vmatpush1.msra.mxu0 0.0
        %2427 = vmatprep.subr.mxu0 0.0
        %2428 = vmatpush1.msra.mxu0 0.0
        %2429 = vmatprep.subr.mxu0 0.0
        %2430 = vmatpush1.msra.mxu0 0.0
        %2431 = vmatprep.subr.mxu0 0.0
        %2432 = vmatpush1.msra.mxu0 0.0
        %2433 = vmatprep.subr.mxu0 0.0
        %2434 = vmatpush1.msra.mxu0 0.0
        %2435 = vmatprep.subr.mxu0 0.0
        %2436 = vmatpush1.msra.mxu0 0.0
        %2437 = vmatprep.subr.mxu0 0.0
        %2438 = vmatpush1.msra.mxu0 0.0
        %2439 = vmatprep.subr.mxu0 0.0
        %2440 = vmatpush1.msra.mxu0 0.0
        %2441 = vmatprep.subr.mxu0 0.0
        %2442 = vmatpush1.msra.mxu0 0.0
        %2443 = vmatprep.mubr.f32.mxu0 0.0
        %2444 = vmatmul.mubr.f32.gmra.mrb[0].mxu0 %v2377
        %v2445 = vpop.f32.mrb[0].mxu0
        %v2446 = vadd.f32 %v2374, %v2445
        %v2447 = vpop.f32.mrb[0].mxu0
        %2448 = vdwg.mxu0
        %2449 = vst [vmem:[%s685] sm:$0xff] %v2446
        %s2450 = sand.u32 %s516, 1
        %s2451 = scalar_lea.sflag [#allocation3], %s2450
        %s2452 = sand.u32 %s516, 1
        %s2453 = smul.addr %s2452, 8
        %s2454 = scalar_lea.vmem [#allocation2], %s2453
        // Predicated region
        $region109: #{bert_mlm_forward.1} parent=107 // pred_check
          %p2455 = pneg %p526
        $region110: #{bert_mlm_forward.1} parent=107 // pred_check_branch
          %2457 = sbr.rel (%p2455) target = $region112
        $region111: #{bert_mlm_forward.1} parent=107 // pred_region
          %s2459 = ssub.s32 128, 128
          %2460 = vsyncadd %s2451, %s2459
          %s2461 = smul.addr %s36, 128
          %s2462 = scalar_lea.hbm %s22, %s2461
          %s2464 = sshll.u32 %s2454, 4
          %s2465 = int_to_ptr.vmem [resolvable:$true] %s2464
          %2467 = dma.vmem_to_hbm [thread:$0]  %s2465, 128, %s2462, %s2451
        $region112: #{bert_mlm_forward.1} parent=107 // pred_fallthru
          _
      $region108: #{bert_mlm_forward.1} parent=5 // pred_fallthru
        _
      %p2468 = scmp.le.s32.totalorder 2, %s31
      // Predicated region
      $region113: #{bert_mlm_forward.1} parent=5 // pred_check
        %p2469 = pneg %p2468
      $region114: #{bert_mlm_forward.1} parent=5 // pred_check_branch
        %2471 = sbr.rel (%p2469) target = $region116
      $region115: #{bert_mlm_forward.1} parent=5 // pred_region
        %s2472 = ssub.s32 %s31, 2
        // Predicated region
        $region117: #{bert_mlm_forward.1} parent=115 // pred_check
          %p2473 = pneg %p532
        $region118: #{bert_mlm_forward.1} parent=115 // pred_check_branch
          %2475 = sbr.rel (%p2473) target = $region120
        $region119: #{bert_mlm_forward.1} parent=115 // pred_region
          %s2476 = sand.u32 %s517, 1
          %s2477 = scalar_lea.sflag [#allocation3], %s2476
          %s2478 = sand.u32 %s517, 1
          %s2479 = smul.addr %s2478, 8
          %s2480 = scalar_lea.vmem [#allocation2], %s2479
          %2481 = dma.done %s2477, 128
        $region120: #{bert_mlm_forward.1} parent=115 // pred_fallthru
          _
      $region116: #{bert_mlm_forward.1} parent=5 // pred_fallthru
        _
    $region6: #{bert_mlm_forward.1} parent=1 // loop_footer
      %s35 = sadd.s32 1, %s31
    $region7: #{bert_mlm_forward.1} parent=1 // loop_footer_branch
      %30 = sbr.rel target = $region3
    $region8: #{bert_mlm_forward.1} parent=1 // loop_exit
      _
    %2482 = vsyncpa [#allocation3], 1
    %s2483 = scalar_lea.sflag [#allocation3], 1
    %2484 = vsyncpa %s2483, 1

</llo_original>
